<compile_context>
chip_gen: v6e
topology: v6e:2x2x1
jax: 0.10.0
libtpu: 0.0.40
codegen_flags: <defaults>
</compile_context>

<pallas_src>
import functools

import jax
import jax.numpy as jnp
from jax import lax
from jax.experimental import pallas as pl
from jax.experimental.pallas import tpu as pltpu


# --------------------------------------------------------------------------
# Tiling / budget helpers
# --------------------------------------------------------------------------
def _vmem_limit_bytes() -> int:
    """Per-generation scoped-VMEM limit (explicit, instead of the default)."""
    cap = 64 * 1024 * 1024  # conservative fallback (v7x per-core VMEM)
    try:
        cap = int(pltpu.get_tpu_info().vmem_capacity_bytes)
    except Exception:
        pass
    # Leave headroom for Mosaic-internal scratch: <=48 MiB on v7x (64 MiB
    # physical), up to 96 MiB on v5e/v6e (128 MiB physical).
    return int(min(cap * 3 // 4, 96 * 1024 * 1024))


def _choose_w_chunk(W: int, r: int) -> int:
    """Width chunk TW for the lane-expansion matmul.

    The full (W, W*r) expansion matrix is block-diagonal with identical
    (TW, TW*r) blocks, so chunking bounds the matmul K to TW (MXU work per
    output element ~ 4*TW/r) and we only ever materialize one block.
    Prefer chunks whose widened lane extent TW*r is a multiple of 128.
    """
    if W * r <= 256:
        return W
    divs = [d for d in range(8, W + 1) if W % d == 0 and d * r <= 256]
    if not divs:
        return W
    aligned = [d for d in divs if (d * r) % 128 == 0]
    return max(aligned) if aligned else max(divs)


def _choose_h_tile(B, H, W, r, tw, in_itemsize, out_itemsize, budget_bytes):
    """Largest H tile whose per-step VMEM footprint fits the budget."""
    twr = tw * r

    def step_bytes(th):
        thc = 8 if th % 8 == 0 else th
        out_blk = th * r * W * r * out_itemsize
        in_blk = 4 * th * W * in_itemsize
        consts = (2 * tw * twr + 2 * thc * r * thc) * 4
        inter = (4 * th * W              # f32 copies of the 4 plane channels
                 + 5 * th * twr          # n1u, n2w, n3w, n4w, a
                 + 3 * thc * r * twr     # denom, num, res
                 ) * 4
        # x2: Pallas double-buffers the pipelined blocks (and, conservatively,
        # the constant-matrix inputs).
        return 2 * (out_blk + in_blk + consts) + inter

    cands = sorted({H, *[t for t in range(8, H, 8) if H % t == 0]}, reverse=True)
    fitting = [t for t in cands if step_bytes(t) <= budget_bytes] or [cands[-1]]
    # Prefer the largest fitting tile that still yields an even number of grid
    # steps (>= 2), so the two v7x TensorCores get balanced slabs.
    for t in fitting:
        steps = B * (H // t)
        if steps >= 2 and steps % 2 == 0:
            return t
    return fitting[0]


# --------------------------------------------------------------------------
# Hoisted expansion matrices (built once in the wrapper, review item 3)
# --------------------------------------------------------------------------
def _width_expansion_mats(tw: int, r: int):
    """(TW, TW*r): one-hot lane expansion and u(du)-weighted lane expansion."""
    half = (r - 1) * 0.5
    src = jnp.arange(tw)[:, None]            # input column w'
    dst = jnp.arange(tw * r)[None, :]        # output column j = w'*r + du
    du = dst - src * r
    on = (du >= 0) & (du < r)
    w1 = jnp.where(on, 1.0, 0.0).astype(jnp.float32)
    wu = jnp.where(on, (du.astype(jnp.float32) - half) / r, 0.0)
    return wu.astype(jnp.float32), w1


def _height_expansion_mats(thc: int, r: int):
    """(THc*r, THc): one-hot sublane expansion and v(dv)-weighted expansion."""
    half = (r - 1) * 0.5
    dst = jnp.arange(thc * r)[:, None]       # output row i = h'*r + dv
    src = jnp.arange(thc)[None, :]           # input row h'
    dv = dst - src * r
    on = (dv >= 0) & (dv < r)
    h1 = jnp.where(on, 1.0, 0.0).astype(jnp.float32)
    hv = jnp.where(on, (dv.astype(jnp.float32) - half) / r, 0.0)
    return h1, hv.astype(jnp.float32)


# --------------------------------------------------------------------------
# Kernel
# --------------------------------------------------------------------------
def _lpg_kernel(pe_ref, wu_ref, w1_ref, h1_ref, hv_ref, out_ref, *,
                r: int, tw: int, thc: int):
    """One (batch, H-tile) grid step.

    pe_ref : (4, TH, W)     plane-eq tile (batch dim squeezed)
    wu_ref : (TW, TW*r)     width expansion, entries u(du)       (constant)
    w1_ref : (TW, TW*r)     width expansion, one-hot             (constant)
    h1_ref : (THc*r, THc)   height expansion, one-hot            (constant)
    hv_ref : (THc*r, THc)   height expansion, entries v(dv)      (constant)
    out_ref: (TH*r, W*r)    final layout: row = h*r + dv, col = w*r + du
    """
    f32 = jnp.float32
    _, th, w = pe_ref.shape
    twr = tw * r

    n1 = pe_ref[0].astype(f32)
    n2 = pe_ref[1].astype(f32)
    n3 = pe_ref[2].astype(f32)
    n4 = pe_ref[3].astype(f32)
    wu, w1 = wu_ref[...], w1_ref[...]
    h1, hv = h1_ref[...], hv_ref[...]

    # One-hot expansion matmuls are exact selections.  HIGHEST keeps the f32
    # data operand un-truncated (do NOT drop to DEFAULT); K is bounded by the
    # chunk sizes so MXU work per output element stays small on all chips.
    dot = functools.partial(jnp.dot, precision=lax.Precision.HIGHEST,
                            preferred_element_type=f32)

    for cw in range(w // tw):                            # static width chunks
        ws = slice(cw * tw, (cw + 1) * tw)
        n1u = dot(n1[:, ws], wu)                         # (TH, TW*r) n1*u(du)
        n2w = dot(n2[:, ws], w1)                         # widened n2
        n3w = dot(n3[:, ws], w1)                         # widened n3
        n4w = dot(n4[:, ws], w1)                         # widened n4
        a = n1u + n3w                                    # dv-independent part

        for ch in range(th // thc):                      # static height chunks
            hs = slice(ch * thc, (ch + 1) * thc)
            # Height fan-out on the MXU: dv lands directly on sublanes, so the
            # store below is a dense multi-sublane, full-lane-extent store —
            # no per-dv single-sublane masked stores.
            denom = dot(h1, a[hs]) + dot(hv, n2w[hs])    # (THc*r, TW*r)
            num = dot(h1, n4w[hs])                       # (THc*r, TW*r)
            res = num * pl.reciprocal(denom, approx=False)
            out_ref[ch * thc * r:(ch + 1) * thc * r,
                    cw * twr:(cw + 1) * twr] = res.astype(out_ref.dtype)


# --------------------------------------------------------------------------
# Wrapper
# --------------------------------------------------------------------------
def local_planar_guidance(plane_eq: jax.Array, upratio: int) -> jax.Array:
    B, C, H, W = plane_eq.shape
    assert C == 4, "plane_eq must have 4 channels (n1..n4)"
    r = int(upratio)
    wr = W * r
    out_dtype = plane_eq.dtype
    in_itemsize = jnp.dtype(plane_eq.dtype).itemsize
    out_itemsize = jnp.dtype(out_dtype).itemsize

    vmem_limit = _vmem_limit_bytes()
    tw = _choose_w_chunk(W, r)
    th = _choose_h_tile(B, H, W, r, tw, in_itemsize, out_itemsize,
                        budget_bytes=vmem_limit // 2)
    thc = 8 if th % 8 == 0 else th
    n_h = H // th

    wu, w1 = _width_expansion_mats(tw, r)
    h1, hv = _height_expansion_mats(thc, r)

    # TODO(synk): for production shapes where W*r is not a multiple of 128,
    # pad the lane dimension (or pick a 128-aligned tw) so the last lane tile
    # of every store stays unmasked.

    kernel = functools.partial(_lpg_kernel, r=r, tw=tw, thc=thc)
    return pl.pallas_call(
        kernel,
        out_shape=jax.ShapeDtypeStruct((B, H * r, wr), out_dtype),
        grid=(B, n_h),
        in_specs=[
            pl.BlockSpec((None, 4, th, W), lambda b, i: (b, 0, i, 0)),
            pl.BlockSpec((tw, tw * r), lambda b, i: (0, 0)),     # wu (resident)
            pl.BlockSpec((tw, tw * r), lambda b, i: (0, 0)),     # w1 (resident)
            pl.BlockSpec((thc * r, thc), lambda b, i: (0, 0)),   # h1 (resident)
            pl.BlockSpec((thc * r, thc), lambda b, i: (0, 0)),   # hv (resident)
        ],
        out_specs=pl.BlockSpec((None, th * r, wr), lambda b, i: (b, i, 0)),
        compiler_params=pltpu.CompilerParams(
            dimension_semantics=("parallel", "parallel"),
            vmem_limit_bytes=vmem_limit,
        ),
    )(plane_eq, wu, w1, h1, hv)


# --------------------------------------------------------------------------
# Pure-JAX reference (mirrors the PyTorch forward) + demo
# --------------------------------------------------------------------------
def _reference(plane_eq: jax.Array, upratio: int) -> jax.Array:
    B, C, H, W = plane_eq.shape
    r = int(upratio)
    pe = jnp.repeat(jnp.repeat(plane_eq, r, axis=2), r, axis=3)
    n1, n2, n3, n4 = pe[:, 0], pe[:, 1], pe[:, 2], pe[:, 3]
    u = ((jnp.arange(W * r) % r).astype(jnp.float32) - (r - 1) * 0.5) / r
    v = ((jnp.arange(H * r) % r).astype(jnp.float32) - (r - 1) * 0.5) / r
    return n4 / (n1 * u[None, None, :] + n2 * v[None, :, None] + n3)


if __name__ == "__main__":
    key = jax.random.PRNGKey(0)
    B, C, H, W = 2, 4, 16, 16
    upratio = 4

    plane_eq = jax.random.normal(key, (B, C, H, W), dtype=jnp.float32)
    # Keep the denominator away from zero via the n3 channel, as a real plane
    # equation would; this module has no learned parameters to initialize.
    plane_eq = plane_eq.at[:, 2].set(jnp.abs(plane_eq[:, 2]) + 3.0)

    out = local_planar_guidance(plane_eq, upratio)
    out = jax.block_until_ready(out)

    ref = _reference(plane_eq, upratio)
    assert out.shape == (B, H * upratio, W * upratio), out.shape
    assert jnp.allclose(out, ref, atol=1e-5, rtol=1e-5), "mismatch vs reference"

    print("KERNEL_OK")
</pallas_src>

<mosaic_0001>
module attributes {stable_mosaic.version = 11 : i64} {
  func.func @_lpg_kernel(%arg0: i32, %arg1: i32, %arg2: memref<1x4x16x16xf32, #tpu.memory_space<vmem>>, %arg3: memref<16x64xf32, #tpu.memory_space<vmem>>, %arg4: memref<16x64xf32, #tpu.memory_space<vmem>>, %arg5: memref<32x8xf32, #tpu.memory_space<vmem>>, %arg6: memref<32x8xf32, #tpu.memory_space<vmem>>, %arg7: memref<1x64x64xf32, #tpu.memory_space<vmem>>) attributes {dimension_semantics = [#tpu.dimension_semantics<parallel>, #tpu.dimension_semantics<parallel>], iteration_bounds = array<i64: 2, 1>, scalar_prefetch = 0 : i64, scratch_operands = 0 : i64, tpu.core_type = #tpu.core_type<tc>, window_params = [{transform_indices = @transform_0, window_bounds = array<i64: 1, 4, 16, 16>}, {pipeline_mode = #tpu.pipeline_mode<synchronous>, transform_indices = @transform_1, window_bounds = array<i64: 16, 64>}, {pipeline_mode = #tpu.pipeline_mode<synchronous>, transform_indices = @transform_2, window_bounds = array<i64: 16, 64>}, {pipeline_mode = #tpu.pipeline_mode<synchronous>, transform_indices = @transform_3, window_bounds = array<i64: 32, 8>}, {pipeline_mode = #tpu.pipeline_mode<synchronous>, transform_indices = @transform_4, window_bounds = array<i64: 32, 8>}, {transform_indices = @transform_5, window_bounds = array<i64: 1, 64, 64>}]} {
    %c0 = arith.constant 0 : index
    %c0_0 = arith.constant 0 : index
    %c0_1 = arith.constant 0 : index
    %c0_2 = arith.constant 0 : index
    %0 = vector.load %arg2[%c0, %c0_0, %c0_1, %c0_2] : memref<1x4x16x16xf32, #tpu.memory_space<vmem>>, vector<1x1x16x16xf32>
    %1 = vector.shape_cast %0 : vector<1x1x16x16xf32> to vector<16x16xf32>
    %c0_3 = arith.constant 0 : index
    %c1 = arith.constant 1 : index
    %c0_4 = arith.constant 0 : index
    %c0_5 = arith.constant 0 : index
    %2 = vector.load %arg2[%c0_3, %c1, %c0_4, %c0_5] : memref<1x4x16x16xf32, #tpu.memory_space<vmem>>, vector<1x1x16x16xf32>
    %3 = vector.shape_cast %2 : vector<1x1x16x16xf32> to vector<16x16xf32>
    %c0_6 = arith.constant 0 : index
    %c2 = arith.constant 2 : index
    %c0_7 = arith.constant 0 : index
    %c0_8 = arith.constant 0 : index
    %4 = vector.load %arg2[%c0_6, %c2, %c0_7, %c0_8] : memref<1x4x16x16xf32, #tpu.memory_space<vmem>>, vector<1x1x16x16xf32>
    %5 = vector.shape_cast %4 : vector<1x1x16x16xf32> to vector<16x16xf32>
    %c0_9 = arith.constant 0 : index
    %c3 = arith.constant 3 : index
    %c0_10 = arith.constant 0 : index
    %c0_11 = arith.constant 0 : index
    %6 = vector.load %arg2[%c0_9, %c3, %c0_10, %c0_11] : memref<1x4x16x16xf32, #tpu.memory_space<vmem>>, vector<1x1x16x16xf32>
    %7 = vector.shape_cast %6 : vector<1x1x16x16xf32> to vector<16x16xf32>
    %c0_12 = arith.constant 0 : index
    %c0_13 = arith.constant 0 : index
    %8 = vector.load %arg3[%c0_12, %c0_13] : memref<16x64xf32, #tpu.memory_space<vmem>>, vector<16x64xf32>
    %c0_14 = arith.constant 0 : index
    %c0_15 = arith.constant 0 : index
    %9 = vector.load %arg4[%c0_14, %c0_15] : memref<16x64xf32, #tpu.memory_space<vmem>>, vector<16x64xf32>
    %c0_16 = arith.constant 0 : index
    %c0_17 = arith.constant 0 : index
    %10 = vector.load %arg5[%c0_16, %c0_17] : memref<32x8xf32, #tpu.memory_space<vmem>>, vector<32x8xf32>
    %c0_18 = arith.constant 0 : index
    %c0_19 = arith.constant 0 : index
    %11 = vector.load %arg6[%c0_18, %c0_19] : memref<32x8xf32, #tpu.memory_space<vmem>>, vector<32x8xf32>
    %cst = arith.constant dense<0.000000e+00> : vector<16x64xf32>
    %12 = tpu.matmul %1, %8, %cst {dimension_numbers = #tpu.dot_dimension_numbers<[1], [0], [0], [1], [0, 0, 1, 1], [], []>, precision = #tpu.contract_precision<fp32>} : vector<16x16xf32>, vector<16x64xf32>, vector<16x64xf32> -> vector<16x64xf32>
    %cst_20 = arith.constant dense<0.000000e+00> : vector<16x64xf32>
    %13 = tpu.matmul %3, %9, %cst_20 {dimension_numbers = #tpu.dot_dimension_numbers<[1], [0], [0], [1], [0, 0, 1, 1], [], []>, precision = #tpu.contract_precision<fp32>} : vector<16x16xf32>, vector<16x64xf32>, vector<16x64xf32> -> vector<16x64xf32>
    %cst_21 = arith.constant dense<0.000000e+00> : vector<16x64xf32>
    %14 = tpu.matmul %5, %9, %cst_21 {dimension_numbers = #tpu.dot_dimension_numbers<[1], [0], [0], [1], [0, 0, 1, 1], [], []>, precision = #tpu.contract_precision<fp32>} : vector<16x16xf32>, vector<16x64xf32>, vector<16x64xf32> -> vector<16x64xf32>
    %cst_22 = arith.constant dense<0.000000e+00> : vector<16x64xf32>
    %15 = tpu.matmul %7, %9, %cst_22 {dimension_numbers = #tpu.dot_dimension_numbers<[1], [0], [0], [1], [0, 0, 1, 1], [], []>, precision = #tpu.contract_precision<fp32>} : vector<16x16xf32>, vector<16x64xf32>, vector<16x64xf32> -> vector<16x64xf32>
    %16 = arith.addf %12, %14 : vector<16x64xf32>
    %17 = vector.extract_strided_slice %16 {offsets = [0, 0], sizes = [8, 64], strides = [1, 1]} : vector<16x64xf32> to vector<8x64xf32>
    %cst_23 = arith.constant dense<0.000000e+00> : vector<32x64xf32>
    %18 = tpu.matmul %10, %17, %cst_23 {dimension_numbers = #tpu.dot_dimension_numbers<[1], [0], [0], [1], [0, 0, 1, 1], [], []>, precision = #tpu.contract_precision<fp32>} : vector<32x8xf32>, vector<8x64xf32>, vector<32x64xf32> -> vector<32x64xf32>
    %19 = vector.extract_strided_slice %13 {offsets = [0, 0], sizes = [8, 64], strides = [1, 1]} : vector<16x64xf32> to vector<8x64xf32>
    %cst_24 = arith.constant dense<0.000000e+00> : vector<32x64xf32>
    %20 = tpu.matmul %11, %19, %cst_24 {dimension_numbers = #tpu.dot_dimension_numbers<[1], [0], [0], [1], [0, 0, 1, 1], [], []>, precision = #tpu.contract_precision<fp32>} : vector<32x8xf32>, vector<8x64xf32>, vector<32x64xf32> -> vector<32x64xf32>
    %21 = arith.addf %18, %20 : vector<32x64xf32>
    %22 = vector.extract_strided_slice %15 {offsets = [0, 0], sizes = [8, 64], strides = [1, 1]} : vector<16x64xf32> to vector<8x64xf32>
    %cst_25 = arith.constant dense<0.000000e+00> : vector<32x64xf32>
    %23 = tpu.matmul %10, %22, %cst_25 {dimension_numbers = #tpu.dot_dimension_numbers<[1], [0], [0], [1], [0, 0, 1, 1], [], []>, precision = #tpu.contract_precision<fp32>} : vector<32x8xf32>, vector<8x64xf32>, vector<32x64xf32> -> vector<32x64xf32>
    %24 = tpu.reciprocal %21 : vector<32x64xf32> -> vector<32x64xf32>
    %25 = arith.mulf %23, %24 : vector<32x64xf32>
    %c0_26 = arith.constant 0 : index
    %c0_27 = arith.constant 0 : index
    %c0_28 = arith.constant 0 : index
    %26 = vector.load %arg7[%c0_26, %c0_27, %c0_28] : memref<1x64x64xf32, #tpu.memory_space<vmem>>, vector<1x32x64xf32>
    %27 = vector.shape_cast %26 : vector<1x32x64xf32> to vector<32x64xf32>
    %28 = vector.shape_cast %25 : vector<32x64xf32> to vector<1x32x64xf32>
    tpu.vector_store %arg7[%c0_26, %c0_27, %c0_28], %28 {strides = array<i32>} : memref<1x64x64xf32, #tpu.memory_space<vmem>>, vector<1x32x64xf32>,
    %29 = vector.extract_strided_slice %16 {offsets = [8, 0], sizes = [8, 64], strides = [1, 1]} : vector<16x64xf32> to vector<8x64xf32>
    %cst_29 = arith.constant dense<0.000000e+00> : vector<32x64xf32>
    %30 = tpu.matmul %10, %29, %cst_29 {dimension_numbers = #tpu.dot_dimension_numbers<[1], [0], [0], [1], [0, 0, 1, 1], [], []>, precision = #tpu.contract_precision<fp32>} : vector<32x8xf32>, vector<8x64xf32>, vector<32x64xf32> -> vector<32x64xf32>
    %31 = vector.extract_strided_slice %13 {offsets = [8, 0], sizes = [8, 64], strides = [1, 1]} : vector<16x64xf32> to vector<8x64xf32>
    %cst_30 = arith.constant dense<0.000000e+00> : vector<32x64xf32>
    %32 = tpu.matmul %11, %31, %cst_30 {dimension_numbers = #tpu.dot_dimension_numbers<[1], [0], [0], [1], [0, 0, 1, 1], [], []>, precision = #tpu.contract_precision<fp32>} : vector<32x8xf32>, vector<8x64xf32>, vector<32x64xf32> -> vector<32x64xf32>
    %33 = arith.addf %30, %32 : vector<32x64xf32>
    %34 = vector.extract_strided_slice %15 {offsets = [8, 0], sizes = [8, 64], strides = [1, 1]} : vector<16x64xf32> to vector<8x64xf32>
    %cst_31 = arith.constant dense<0.000000e+00> : vector<32x64xf32>
    %35 = tpu.matmul %10, %34, %cst_31 {dimension_numbers = #tpu.dot_dimension_numbers<[1], [0], [0], [1], [0, 0, 1, 1], [], []>, precision = #tpu.contract_precision<fp32>} : vector<32x8xf32>, vector<8x64xf32>, vector<32x64xf32> -> vector<32x64xf32>
    %36 = tpu.reciprocal %33 : vector<32x64xf32> -> vector<32x64xf32>
    %37 = arith.mulf %35, %36 : vector<32x64xf32>
    %c0_32 = arith.constant 0 : index
    %c32 = arith.constant 32 : index
    %c0_33 = arith.constant 0 : index
    %38 = vector.load %arg7[%c0_32, %c32, %c0_33] : memref<1x64x64xf32, #tpu.memory_space<vmem>>, vector<1x32x64xf32>
    %39 = vector.shape_cast %38 : vector<1x32x64xf32> to vector<32x64xf32>
    %40 = vector.shape_cast %37 : vector<32x64xf32> to vector<1x32x64xf32>
    tpu.vector_store %arg7[%c0_32, %c32, %c0_33], %40 {strides = array<i32>} : memref<1x64x64xf32, #tpu.memory_space<vmem>>, vector<1x32x64xf32>,
    return
  }
  func.func @transform_0(%arg0: i32, %arg1: i32) -> (i32, i32, i32, i32) {
    %c0_i32 = arith.constant 0 : i32
    %c0_i32_0 = arith.constant 0 : i32
    %c0_i32_1 = arith.constant 0 : i32
    return %arg0, %c0_i32, %arg1, %c0_i32_0 : i32, i32, i32, i32
  }
  func.func @transform_1(%arg0: i32, %arg1: i32) -> (i32, i32) {
    %c0_i32 = arith.constant 0 : i32
    %c0_i32_0 = arith.constant 0 : i32
    %c0_i32_1 = arith.constant 0 : i32
    return %c0_i32, %c0_i32_0 : i32, i32
  }
  func.func @transform_2(%arg0: i32, %arg1: i32) -> (i32, i32) {
    %c0_i32 = arith.constant 0 : i32
    %c0_i32_0 = arith.constant 0 : i32
    %c0_i32_1 = arith.constant 0 : i32
    return %c0_i32, %c0_i32_0 : i32, i32
  }
  func.func @transform_3(%arg0: i32, %arg1: i32) -> (i32, i32) {
    %c0_i32 = arith.constant 0 : i32
    %c0_i32_0 = arith.constant 0 : i32
    %c0_i32_1 = arith.constant 0 : i32
    return %c0_i32, %c0_i32_0 : i32, i32
  }
  func.func @transform_4(%arg0: i32, %arg1: i32) -> (i32, i32) {
    %c0_i32 = arith.constant 0 : i32
    %c0_i32_0 = arith.constant 0 : i32
    %c0_i32_1 = arith.constant 0 : i32
    return %c0_i32, %c0_i32_0 : i32, i32
  }
  func.func @transform_5(%arg0: i32, %arg1: i32) -> (i32, i32, i32) {
    %c0_i32 = arith.constant 0 : i32
    %c0_i32_0 = arith.constant 0 : i32
    return %arg0, %arg1, %c0_i32 : i32, i32, i32
  }
}

</mosaic_0001>

<llo_original>
// kernel: tpu_custom_call.1
$region0: #{tpu_custom_call.1}
  #allocation0 [shape = 'u32[]', space=smem, size = 0x4, offset = 0x4, fixed_abs, tag = 'smem constant byte address 0x4 - core index']
  #allocation1 [shape = 'u32[144,128]{1,0:T(1,128)}', space=vmem, size = 0x12000, scoped, tag = 'internal scratch']
  %s0 = inlined_call_operand.hbm [shape: f32[2,4,16,16], index: 0, kind: input, shape index: {}]
  %s1 = inlined_call_operand.vmem [shape: f32[16,64], index: 1, kind: input, shape index: {}]
  %s2 = inlined_call_operand.vmem [shape: f32[16,64], index: 2, kind: input, shape index: {}]
  %s3 = inlined_call_operand.vmem [shape: f32[32,8], index: 3, kind: input, shape index: {}]
  %s4 = inlined_call_operand.vmem [shape: f32[32,8], index: 4, kind: input, shape index: {}]
  %s5 = inlined_call_operand.hbm [shape: f32[2,64,64], index: 5, kind: output, shape index: {}]
  %s6 = sld [smem:[#allocation0]]
  $region57: #{tpu_custom_call.1} parent=0
    _
  %s8 = ssub.s32 1, %s6
  %s9 = scalar_select 0, %s8, %s6
  $region1: #{tpu_custom_call.1} parent=0
    #allocation2 [shape = 'u8[65536]{0}', space=vmem, size = 0x10000, scoped, tag = 'input window, operand 0']
    #allocation3 [shape = 's32[2]{0}', space=sflag, size = 0x8, scoped, tag = 'scoped memory for tpu_custom_call.1']
    #allocation4 [shape = 's32[2]{0}', space=sflag, size = 0x8, scoped, tag = 'scoped memory for tpu_custom_call.1']
    #allocation5 [shape = 'u8[65536]{0}', space=vmem, size = 0x10000, scoped, tag = 'output window, operand 0']
    %10 = vsyncpa [#allocation3], 0
    %s11 = scalar_lea.sflag [#allocation3], 1
    %12 = vsyncpa %s11, 0
    %13 = vsyncpa [#allocation4], 0
    %s14 = scalar_lea.sflag [#allocation4], 1
    %15 = vsyncpa %s14, 0
    loop: start=0, step=1, limit=4
    $region2: #{tpu_custom_call.1} parent=1 // loop_pre_header
      _
    $region3: #{tpu_custom_call.1} parent=1 // loop_header
      %s17 = sphi 0, %s21
      %p18 = scmp.ge.s32.totalorder %s17, 4
      %s24 = sphi 0, %s36
      %s25 = sphi 0, %s32
      %s26 = sphi 0, %s24
      %s27 = sphi 0, %s25
      %s28 = sphi 0, %s26
      %s29 = sphi 0, %s27
      %s41 = sphi 0, %s43
      %s44 = sphi 0, %s41
      %s45 = sphi 0, %s44
      %s61 = sphi 0, %s45
      %s65 = sphi 0, %s65
      %s67 = sphi 0, %s65
      %s68 = sphi 0, %s67
      %s82 = sphi 0, %s68
      %s86 = sphi 0, %s86
      %s88 = sphi 0, %s86
      %s89 = sphi 0, %s88
      %s103 = sphi 0, %s89
      %s107 = sphi 0, %s107
      %s109 = sphi 0, %s107
      %s110 = sphi 0, %s109
      %s124 = sphi 0, %s110
      %s128 = sphi 0, %s128
      %s130 = sphi 0, %s128
      %s131 = sphi 0, %s130
      %s145 = sphi 0, %s131
      %s153 = sphi 0, %s155
      %s156 = sphi 0, %s153
      %s157 = sphi 0, %s156
      %s173 = sphi 0, %s157
    $region4: #{tpu_custom_call.1} parent=1 // loop_header_branch
      %20 = sbr.rel (%p18) target = $region8
    $region5: #{tpu_custom_call.1} parent=1 // loop_body
      %s22 = ssub.s32 %s17, 1
      %s23 = ssub.s32 %s17, 2
      %s30 = sadd.s32 1, %s25
      %p31 = scmp.ge.s32.totalorder %s30, 1
      %s32 = scalar_select %p31, 0, %s30
      %s33 = sadd.s32 1, %s24
      %s34 = scalar_select %p31, %s33, %s24
      %p35 = scmp.ge.s32.totalorder %s34, 2
      %s36 = scalar_select %p35, 0, %s34
      %s37 = ssub.s32 %s24, %s36
      %s38 = ssub.s32 %s25, %s32
      %s39 = sor.u32 %s37, %s38
      %p40 = scmp.eq.s32.totalorder %s39, 0
      %s42 = sadd.s32 %s41, 1
      %s43 = scalar_select %p40, %s41, %s42
      %p46 = pneg %p40
      %p47 = scmp.eq.s32.totalorder %s17, 1
      %p48 = por %p46, %p47
      %p49 = scmp.ne.s32.totalorder %s41, %s44
      %p50 = scmp.eq.s32.totalorder %s17, 0
      %p51 = por %p49, %p50
      %p52 = scmp.ne.s32.totalorder %s41, %s44
      %p53 = scmp.eq.s32.totalorder %s22, 1
      %p54 = por %p52, %p53
      %p55 = scmp.ne.s32.totalorder %s44, %s45
      %p56 = scmp.eq.s32.totalorder %s22, 0
      %p57 = por %p55, %p56
      %p58 = scmp.ne.s32.totalorder %s44, %s45
      %p59 = scmp.eq.s32.totalorder %s23, 1
      %p60 = por %p58, %p59
      %p62 = scmp.ne.s32.totalorder %s45, %s61
      %p63 = scmp.eq.s32.totalorder %s23, 0
      %p64 = por %p62, %p63
      %s66 = sadd.s32 %s65, 1
      %p69 = scmp.eq.s32.totalorder %s17, 1
      %p70 = scmp.ne.s32.totalorder %s65, %s67
      %p71 = scmp.eq.s32.totalorder %s17, 0
      %p72 = por %p70, %p71
      %p73 = scmp.ne.s32.totalorder %s65, %s67
      %p74 = scmp.eq.s32.totalorder %s22, 1
      %p75 = por %p73, %p74
      %p76 = scmp.ne.s32.totalorder %s67, %s68
      %p77 = scmp.eq.s32.totalorder %s22, 0
      %p78 = por %p76, %p77
      %p79 = scmp.ne.s32.totalorder %s67, %s68
      %p80 = scmp.eq.s32.totalorder %s23, 1
      %p81 = por %p79, %p80
      %p83 = scmp.ne.s32.totalorder %s68, %s82
      %p84 = scmp.eq.s32.totalorder %s23, 0
      %p85 = por %p83, %p84
      %s87 = sadd.s32 %s86, 1
      %p90 = scmp.eq.s32.totalorder %s17, 1
      %p91 = scmp.ne.s32.totalorder %s86, %s88
      %p92 = scmp.eq.s32.totalorder %s17, 0
      %p93 = por %p91, %p92
      %p94 = scmp.ne.s32.totalorder %s86, %s88
      %p95 = scmp.eq.s32.totalorder %s22, 1
      %p96 = por %p94, %p95
      %p97 = scmp.ne.s32.totalorder %s88, %s89
      %p98 = scmp.eq.s32.totalorder %s22, 0
      %p99 = por %p97, %p98
      %p100 = scmp.ne.s32.totalorder %s88, %s89
      %p101 = scmp.eq.s32.totalorder %s23, 1
      %p102 = por %p100, %p101
      %p104 = scmp.ne.s32.totalorder %s89, %s103
      %p105 = scmp.eq.s32.totalorder %s23, 0
      %p106 = por %p104, %p105
      %s108 = sadd.s32 %s107, 1
      %p111 = scmp.eq.s32.totalorder %s17, 1
      %p112 = scmp.ne.s32.totalorder %s107, %s109
      %p113 = scmp.eq.s32.totalorder %s17, 0
      %p114 = por %p112, %p113
      %p115 = scmp.ne.s32.totalorder %s107, %s109
      %p116 = scmp.eq.s32.totalorder %s22, 1
      %p117 = por %p115, %p116
      %p118 = scmp.ne.s32.totalorder %s109, %s110
      %p119 = scmp.eq.s32.totalorder %s22, 0
      %p120 = por %p118, %p119
      %p121 = scmp.ne.s32.totalorder %s109, %s110
      %p122 = scmp.eq.s32.totalorder %s23, 1
      %p123 = por %p121, %p122
      %p125 = scmp.ne.s32.totalorder %s110, %s124
      %p126 = scmp.eq.s32.totalorder %s23, 0
      %p127 = por %p125, %p126
      %s129 = sadd.s32 %s128, 1
      %p132 = scmp.eq.s32.totalorder %s17, 1
      %p133 = scmp.ne.s32.totalorder %s128, %s130
      %p134 = scmp.eq.s32.totalorder %s17, 0
      %p135 = por %p133, %p134
      %p136 = scmp.ne.s32.totalorder %s128, %s130
      %p137 = scmp.eq.s32.totalorder %s22, 1
      %p138 = por %p136, %p137
      %p139 = scmp.ne.s32.totalorder %s130, %s131
      %p140 = scmp.eq.s32.totalorder %s22, 0
      %p141 = por %p139, %p140
      %p142 = scmp.ne.s32.totalorder %s130, %s131
      %p143 = scmp.eq.s32.totalorder %s23, 1
      %p144 = por %p142, %p143
      %p146 = scmp.ne.s32.totalorder %s131, %s145
      %p147 = scmp.eq.s32.totalorder %s23, 0
      %p148 = por %p146, %p147
      %s149 = ssub.s32 %s24, %s36
      %s150 = ssub.s32 %s25, %s32
      %s151 = sor.u32 %s149, %s150
      %p152 = scmp.eq.s32.totalorder %s151, 0
      %s154 = sadd.s32 %s153, 1
      %s155 = scalar_select %p152, %s153, %s154
      %p158 = pneg %p152
      %p159 = scmp.eq.s32.totalorder %s17, 1
      %p160 = por %p158, %p159
      %p161 = scmp.ne.s32.totalorder %s153, %s156
      %p162 = scmp.eq.s32.totalorder %s17, 0
      %p163 = por %p161, %p162
      %p164 = scmp.ne.s32.totalorder %s153, %s156
      %p165 = scmp.eq.s32.totalorder %s22, 1
      %p166 = por %p164, %p165
      %p167 = scmp.ne.s32.totalorder %s156, %s157
      %p168 = scmp.eq.s32.totalorder %s22, 0
      %p169 = por %p167, %p168
      %p170 = scmp.ne.s32.totalorder %s156, %s157
      %p171 = scmp.eq.s32.totalorder %s23, 1
      %p172 = por %p170, %p171
      %p174 = scmp.ne.s32.totalorder %s157, %s173
      %p175 = scmp.eq.s32.totalorder %s23, 0
      %p176 = por %p174, %p175
      %p177 = scmp.le.s32.totalorder 1, %s17
      %p178 = scmp.lt.s32.totalorder %s17, 3
      %p179 = pnand %p177, %p178
      %p180 = pneg %p179
      // Predicated region
      $region9: #{tpu_custom_call.1} parent=5 // pred_check
        _
      $region10: #{tpu_custom_call.1} parent=5 // pred_check_branch
        %182 = sbr.rel (%p179) target = $region12
      $region11: #{tpu_custom_call.1} parent=5 // pred_region
        %s183 = ssub.s32 %s17, 1
        // Predicated region
        $region13: #{tpu_custom_call.1} parent=11 // pred_check
          %p184 = pneg %p78
        $region14: #{tpu_custom_call.1} parent=11 // pred_check_branch
          %186 = sbr.rel (%p184) target = $region16
        $region15: #{tpu_custom_call.1} parent=11 // pred_region
          _
        $region16: #{tpu_custom_call.1} parent=11 // pred_fallthru
          _
        // Predicated region
        $region17: #{tpu_custom_call.1} parent=11 // pred_check
          %p187 = pneg %p99
        $region18: #{tpu_custom_call.1} parent=11 // pred_check_branch
          %189 = sbr.rel (%p187) target = $region20
        $region19: #{tpu_custom_call.1} parent=11 // pred_region
          _
        $region20: #{tpu_custom_call.1} parent=11 // pred_fallthru
          _
        // Predicated region
        $region21: #{tpu_custom_call.1} parent=11 // pred_check
          %p190 = pneg %p120
        $region22: #{tpu_custom_call.1} parent=11 // pred_check_branch
          %192 = sbr.rel (%p190) target = $region24
        $region23: #{tpu_custom_call.1} parent=11 // pred_region
          _
        $region24: #{tpu_custom_call.1} parent=11 // pred_fallthru
          _
        // Predicated region
        $region25: #{tpu_custom_call.1} parent=11 // pred_check
          %p193 = pneg %p141
        $region26: #{tpu_custom_call.1} parent=11 // pred_check_branch
          %195 = sbr.rel (%p193) target = $region28
        $region27: #{tpu_custom_call.1} parent=11 // pred_region
          _
        $region28: #{tpu_custom_call.1} parent=11 // pred_fallthru
          _
      $region12: #{tpu_custom_call.1} parent=5 // pred_fallthru
        _
      %p196 = scmp.lt.s32.totalorder %s17, 2
      // Predicated region
      $region29: #{tpu_custom_call.1} parent=5 // pred_check
        %p197 = pneg %p196
      $region30: #{tpu_custom_call.1} parent=5 // pred_check_branch
        %199 = sbr.rel (%p197) target = $region32
      $region31: #{tpu_custom_call.1} parent=5 // pred_region
        // Predicated region
        $region33: #{tpu_custom_call.1} parent=31 // pred_check
          %p200 = pneg %p51
        $region34: #{tpu_custom_call.1} parent=31 // pred_check_branch
          %202 = sbr.rel (%p200) target = $region36
        $region35: #{tpu_custom_call.1} parent=31 // pred_region
          %s203 = sand.u32 %s41, 1
          %s204 = scalar_lea.sflag [#allocation3], %s203
          %s205 = sand.u32 %s41, 1
          %s206 = smul.addr %s205, 64
          %s207 = scalar_lea.vmem [#allocation2], %s206
          %s208 = smul.u32 2, %s25
          %s210 = ssub.s32 1024, 1024
          %211 = vsyncadd %s204, %s210
          %s212 = smul.addr %s24, 8
          %s213 = sadd.s32 %s208, %s212
          %s214 = smul.addr %s213, 128
          %s215 = scalar_lea.hbm %s0, %s214
          %s216 = sshll.u32 %s207, 4
          %s217 = int_to_ptr.vmem [resolvable:$true] %s216
          %222 = dma.hbm_to_vmem [thread:$0]  %s215, 1024, %s217, %s204, 128, 128, 8
        $region36: #{tpu_custom_call.1} parent=31 // pred_fallthru
          _
      $region32: #{tpu_custom_call.1} parent=5 // pred_fallthru
        _
      %p223 = scmp.le.s32.totalorder 1, %s17
      %p224 = scmp.lt.s32.totalorder %s17, 3
      %p225 = pnand %p223, %p224
      %p226 = pneg %p225
      // Predicated region
      $region37: #{tpu_custom_call.1} parent=5 // pred_check
        _
      $region38: #{tpu_custom_call.1} parent=5 // pred_check_branch
        %228 = sbr.rel (%p225) target = $region40
      $region39: #{tpu_custom_call.1} parent=5 // pred_region
        %s229 = ssub.s32 %s17, 1
        %s230 = sand.u32 %s44, 1
        %s231 = scalar_lea.sflag [#allocation3], %s230
        %s232 = sand.u32 %s44, 1
        %s233 = smul.addr %s232, 64
        %s234 = scalar_lea.vmem [#allocation2], %s233
        // Predicated region
        $region41: #{tpu_custom_call.1} parent=39 // pred_check
          %p235 = pneg %p57
        $region42: #{tpu_custom_call.1} parent=39 // pred_check_branch
          %237 = sbr.rel (%p235) target = $region44
        $region43: #{tpu_custom_call.1} parent=39 // pred_region
          %238 = dma.done %s231, 1024
        $region44: #{tpu_custom_call.1} parent=39 // pred_fallthru
          _
        %s239 = sand.u32 %s44, 1
        %s240 = scalar_lea.sflag [#allocation3], %s239
        %s241 = sand.u32 %s44, 1
        %s242 = smul.addr %s241, 64
        %s243 = scalar_lea.vmem [#allocation2], %s242
        %p244 = pneg %p57
        %p245 = pneg %p54
        %p246 = pneg %p78
        %p247 = pneg %p75
        %p248 = pneg %p99
        %p249 = pneg %p96
        %p250 = pneg %p120
        %p251 = pneg %p117
        %p252 = pneg %p141
        %p253 = pneg %p138
        %p254 = pneg %p169
        %p255 = pneg %p166
        %s256 = sand.u32 %s156, 1
        %s257 = scalar_lea.sflag [#allocation4], %s256
        %s258 = sand.u32 %s156, 1
        %s259 = smul.addr %s258, 64
        %s260 = scalar_lea.vmem [#allocation5], %s259
        %s261 = smul.u32 2, %s27
        %s262 = smul.u32 8, %s27
        %v263 = vld [vmem:[%s234] sm:$0xff]
        %v264 = vld [vmem:[%s234 + $0x8] sm:$0xff]
        %s265 = scalar_lea.vmem %s234, 16 [#allocation2]
        %v266 = vld [vmem:[%s265] sm:$0xff]
        %v267 = vld [vmem:[%s265 + $0x8] sm:$0xff]
        %s268 = scalar_lea.vmem %s234, 32 [#allocation2]
        %v269 = vld [vmem:[%s268] sm:$0xff]
        %v270 = vld [vmem:[%s268 + $0x8] sm:$0xff]
        %s271 = scalar_lea.vmem %s234, 48 [#allocation2]
        %v272 = vld [vmem:[%s271] sm:$0xff]
        %v273 = vld [vmem:[%s271 + $0x8] sm:$0xff]
        %v274 = vld [vmem:[%s1] sm:$0xff]
        %v275 = vld [vmem:[%s1 + $0x8] sm:$0xff]
        %v276 = vld [vmem:[%s2] sm:$0xff]
        %v277 = vld [vmem:[%s2 + $0x8] sm:$0xff]
        %v278 = vld [vmem:[%s3] sm:$0xff]
        %v279 = vld [vmem:[%s3 + $0x8] sm:$0xff]
        %v280 = vld [vmem:[%s3 + $0x10] sm:$0xff]
        %v281 = vld [vmem:[%s3 + $0x18] sm:$0xff]
        %v282 = vld [vmem:[%s4] sm:$0xff]
        %v283 = vld [vmem:[%s4 + $0x8] sm:$0xff]
        %v284 = vld [vmem:[%s4 + $0x10] sm:$0xff]
        %v285 = vld [vmem:[%s4 + $0x18] sm:$0xff]
        %vm286 = vcmask 130048
        %v288 = vsel %vm286, %v266, 0
        %v291 = vsel %vm286, %v267, 0
        %293 = vmatprep.subr.mxu0 0.0
        %294 = vmatpush1.msra.mxu0 0.0
        %295 = vmatprep.subr.mxu0 0.0
        %296 = vmatpush1.msra.mxu0 0.0
        %297 = vmatprep.subr.mxu0 0.0
        %298 = vmatpush1.msra.mxu0 0.0
        %299 = vmatprep.subr.mxu0 0.0
        %300 = vmatpush1.msra.mxu0 0.0
        %301 = vmatprep.subr.mxu0 0.0
        %302 = vmatpush1.msra.mxu0 0.0
        %303 = vmatprep.subr.mxu0 0.0
        %304 = vmatpush1.msra.mxu0 0.0
        %305 = vmatprep.subr.mxu0 0.0
        %306 = vmatpush1.msra.mxu0 0.0
        %307 = vmatprep.subr.mxu0 0.0
        %308 = vmatpush1.msra.mxu0 0.0
        %309 = vmatprep.subr.mxu0 0.0
        %310 = vmatpush1.msra.mxu0 0.0
        %311 = vmatprep.subr.mxu0 0.0
        %312 = vmatpush1.msra.mxu0 0.0
        %313 = vmatprep.subr.mxu0 0.0
        %314 = vmatpush1.msra.mxu0 0.0
        %315 = vmatprep.subr.mxu0 0.0
        %316 = vmatpush1.msra.mxu0 0.0
        %317 = vmatprep.subr.mxu0 0.0
        %318 = vmatpush1.msra.mxu0 0.0
        %319 = vmatprep.subr.mxu0 0.0
        %320 = vmatpush1.msra.mxu0 0.0
        %321 = vmatprep.subr.mxu0 0.0
        %v322 = vand.u32 %v277, 4294901760
        %323 = vmatpush1.msra.mxu0 %v322
        %324 = vmatprep.subr.mxu0 0.0
        %v325 = vand.u32 %v276, 4294901760
        %326 = vmatpush1.msra.mxu0 %v325
        %327 = vmatprep.subr.mxu0 0.0
        %328 = vmatpush2.msra.mxu0 0.0
        %329 = vmatprep.subr.mxu0 0.0
        %330 = vmatpush2.msra.mxu0 0.0
        %331 = vmatprep.subr.mxu0 0.0
        %332 = vmatpush2.msra.mxu0 0.0
        %333 = vmatprep.subr.mxu0 0.0
        %334 = vmatpush2.msra.mxu0 0.0
        %335 = vmatprep.subr.mxu0 0.0
        %336 = vmatpush2.msra.mxu0 0.0
        %337 = vmatprep.subr.mxu0 0.0
        %338 = vmatpush2.msra.mxu0 0.0
        %339 = vmatprep.subr.mxu0 0.0
        %340 = vmatpush2.msra.mxu0 0.0
        %341 = vmatprep.subr.mxu0 0.0
        %342 = vmatpush2.msra.mxu0 0.0
        %343 = vmatprep.subr.mxu0 0.0
        %344 = vmatpush2.msra.mxu0 0.0
        %345 = vmatprep.subr.mxu0 0.0
        %346 = vmatpush2.msra.mxu0 0.0
        %347 = vmatprep.subr.mxu0 0.0
        %348 = vmatpush2.msra.mxu0 0.0
        %349 = vmatprep.subr.mxu0 0.0
        %350 = vmatpush2.msra.mxu0 0.0
        %351 = vmatprep.subr.mxu0 0.0
        %352 = vmatpush2.msra.mxu0 0.0
        %353 = vmatprep.subr.mxu0 0.0
        %354 = vmatpush2.msra.mxu0 0.0
        %355 = vmatprep.subr.mxu0 0.0
        %356 = vmatpush2.msra.mxu0 0.0
        %357 = vmatprep.subr.mxu0 0.0
        %358 = vmatpush2.msra.mxu0 0.0
        %359 = vmatprep.mubr.f32.mxu0 0.0
        %v360 = vand.u32 %v288, 4294901760
        %v361 = vsub.f32 %v288, %v360
        %v362 = vand.u32 %v361, 4294901760
        %v363 = vsub.f32 %v361, %v362
        %v364 = vand.u32 %v363, 4294901760
        %365 = vmatmul.mubr.f32.gmra.mxu0 %v364
        %v366 = vpop.f32.mrf.mxu0
        %v367 = vadd.f32 0.0, %v366
        %v368 = vpop.f32.mrf.mxu0
        %369 = vmatprep.mubr.f32.mxu0 0.0
        %v370 = vand.u32 %v291, 4294901760
        %v371 = vsub.f32 %v291, %v370
        %v372 = vand.u32 %v371, 4294901760
        %v373 = vsub.f32 %v371, %v372
        %v374 = vand.u32 %v373, 4294901760
        %375 = vmatmul.mubr.f32.gmra.mxu0 %v374
        %v376 = vpop.f32.mrf.mxu0
        %v377 = vadd.f32 0.0, %v376
        %v378 = vpop.f32.mrf.mxu0
        %379 = vdwg.mxu0
        %380 = vmatprep.subr.mxu0 0.0
        %381 = vmatpush1.msra.mxu0 0.0
        %382 = vmatprep.subr.mxu0 0.0
        %383 = vmatpush1.msra.mxu0 0.0
        %384 = vmatprep.subr.mxu0 0.0
        %385 = vmatpush1.msra.mxu0 0.0
        %386 = vmatprep.subr.mxu0 0.0
        %387 = vmatpush1.msra.mxu0 0.0
        %388 = vmatprep.subr.mxu0 0.0
        %389 = vmatpush1.msra.mxu0 0.0
        %390 = vmatprep.subr.mxu0 0.0
        %391 = vmatpush1.msra.mxu0 0.0
        %392 = vmatprep.subr.mxu0 0.0
        %393 = vmatpush1.msra.mxu0 0.0
        %394 = vmatprep.subr.mxu0 0.0
        %395 = vmatpush1.msra.mxu0 0.0
        %396 = vmatprep.subr.mxu0 0.0
        %397 = vmatpush1.msra.mxu0 0.0
        %398 = vmatprep.subr.mxu0 0.0
        %399 = vmatpush1.msra.mxu0 0.0
        %400 = vmatprep.subr.mxu0 0.0
        %401 = vmatpush1.msra.mxu0 0.0
        %402 = vmatprep.subr.mxu0 0.0
        %403 = vmatpush1.msra.mxu0 0.0
        %404 = vmatprep.subr.mxu0 0.0
        %405 = vmatpush1.msra.mxu0 0.0
        %406 = vmatprep.subr.mxu0 0.0
        %407 = vmatpush1.msra.mxu0 0.0
        %408 = vmatprep.subr.mxu0 0.0
        %v409 = vand.u32 %v277, 4294901760
        %v410 = vsub.f32 %v277, %v409
        %v411 = vand.u32 %v410, 4294901760
        %v412 = vsub.f32 %v410, %v411
        %v413 = vand.u32 %v412, 4294901760
        %414 = vmatpush1.msra.mxu0 %v413
        %415 = vmatprep.subr.mxu0 0.0
        %v416 = vand.u32 %v276, 4294901760
        %v417 = vsub.f32 %v276, %v416
        %v418 = vand.u32 %v417, 4294901760
        %v419 = vsub.f32 %v417, %v418
        %v420 = vand.u32 %v419, 4294901760
        %421 = vmatpush1.msra.mxu0 %v420
        %422 = vmatprep.subr.mxu0 0.0
        %423 = vmatpush2.msra.mxu0 0.0
        %424 = vmatprep.subr.mxu0 0.0
        %425 = vmatpush2.msra.mxu0 0.0
        %426 = vmatprep.subr.mxu0 0.0
        %427 = vmatpush2.msra.mxu0 0.0
        %428 = vmatprep.subr.mxu0 0.0
        %429 = vmatpush2.msra.mxu0 0.0
        %430 = vmatprep.subr.mxu0 0.0
        %431 = vmatpush2.msra.mxu0 0.0
        %432 = vmatprep.subr.mxu0 0.0
        %433 = vmatpush2.msra.mxu0 0.0
        %434 = vmatprep.subr.mxu0 0.0
        %435 = vmatpush2.msra.mxu0 0.0
        %436 = vmatprep.subr.mxu0 0.0
        %437 = vmatpush2.msra.mxu0 0.0
        %438 = vmatprep.subr.mxu0 0.0
        %439 = vmatpush2.msra.mxu0 0.0
        %440 = vmatprep.subr.mxu0 0.0
        %441 = vmatpush2.msra.mxu0 0.0
        %442 = vmatprep.subr.mxu0 0.0
        %443 = vmatpush2.msra.mxu0 0.0
        %444 = vmatprep.subr.mxu0 0.0
        %445 = vmatpush2.msra.mxu0 0.0
        %446 = vmatprep.subr.mxu0 0.0
        %447 = vmatpush2.msra.mxu0 0.0
        %448 = vmatprep.subr.mxu0 0.0
        %449 = vmatpush2.msra.mxu0 0.0
        %450 = vmatprep.subr.mxu0 0.0
        %451 = vmatpush2.msra.mxu0 0.0
        %452 = vmatprep.subr.mxu0 0.0
        %453 = vmatpush2.msra.mxu0 0.0
        %454 = vmatprep.mubr.f32.mxu0 0.0
        %v455 = vand.u32 %v288, 4294901760
        %456 = vmatmul.mubr.f32.gmra.mxu0 %v455
        %v457 = vpop.f32.mrf.mxu0
        %v458 = vadd.f32 %v367, %v457
        %v459 = vpop.f32.mrf.mxu0
        %460 = vmatprep.mubr.f32.mxu0 0.0
        %v461 = vand.u32 %v291, 4294901760
        %462 = vmatmul.mubr.f32.gmra.mxu0 %v461
        %v463 = vpop.f32.mrf.mxu0
        %v464 = vadd.f32 %v377, %v463
        %v465 = vpop.f32.mrf.mxu0
        %466 = vdwg.mxu0
        %467 = vmatprep.subr.mxu0 0.0
        %468 = vmatpush1.msra.mxu0 0.0
        %469 = vmatprep.subr.mxu0 0.0
        %470 = vmatpush1.msra.mxu0 0.0
        %471 = vmatprep.subr.mxu0 0.0
        %472 = vmatpush1.msra.mxu0 0.0
        %473 = vmatprep.subr.mxu0 0.0
        %474 = vmatpush1.msra.mxu0 0.0
        %475 = vmatprep.subr.mxu0 0.0
        %476 = vmatpush1.msra.mxu0 0.0
        %477 = vmatprep.subr.mxu0 0.0
        %478 = vmatpush1.msra.mxu0 0.0
        %479 = vmatprep.subr.mxu0 0.0
        %480 = vmatpush1.msra.mxu0 0.0
        %481 = vmatprep.subr.mxu0 0.0
        %482 = vmatpush1.msra.mxu0 0.0
        %483 = vmatprep.subr.mxu0 0.0
        %484 = vmatpush1.msra.mxu0 0.0
        %485 = vmatprep.subr.mxu0 0.0
        %486 = vmatpush1.msra.mxu0 0.0
        %487 = vmatprep.subr.mxu0 0.0
        %488 = vmatpush1.msra.mxu0 0.0
        %489 = vmatprep.subr.mxu0 0.0
        %490 = vmatpush1.msra.mxu0 0.0
        %491 = vmatprep.subr.mxu0 0.0
        %492 = vmatpush1.msra.mxu0 0.0
        %493 = vmatprep.subr.mxu0 0.0
        %494 = vmatpush1.msra.mxu0 0.0
        %495 = vmatprep.subr.mxu0 0.0
        %v496 = vand.u32 %v277, 4294901760
        %v497 = vsub.f32 %v277, %v496
        %498 = vmatpush1.msra.mxu0 %v497
        %499 = vmatprep.subr.mxu0 0.0
        %v500 = vand.u32 %v276, 4294901760
        %v501 = vsub.f32 %v276, %v500
        %502 = vmatpush1.msra.mxu0 %v501
        %503 = vmatprep.subr.mxu0 0.0
        %504 = vmatpush2.msra.mxu0 0.0
        %505 = vmatprep.subr.mxu0 0.0
        %506 = vmatpush2.msra.mxu0 0.0
        %507 = vmatprep.subr.mxu0 0.0
        %508 = vmatpush2.msra.mxu0 0.0
        %509 = vmatprep.subr.mxu0 0.0
        %510 = vmatpush2.msra.mxu0 0.0
        %511 = vmatprep.subr.mxu0 0.0
        %512 = vmatpush2.msra.mxu0 0.0
        %513 = vmatprep.subr.mxu0 0.0
        %514 = vmatpush2.msra.mxu0 0.0
        %515 = vmatprep.subr.mxu0 0.0
        %516 = vmatpush2.msra.mxu0 0.0
        %517 = vmatprep.subr.mxu0 0.0
        %518 = vmatpush2.msra.mxu0 0.0
        %519 = vmatprep.subr.mxu0 0.0
        %520 = vmatpush2.msra.mxu0 0.0
        %521 = vmatprep.subr.mxu0 0.0
        %522 = vmatpush2.msra.mxu0 0.0
        %523 = vmatprep.subr.mxu0 0.0
        %524 = vmatpush2.msra.mxu0 0.0
        %525 = vmatprep.subr.mxu0 0.0
        %526 = vmatpush2.msra.mxu0 0.0
        %527 = vmatprep.subr.mxu0 0.0
        %528 = vmatpush2.msra.mxu0 0.0
        %529 = vmatprep.subr.mxu0 0.0
        %530 = vmatpush2.msra.mxu0 0.0
        %531 = vmatprep.subr.mxu0 0.0
        %532 = vmatpush2.msra.mxu0 0.0
        %533 = vmatprep.subr.mxu0 0.0
        %534 = vmatpush2.msra.mxu0 0.0
        %535 = vmatprep.mubr.f32.mxu0 0.0
        %v536 = vand.u32 %v288, 4294901760
        %v537 = vsub.f32 %v288, %v536
        %538 = vmatmul.mubr.f32.gmra.mxu0 %v537
        %v539 = vpop.f32.mrf.mxu0
        %v540 = vadd.f32 %v458, %v539
        %v541 = vpop.f32.mrf.mxu0
        %542 = vmatprep.mubr.f32.mxu0 0.0
        %v543 = vand.u32 %v291, 4294901760
        %v544 = vsub.f32 %v291, %v543
        %545 = vmatmul.mubr.f32.gmra.mxu0 %v544
        %v546 = vpop.f32.mrf.mxu0
        %v547 = vadd.f32 %v464, %v546
        %v548 = vpop.f32.mrf.mxu0
        %549 = vdwg.mxu0
        %550 = vmatprep.subr.mxu0 0.0
        %551 = vmatpush1.msra.mxu0 0.0
        %552 = vmatprep.subr.mxu0 0.0
        %553 = vmatpush1.msra.mxu0 0.0
        %554 = vmatprep.subr.mxu0 0.0
        %555 = vmatpush1.msra.mxu0 0.0
        %556 = vmatprep.subr.mxu0 0.0
        %557 = vmatpush1.msra.mxu0 0.0
        %558 = vmatprep.subr.mxu0 0.0
        %559 = vmatpush1.msra.mxu0 0.0
        %560 = vmatprep.subr.mxu0 0.0
        %561 = vmatpush1.msra.mxu0 0.0
        %562 = vmatprep.subr.mxu0 0.0
        %563 = vmatpush1.msra.mxu0 0.0
        %564 = vmatprep.subr.mxu0 0.0
        %565 = vmatpush1.msra.mxu0 0.0
        %566 = vmatprep.subr.mxu0 0.0
        %567 = vmatpush1.msra.mxu0 0.0
        %568 = vmatprep.subr.mxu0 0.0
        %569 = vmatpush1.msra.mxu0 0.0
        %570 = vmatprep.subr.mxu0 0.0
        %571 = vmatpush1.msra.mxu0 0.0
        %572 = vmatprep.subr.mxu0 0.0
        %573 = vmatpush1.msra.mxu0 0.0
        %574 = vmatprep.subr.mxu0 0.0
        %575 = vmatpush1.msra.mxu0 0.0
        %576 = vmatprep.subr.mxu0 0.0
        %577 = vmatpush1.msra.mxu0 0.0
        %578 = vmatprep.subr.mxu0 0.0
        %v579 = vand.u32 %v277, 4294901760
        %580 = vmatpush1.msra.mxu0 %v579
        %581 = vmatprep.subr.mxu0 0.0
        %v582 = vand.u32 %v276, 4294901760
        %583 = vmatpush1.msra.mxu0 %v582
        %584 = vmatprep.subr.mxu0 0.0
        %585 = vmatpush2.msra.mxu0 0.0
        %586 = vmatprep.subr.mxu0 0.0
        %587 = vmatpush2.msra.mxu0 0.0
        %588 = vmatprep.subr.mxu0 0.0
        %589 = vmatpush2.msra.mxu0 0.0
        %590 = vmatprep.subr.mxu0 0.0
        %591 = vmatpush2.msra.mxu0 0.0
        %592 = vmatprep.subr.mxu0 0.0
        %593 = vmatpush2.msra.mxu0 0.0
        %594 = vmatprep.subr.mxu0 0.0
        %595 = vmatpush2.msra.mxu0 0.0
        %596 = vmatprep.subr.mxu0 0.0
        %597 = vmatpush2.msra.mxu0 0.0
        %598 = vmatprep.subr.mxu0 0.0
        %599 = vmatpush2.msra.mxu0 0.0
        %600 = vmatprep.subr.mxu0 0.0
        %601 = vmatpush2.msra.mxu0 0.0
        %602 = vmatprep.subr.mxu0 0.0
        %603 = vmatpush2.msra.mxu0 0.0
        %604 = vmatprep.subr.mxu0 0.0
        %605 = vmatpush2.msra.mxu0 0.0
        %606 = vmatprep.subr.mxu0 0.0
        %607 = vmatpush2.msra.mxu0 0.0
        %608 = vmatprep.subr.mxu0 0.0
        %609 = vmatpush2.msra.mxu0 0.0
        %610 = vmatprep.subr.mxu0 0.0
        %611 = vmatpush2.msra.mxu0 0.0
        %612 = vmatprep.subr.mxu0 0.0
        %613 = vmatpush2.msra.mxu0 0.0
        %614 = vmatprep.subr.mxu0 0.0
        %615 = vmatpush2.msra.mxu0 0.0
        %616 = vmatprep.mubr.f32.mxu0 0.0
        %v617 = vand.u32 %v288, 4294901760
        %v618 = vsub.f32 %v288, %v617
        %v619 = vand.u32 %v618, 4294901760
        %620 = vmatmul.mubr.f32.gmra.mxu0 %v619
        %v621 = vpop.f32.mrf.mxu0
        %v622 = vadd.f32 %v540, %v621
        %v623 = vpop.f32.mrf.mxu0
        %624 = vmatprep.mubr.f32.mxu0 0.0
        %v625 = vand.u32 %v291, 4294901760
        %v626 = vsub.f32 %v291, %v625
        %v627 = vand.u32 %v626, 4294901760
        %628 = vmatmul.mubr.f32.gmra.mxu0 %v627
        %v629 = vpop.f32.mrf.mxu0
        %v630 = vadd.f32 %v547, %v629
        %v631 = vpop.f32.mrf.mxu0
        %632 = vdwg.mxu0
        %633 = vmatprep.subr.mxu0 0.0
        %634 = vmatpush1.msra.mxu0 0.0
        %635 = vmatprep.subr.mxu0 0.0
        %636 = vmatpush1.msra.mxu0 0.0
        %637 = vmatprep.subr.mxu0 0.0
        %638 = vmatpush1.msra.mxu0 0.0
        %639 = vmatprep.subr.mxu0 0.0
        %640 = vmatpush1.msra.mxu0 0.0
        %641 = vmatprep.subr.mxu0 0.0
        %642 = vmatpush1.msra.mxu0 0.0
        %643 = vmatprep.subr.mxu0 0.0
        %644 = vmatpush1.msra.mxu0 0.0
        %645 = vmatprep.subr.mxu0 0.0
        %646 = vmatpush1.msra.mxu0 0.0
        %647 = vmatprep.subr.mxu0 0.0
        %648 = vmatpush1.msra.mxu0 0.0
        %649 = vmatprep.subr.mxu0 0.0
        %650 = vmatpush1.msra.mxu0 0.0
        %651 = vmatprep.subr.mxu0 0.0
        %652 = vmatpush1.msra.mxu0 0.0
        %653 = vmatprep.subr.mxu0 0.0
        %654 = vmatpush1.msra.mxu0 0.0
        %655 = vmatprep.subr.mxu0 0.0
        %656 = vmatpush1.msra.mxu0 0.0
        %657 = vmatprep.subr.mxu0 0.0
        %658 = vmatpush1.msra.mxu0 0.0
        %659 = vmatprep.subr.mxu0 0.0
        %660 = vmatpush1.msra.mxu0 0.0
        %661 = vmatprep.subr.mxu0 0.0
        %v662 = vand.u32 %v277, 4294901760
        %v663 = vsub.f32 %v277, %v662
        %v664 = vand.u32 %v663, 4294901760
        %665 = vmatpush1.msra.mxu0 %v664
        %666 = vmatprep.subr.mxu0 0.0
        %v667 = vand.u32 %v276, 4294901760
        %v668 = vsub.f32 %v276, %v667
        %v669 = vand.u32 %v668, 4294901760
        %670 = vmatpush1.msra.mxu0 %v669
        %671 = vmatprep.subr.mxu0 0.0
        %672 = vmatpush2.msra.mxu0 0.0
        %673 = vmatprep.subr.mxu0 0.0
        %674 = vmatpush2.msra.mxu0 0.0
        %675 = vmatprep.subr.mxu0 0.0
        %676 = vmatpush2.msra.mxu0 0.0
        %677 = vmatprep.subr.mxu0 0.0
        %678 = vmatpush2.msra.mxu0 0.0
        %679 = vmatprep.subr.mxu0 0.0
        %680 = vmatpush2.msra.mxu0 0.0
        %681 = vmatprep.subr.mxu0 0.0
        %682 = vmatpush2.msra.mxu0 0.0
        %683 = vmatprep.subr.mxu0 0.0
        %684 = vmatpush2.msra.mxu0 0.0
        %685 = vmatprep.subr.mxu0 0.0
        %686 = vmatpush2.msra.mxu0 0.0
        %687 = vmatprep.subr.mxu0 0.0
        %688 = vmatpush2.msra.mxu0 0.0
        %689 = vmatprep.subr.mxu0 0.0
        %690 = vmatpush2.msra.mxu0 0.0
        %691 = vmatprep.subr.mxu0 0.0
        %692 = vmatpush2.msra.mxu0 0.0
        %693 = vmatprep.subr.mxu0 0.0
        %694 = vmatpush2.msra.mxu0 0.0
        %695 = vmatprep.subr.mxu0 0.0
        %696 = vmatpush2.msra.mxu0 0.0
        %697 = vmatprep.subr.mxu0 0.0
        %698 = vmatpush2.msra.mxu0 0.0
        %699 = vmatprep.subr.mxu0 0.0
        %700 = vmatpush2.msra.mxu0 0.0
        %701 = vmatprep.subr.mxu0 0.0
        %702 = vmatpush2.msra.mxu0 0.0
        %703 = vmatprep.mubr.f32.mxu0 0.0
        %v704 = vand.u32 %v288, 4294901760
        %705 = vmatmul.mubr.f32.gmra.mxu0 %v704
        %v706 = vpop.f32.mrf.mxu0
        %v707 = vadd.f32 %v622, %v706
        %v708 = vpop.f32.mrf.mxu0
        %709 = vmatprep.mubr.f32.mxu0 0.0
        %v710 = vand.u32 %v291, 4294901760
        %711 = vmatmul.mubr.f32.gmra.mxu0 %v710
        %v712 = vpop.f32.mrf.mxu0
        %v713 = vadd.f32 %v630, %v712
        %v714 = vpop.f32.mrf.mxu0
        %715 = vdwg.mxu0
        %716 = vmatprep.subr.mxu0 0.0
        %717 = vmatpush1.msra.mxu0 0.0
        %718 = vmatprep.subr.mxu0 0.0
        %719 = vmatpush1.msra.mxu0 0.0
        %720 = vmatprep.subr.mxu0 0.0
        %721 = vmatpush1.msra.mxu0 0.0
        %722 = vmatprep.subr.mxu0 0.0
        %723 = vmatpush1.msra.mxu0 0.0
        %724 = vmatprep.subr.mxu0 0.0
        %725 = vmatpush1.msra.mxu0 0.0
        %726 = vmatprep.subr.mxu0 0.0
        %727 = vmatpush1.msra.mxu0 0.0
        %728 = vmatprep.subr.mxu0 0.0
        %729 = vmatpush1.msra.mxu0 0.0
        %730 = vmatprep.subr.mxu0 0.0
        %731 = vmatpush1.msra.mxu0 0.0
        %732 = vmatprep.subr.mxu0 0.0
        %733 = vmatpush1.msra.mxu0 0.0
        %734 = vmatprep.subr.mxu0 0.0
        %735 = vmatpush1.msra.mxu0 0.0
        %736 = vmatprep.subr.mxu0 0.0
        %737 = vmatpush1.msra.mxu0 0.0
        %738 = vmatprep.subr.mxu0 0.0
        %739 = vmatpush1.msra.mxu0 0.0
        %740 = vmatprep.subr.mxu0 0.0
        %741 = vmatpush1.msra.mxu0 0.0
        %742 = vmatprep.subr.mxu0 0.0
        %743 = vmatpush1.msra.mxu0 0.0
        %744 = vmatprep.subr.mxu0 0.0
        %v745 = vand.u32 %v277, 4294901760
        %746 = vmatpush1.msra.mxu0 %v745
        %747 = vmatprep.subr.mxu0 0.0
        %v748 = vand.u32 %v276, 4294901760
        %749 = vmatpush1.msra.mxu0 %v748
        %750 = vmatprep.subr.mxu0 0.0
        %751 = vmatpush2.msra.mxu0 0.0
        %752 = vmatprep.subr.mxu0 0.0
        %753 = vmatpush2.msra.mxu0 0.0
        %754 = vmatprep.subr.mxu0 0.0
        %755 = vmatpush2.msra.mxu0 0.0
        %756 = vmatprep.subr.mxu0 0.0
        %757 = vmatpush2.msra.mxu0 0.0
        %758 = vmatprep.subr.mxu0 0.0
        %759 = vmatpush2.msra.mxu0 0.0
        %760 = vmatprep.subr.mxu0 0.0
        %761 = vmatpush2.msra.mxu0 0.0
        %762 = vmatprep.subr.mxu0 0.0
        %763 = vmatpush2.msra.mxu0 0.0
        %764 = vmatprep.subr.mxu0 0.0
        %765 = vmatpush2.msra.mxu0 0.0
        %766 = vmatprep.subr.mxu0 0.0
        %767 = vmatpush2.msra.mxu0 0.0
        %768 = vmatprep.subr.mxu0 0.0
        %769 = vmatpush2.msra.mxu0 0.0
        %770 = vmatprep.subr.mxu0 0.0
        %771 = vmatpush2.msra.mxu0 0.0
        %772 = vmatprep.subr.mxu0 0.0
        %773 = vmatpush2.msra.mxu0 0.0
        %774 = vmatprep.subr.mxu0 0.0
        %775 = vmatpush2.msra.mxu0 0.0
        %776 = vmatprep.subr.mxu0 0.0
        %777 = vmatpush2.msra.mxu0 0.0
        %778 = vmatprep.subr.mxu0 0.0
        %779 = vmatpush2.msra.mxu0 0.0
        %780 = vmatprep.subr.mxu0 0.0
        %781 = vmatpush2.msra.mxu0 0.0
        %782 = vmatprep.mubr.f32.mxu0 0.0
        %v783 = vand.u32 %v288, 4294901760
        %784 = vmatmul.mubr.f32.gmra.mxu0 %v783
        %v785 = vpop.f32.mrf.mxu0
        %v786 = vadd.f32 %v707, %v785
        %v787 = vpop.f32.mrf.mxu0
        %788 = vmatprep.mubr.f32.mxu0 0.0
        %v789 = vand.u32 %v291, 4294901760
        %790 = vmatmul.mubr.f32.gmra.mxu0 %v789
        %v791 = vpop.f32.mrf.mxu0
        %v792 = vadd.f32 %v713, %v791
        %v793 = vpop.f32.mrf.mxu0
        %794 = vdwg.mxu0
        %v796 = vsel %vm286, %v269, 0
        %v799 = vsel %vm286, %v270, 0
        %801 = vmatprep.subr.mxu0 0.0
        %802 = vmatpush1.msra.mxu0 0.0
        %803 = vmatprep.subr.mxu0 0.0
        %804 = vmatpush1.msra.mxu0 0.0
        %805 = vmatprep.subr.mxu0 0.0
        %806 = vmatpush1.msra.mxu0 0.0
        %807 = vmatprep.subr.mxu0 0.0
        %808 = vmatpush1.msra.mxu0 0.0
        %809 = vmatprep.subr.mxu0 0.0
        %810 = vmatpush1.msra.mxu0 0.0
        %811 = vmatprep.subr.mxu0 0.0
        %812 = vmatpush1.msra.mxu0 0.0
        %813 = vmatprep.subr.mxu0 0.0
        %814 = vmatpush1.msra.mxu0 0.0
        %815 = vmatprep.subr.mxu0 0.0
        %816 = vmatpush1.msra.mxu0 0.0
        %817 = vmatprep.subr.mxu0 0.0
        %818 = vmatpush1.msra.mxu0 0.0
        %819 = vmatprep.subr.mxu0 0.0
        %820 = vmatpush1.msra.mxu0 0.0
        %821 = vmatprep.subr.mxu0 0.0
        %822 = vmatpush1.msra.mxu0 0.0
        %823 = vmatprep.subr.mxu0 0.0
        %824 = vmatpush1.msra.mxu0 0.0
        %825 = vmatprep.subr.mxu0 0.0
        %826 = vmatpush1.msra.mxu0 0.0
        %827 = vmatprep.subr.mxu0 0.0
        %828 = vmatpush1.msra.mxu0 0.0
        %829 = vmatprep.subr.mxu0 0.0
        %v830 = vand.u32 %v277, 4294901760
        %831 = vmatpush1.msra.mxu0 %v830
        %832 = vmatprep.subr.mxu0 0.0
        %v833 = vand.u32 %v276, 4294901760
        %834 = vmatpush1.msra.mxu0 %v833
        %835 = vmatprep.subr.mxu0 0.0
        %836 = vmatpush2.msra.mxu0 0.0
        %837 = vmatprep.subr.mxu0 0.0
        %838 = vmatpush2.msra.mxu0 0.0
        %839 = vmatprep.subr.mxu0 0.0
        %840 = vmatpush2.msra.mxu0 0.0
        %841 = vmatprep.subr.mxu0 0.0
        %842 = vmatpush2.msra.mxu0 0.0
        %843 = vmatprep.subr.mxu0 0.0
        %844 = vmatpush2.msra.mxu0 0.0
        %845 = vmatprep.subr.mxu0 0.0
        %846 = vmatpush2.msra.mxu0 0.0
        %847 = vmatprep.subr.mxu0 0.0
        %848 = vmatpush2.msra.mxu0 0.0
        %849 = vmatprep.subr.mxu0 0.0
        %850 = vmatpush2.msra.mxu0 0.0
        %851 = vmatprep.subr.mxu0 0.0
        %852 = vmatpush2.msra.mxu0 0.0
        %853 = vmatprep.subr.mxu0 0.0
        %854 = vmatpush2.msra.mxu0 0.0
        %855 = vmatprep.subr.mxu0 0.0
        %856 = vmatpush2.msra.mxu0 0.0
        %857 = vmatprep.subr.mxu0 0.0
        %858 = vmatpush2.msra.mxu0 0.0
        %859 = vmatprep.subr.mxu0 0.0
        %860 = vmatpush2.msra.mxu0 0.0
        %861 = vmatprep.subr.mxu0 0.0
        %862 = vmatpush2.msra.mxu0 0.0
        %863 = vmatprep.subr.mxu0 0.0
        %864 = vmatpush2.msra.mxu0 0.0
        %865 = vmatprep.subr.mxu0 0.0
        %866 = vmatpush2.msra.mxu0 0.0
        %867 = vmatprep.mubr.f32.mxu0 0.0
        %v868 = vand.u32 %v796, 4294901760
        %v869 = vsub.f32 %v796, %v868
        %v870 = vand.u32 %v869, 4294901760
        %v871 = vsub.f32 %v869, %v870
        %v872 = vand.u32 %v871, 4294901760
        %873 = vmatmul.mubr.f32.gmra.mxu0 %v872
        %v874 = vpop.f32.mrf.mxu0
        %v875 = vadd.f32 0.0, %v874
        %v876 = vpop.f32.mrf.mxu0
        %877 = vmatprep.mubr.f32.mxu0 0.0
        %v878 = vand.u32 %v799, 4294901760
        %v879 = vsub.f32 %v799, %v878
        %v880 = vand.u32 %v879, 4294901760
        %v881 = vsub.f32 %v879, %v880
        %v882 = vand.u32 %v881, 4294901760
        %883 = vmatmul.mubr.f32.gmra.mxu0 %v882
        %v884 = vpop.f32.mrf.mxu0
        %v885 = vadd.f32 0.0, %v884
        %v886 = vpop.f32.mrf.mxu0
        %887 = vdwg.mxu0
        %888 = vmatprep.subr.mxu0 0.0
        %889 = vmatpush1.msra.mxu0 0.0
        %890 = vmatprep.subr.mxu0 0.0
        %891 = vmatpush1.msra.mxu0 0.0
        %892 = vmatprep.subr.mxu0 0.0
        %893 = vmatpush1.msra.mxu0 0.0
        %894 = vmatprep.subr.mxu0 0.0
        %895 = vmatpush1.msra.mxu0 0.0
        %896 = vmatprep.subr.mxu0 0.0
        %897 = vmatpush1.msra.mxu0 0.0
        %898 = vmatprep.subr.mxu0 0.0
        %899 = vmatpush1.msra.mxu0 0.0
        %900 = vmatprep.subr.mxu0 0.0
        %901 = vmatpush1.msra.mxu0 0.0
        %902 = vmatprep.subr.mxu0 0.0
        %903 = vmatpush1.msra.mxu0 0.0
        %904 = vmatprep.subr.mxu0 0.0
        %905 = vmatpush1.msra.mxu0 0.0
        %906 = vmatprep.subr.mxu0 0.0
        %907 = vmatpush1.msra.mxu0 0.0
        %908 = vmatprep.subr.mxu0 0.0
        %909 = vmatpush1.msra.mxu0 0.0
        %910 = vmatprep.subr.mxu0 0.0
        %911 = vmatpush1.msra.mxu0 0.0
        %912 = vmatprep.subr.mxu0 0.0
        %913 = vmatpush1.msra.mxu0 0.0
        %914 = vmatprep.subr.mxu0 0.0
        %915 = vmatpush1.msra.mxu0 0.0
        %916 = vmatprep.subr.mxu0 0.0
        %v917 = vand.u32 %v277, 4294901760
        %v918 = vsub.f32 %v277, %v917
        %v919 = vand.u32 %v918, 4294901760
        %v920 = vsub.f32 %v918, %v919
        %v921 = vand.u32 %v920, 4294901760
        %922 = vmatpush1.msra.mxu0 %v921
        %923 = vmatprep.subr.mxu0 0.0
        %v924 = vand.u32 %v276, 4294901760
        %v925 = vsub.f32 %v276, %v924
        %v926 = vand.u32 %v925, 4294901760
        %v927 = vsub.f32 %v925, %v926
        %v928 = vand.u32 %v927, 4294901760
        %929 = vmatpush1.msra.mxu0 %v928
        %930 = vmatprep.subr.mxu0 0.0
        %931 = vmatpush2.msra.mxu0 0.0
        %932 = vmatprep.subr.mxu0 0.0
        %933 = vmatpush2.msra.mxu0 0.0
        %934 = vmatprep.subr.mxu0 0.0
        %935 = vmatpush2.msra.mxu0 0.0
        %936 = vmatprep.subr.mxu0 0.0
        %937 = vmatpush2.msra.mxu0 0.0
        %938 = vmatprep.subr.mxu0 0.0
        %939 = vmatpush2.msra.mxu0 0.0
        %940 = vmatprep.subr.mxu0 0.0
        %941 = vmatpush2.msra.mxu0 0.0
        %942 = vmatprep.subr.mxu0 0.0
        %943 = vmatpush2.msra.mxu0 0.0
        %944 = vmatprep.subr.mxu0 0.0
        %945 = vmatpush2.msra.mxu0 0.0
        %946 = vmatprep.subr.mxu0 0.0
        %947 = vmatpush2.msra.mxu0 0.0
        %948 = vmatprep.subr.mxu0 0.0
        %949 = vmatpush2.msra.mxu0 0.0
        %950 = vmatprep.subr.mxu0 0.0
        %951 = vmatpush2.msra.mxu0 0.0
        %952 = vmatprep.subr.mxu0 0.0
        %953 = vmatpush2.msra.mxu0 0.0
        %954 = vmatprep.subr.mxu0 0.0
        %955 = vmatpush2.msra.mxu0 0.0
        %956 = vmatprep.subr.mxu0 0.0
        %957 = vmatpush2.msra.mxu0 0.0
        %958 = vmatprep.subr.mxu0 0.0
        %959 = vmatpush2.msra.mxu0 0.0
        %960 = vmatprep.subr.mxu0 0.0
        %961 = vmatpush2.msra.mxu0 0.0
        %962 = vmatprep.mubr.f32.mxu0 0.0
        %v963 = vand.u32 %v796, 4294901760
        %964 = vmatmul.mubr.f32.gmra.mxu0 %v963
        %v965 = vpop.f32.mrf.mxu0
        %v966 = vadd.f32 %v875, %v965
        %v967 = vpop.f32.mrf.mxu0
        %968 = vmatprep.mubr.f32.mxu0 0.0
        %v969 = vand.u32 %v799, 4294901760
        %970 = vmatmul.mubr.f32.gmra.mxu0 %v969
        %v971 = vpop.f32.mrf.mxu0
        %v972 = vadd.f32 %v885, %v971
        %v973 = vpop.f32.mrf.mxu0
        %974 = vdwg.mxu0
        %975 = vmatprep.subr.mxu0 0.0
        %976 = vmatpush1.msra.mxu0 0.0
        %977 = vmatprep.subr.mxu0 0.0
        %978 = vmatpush1.msra.mxu0 0.0
        %979 = vmatprep.subr.mxu0 0.0
        %980 = vmatpush1.msra.mxu0 0.0
        %981 = vmatprep.subr.mxu0 0.0
        %982 = vmatpush1.msra.mxu0 0.0
        %983 = vmatprep.subr.mxu0 0.0
        %984 = vmatpush1.msra.mxu0 0.0
        %985 = vmatprep.subr.mxu0 0.0
        %986 = vmatpush1.msra.mxu0 0.0
        %987 = vmatprep.subr.mxu0 0.0
        %988 = vmatpush1.msra.mxu0 0.0
        %989 = vmatprep.subr.mxu0 0.0
        %990 = vmatpush1.msra.mxu0 0.0
        %991 = vmatprep.subr.mxu0 0.0
        %992 = vmatpush1.msra.mxu0 0.0
        %993 = vmatprep.subr.mxu0 0.0
        %994 = vmatpush1.msra.mxu0 0.0
        %995 = vmatprep.subr.mxu0 0.0
        %996 = vmatpush1.msra.mxu0 0.0
        %997 = vmatprep.subr.mxu0 0.0
        %998 = vmatpush1.msra.mxu0 0.0
        %999 = vmatprep.subr.mxu0 0.0
        %1000 = vmatpush1.msra.mxu0 0.0
        %1001 = vmatprep.subr.mxu0 0.0
        %1002 = vmatpush1.msra.mxu0 0.0
        %1003 = vmatprep.subr.mxu0 0.0
        %v1004 = vand.u32 %v277, 4294901760
        %v1005 = vsub.f32 %v277, %v1004
        %1006 = vmatpush1.msra.mxu0 %v1005
        %1007 = vmatprep.subr.mxu0 0.0
        %v1008 = vand.u32 %v276, 4294901760
        %v1009 = vsub.f32 %v276, %v1008
        %1010 = vmatpush1.msra.mxu0 %v1009
        %1011 = vmatprep.subr.mxu0 0.0
        %1012 = vmatpush2.msra.mxu0 0.0
        %1013 = vmatprep.subr.mxu0 0.0
        %1014 = vmatpush2.msra.mxu0 0.0
        %1015 = vmatprep.subr.mxu0 0.0
        %1016 = vmatpush2.msra.mxu0 0.0
        %1017 = vmatprep.subr.mxu0 0.0
        %1018 = vmatpush2.msra.mxu0 0.0
        %1019 = vmatprep.subr.mxu0 0.0
        %1020 = vmatpush2.msra.mxu0 0.0
        %1021 = vmatprep.subr.mxu0 0.0
        %1022 = vmatpush2.msra.mxu0 0.0
        %1023 = vmatprep.subr.mxu0 0.0
        %1024 = vmatpush2.msra.mxu0 0.0
        %1025 = vmatprep.subr.mxu0 0.0
        %1026 = vmatpush2.msra.mxu0 0.0
        %1027 = vmatprep.subr.mxu0 0.0
        %1028 = vmatpush2.msra.mxu0 0.0
        %1029 = vmatprep.subr.mxu0 0.0
        %1030 = vmatpush2.msra.mxu0 0.0
        %1031 = vmatprep.subr.mxu0 0.0
        %1032 = vmatpush2.msra.mxu0 0.0
        %1033 = vmatprep.subr.mxu0 0.0
        %1034 = vmatpush2.msra.mxu0 0.0
        %1035 = vmatprep.subr.mxu0 0.0
        %1036 = vmatpush2.msra.mxu0 0.0
        %1037 = vmatprep.subr.mxu0 0.0
        %1038 = vmatpush2.msra.mxu0 0.0
        %1039 = vmatprep.subr.mxu0 0.0
        %1040 = vmatpush2.msra.mxu0 0.0
        %1041 = vmatprep.subr.mxu0 0.0
        %1042 = vmatpush2.msra.mxu0 0.0
        %1043 = vmatprep.mubr.f32.mxu0 0.0
        %v1044 = vand.u32 %v796, 4294901760
        %v1045 = vsub.f32 %v796, %v1044
        %1046 = vmatmul.mubr.f32.gmra.mxu0 %v1045
        %v1047 = vpop.f32.mrf.mxu0
        %v1048 = vadd.f32 %v966, %v1047
        %v1049 = vpop.f32.mrf.mxu0
        %1050 = vmatprep.mubr.f32.mxu0 0.0
        %v1051 = vand.u32 %v799, 4294901760
        %v1052 = vsub.f32 %v799, %v1051
        %1053 = vmatmul.mubr.f32.gmra.mxu0 %v1052
        %v1054 = vpop.f32.mrf.mxu0
        %v1055 = vadd.f32 %v972, %v1054
        %v1056 = vpop.f32.mrf.mxu0
        %1057 = vdwg.mxu0
        %1058 = vmatprep.subr.mxu0 0.0
        %1059 = vmatpush1.msra.mxu0 0.0
        %1060 = vmatprep.subr.mxu0 0.0
        %1061 = vmatpush1.msra.mxu0 0.0
        %1062 = vmatprep.subr.mxu0 0.0
        %1063 = vmatpush1.msra.mxu0 0.0
        %1064 = vmatprep.subr.mxu0 0.0
        %1065 = vmatpush1.msra.mxu0 0.0
        %1066 = vmatprep.subr.mxu0 0.0
        %1067 = vmatpush1.msra.mxu0 0.0
        %1068 = vmatprep.subr.mxu0 0.0
        %1069 = vmatpush1.msra.mxu0 0.0
        %1070 = vmatprep.subr.mxu0 0.0
        %1071 = vmatpush1.msra.mxu0 0.0
        %1072 = vmatprep.subr.mxu0 0.0
        %1073 = vmatpush1.msra.mxu0 0.0
        %1074 = vmatprep.subr.mxu0 0.0
        %1075 = vmatpush1.msra.mxu0 0.0
        %1076 = vmatprep.subr.mxu0 0.0
        %1077 = vmatpush1.msra.mxu0 0.0
        %1078 = vmatprep.subr.mxu0 0.0
        %1079 = vmatpush1.msra.mxu0 0.0
        %1080 = vmatprep.subr.mxu0 0.0
        %1081 = vmatpush1.msra.mxu0 0.0
        %1082 = vmatprep.subr.mxu0 0.0
        %1083 = vmatpush1.msra.mxu0 0.0
        %1084 = vmatprep.subr.mxu0 0.0
        %1085 = vmatpush1.msra.mxu0 0.0
        %1086 = vmatprep.subr.mxu0 0.0
        %v1087 = vand.u32 %v277, 4294901760
        %1088 = vmatpush1.msra.mxu0 %v1087
        %1089 = vmatprep.subr.mxu0 0.0
        %v1090 = vand.u32 %v276, 4294901760
        %1091 = vmatpush1.msra.mxu0 %v1090
        %1092 = vmatprep.subr.mxu0 0.0
        %1093 = vmatpush2.msra.mxu0 0.0
        %1094 = vmatprep.subr.mxu0 0.0
        %1095 = vmatpush2.msra.mxu0 0.0
        %1096 = vmatprep.subr.mxu0 0.0
        %1097 = vmatpush2.msra.mxu0 0.0
        %1098 = vmatprep.subr.mxu0 0.0
        %1099 = vmatpush2.msra.mxu0 0.0
        %1100 = vmatprep.subr.mxu0 0.0
        %1101 = vmatpush2.msra.mxu0 0.0
        %1102 = vmatprep.subr.mxu0 0.0
        %1103 = vmatpush2.msra.mxu0 0.0
        %1104 = vmatprep.subr.mxu0 0.0
        %1105 = vmatpush2.msra.mxu0 0.0
        %1106 = vmatprep.subr.mxu0 0.0
        %1107 = vmatpush2.msra.mxu0 0.0
        %1108 = vmatprep.subr.mxu0 0.0
        %1109 = vmatpush2.msra.mxu0 0.0
        %1110 = vmatprep.subr.mxu0 0.0
        %1111 = vmatpush2.msra.mxu0 0.0
        %1112 = vmatprep.subr.mxu0 0.0
        %1113 = vmatpush2.msra.mxu0 0.0
        %1114 = vmatprep.subr.mxu0 0.0
        %1115 = vmatpush2.msra.mxu0 0.0
        %1116 = vmatprep.subr.mxu0 0.0
        %1117 = vmatpush2.msra.mxu0 0.0
        %1118 = vmatprep.subr.mxu0 0.0
        %1119 = vmatpush2.msra.mxu0 0.0
        %1120 = vmatprep.subr.mxu0 0.0
        %1121 = vmatpush2.msra.mxu0 0.0
        %1122 = vmatprep.subr.mxu0 0.0
        %1123 = vmatpush2.msra.mxu0 0.0
        %1124 = vmatprep.mubr.f32.mxu0 0.0
        %v1125 = vand.u32 %v796, 4294901760
        %v1126 = vsub.f32 %v796, %v1125
        %v1127 = vand.u32 %v1126, 4294901760
        %1128 = vmatmul.mubr.f32.gmra.mxu0 %v1127
        %v1129 = vpop.f32.mrf.mxu0
        %v1130 = vadd.f32 %v1048, %v1129
        %v1131 = vpop.f32.mrf.mxu0
        %1132 = vmatprep.mubr.f32.mxu0 0.0
        %v1133 = vand.u32 %v799, 4294901760
        %v1134 = vsub.f32 %v799, %v1133
        %v1135 = vand.u32 %v1134, 4294901760
        %1136 = vmatmul.mubr.f32.gmra.mxu0 %v1135
        %v1137 = vpop.f32.mrf.mxu0
        %v1138 = vadd.f32 %v1055, %v1137
        %v1139 = vpop.f32.mrf.mxu0
        %1140 = vdwg.mxu0
        %1141 = vmatprep.subr.mxu0 0.0
        %1142 = vmatpush1.msra.mxu0 0.0
        %1143 = vmatprep.subr.mxu0 0.0
        %1144 = vmatpush1.msra.mxu0 0.0
        %1145 = vmatprep.subr.mxu0 0.0
        %1146 = vmatpush1.msra.mxu0 0.0
        %1147 = vmatprep.subr.mxu0 0.0
        %1148 = vmatpush1.msra.mxu0 0.0
        %1149 = vmatprep.subr.mxu0 0.0
        %1150 = vmatpush1.msra.mxu0 0.0
        %1151 = vmatprep.subr.mxu0 0.0
        %1152 = vmatpush1.msra.mxu0 0.0
        %1153 = vmatprep.subr.mxu0 0.0
        %1154 = vmatpush1.msra.mxu0 0.0
        %1155 = vmatprep.subr.mxu0 0.0
        %1156 = vmatpush1.msra.mxu0 0.0
        %1157 = vmatprep.subr.mxu0 0.0
        %1158 = vmatpush1.msra.mxu0 0.0
        %1159 = vmatprep.subr.mxu0 0.0
        %1160 = vmatpush1.msra.mxu0 0.0
        %1161 = vmatprep.subr.mxu0 0.0
        %1162 = vmatpush1.msra.mxu0 0.0
        %1163 = vmatprep.subr.mxu0 0.0
        %1164 = vmatpush1.msra.mxu0 0.0
        %1165 = vmatprep.subr.mxu0 0.0
        %1166 = vmatpush1.msra.mxu0 0.0
        %1167 = vmatprep.subr.mxu0 0.0
        %1168 = vmatpush1.msra.mxu0 0.0
        %1169 = vmatprep.subr.mxu0 0.0
        %v1170 = vand.u32 %v277, 4294901760
        %v1171 = vsub.f32 %v277, %v1170
        %v1172 = vand.u32 %v1171, 4294901760
        %1173 = vmatpush1.msra.mxu0 %v1172
        %1174 = vmatprep.subr.mxu0 0.0
        %v1175 = vand.u32 %v276, 4294901760
        %v1176 = vsub.f32 %v276, %v1175
        %v1177 = vand.u32 %v1176, 4294901760
        %1178 = vmatpush1.msra.mxu0 %v1177
        %1179 = vmatprep.subr.mxu0 0.0
        %1180 = vmatpush2.msra.mxu0 0.0
        %1181 = vmatprep.subr.mxu0 0.0
        %1182 = vmatpush2.msra.mxu0 0.0
        %1183 = vmatprep.subr.mxu0 0.0
        %1184 = vmatpush2.msra.mxu0 0.0
        %1185 = vmatprep.subr.mxu0 0.0
        %1186 = vmatpush2.msra.mxu0 0.0
        %1187 = vmatprep.subr.mxu0 0.0
        %1188 = vmatpush2.msra.mxu0 0.0
        %1189 = vmatprep.subr.mxu0 0.0
        %1190 = vmatpush2.msra.mxu0 0.0
        %1191 = vmatprep.subr.mxu0 0.0
        %1192 = vmatpush2.msra.mxu0 0.0
        %1193 = vmatprep.subr.mxu0 0.0
        %1194 = vmatpush2.msra.mxu0 0.0
        %1195 = vmatprep.subr.mxu0 0.0
        %1196 = vmatpush2.msra.mxu0 0.0
        %1197 = vmatprep.subr.mxu0 0.0
        %1198 = vmatpush2.msra.mxu0 0.0
        %1199 = vmatprep.subr.mxu0 0.0
        %1200 = vmatpush2.msra.mxu0 0.0
        %1201 = vmatprep.subr.mxu0 0.0
        %1202 = vmatpush2.msra.mxu0 0.0
        %1203 = vmatprep.subr.mxu0 0.0
        %1204 = vmatpush2.msra.mxu0 0.0
        %1205 = vmatprep.subr.mxu0 0.0
        %1206 = vmatpush2.msra.mxu0 0.0
        %1207 = vmatprep.subr.mxu0 0.0
        %1208 = vmatpush2.msra.mxu0 0.0
        %1209 = vmatprep.subr.mxu0 0.0
        %1210 = vmatpush2.msra.mxu0 0.0
        %1211 = vmatprep.mubr.f32.mxu0 0.0
        %v1212 = vand.u32 %v796, 4294901760
        %1213 = vmatmul.mubr.f32.gmra.mxu0 %v1212
        %v1214 = vpop.f32.mrf.mxu0
        %v1215 = vadd.f32 %v1130, %v1214
        %v1216 = vpop.f32.mrf.mxu0
        %1217 = vmatprep.mubr.f32.mxu0 0.0
        %v1218 = vand.u32 %v799, 4294901760
        %1219 = vmatmul.mubr.f32.gmra.mxu0 %v1218
        %v1220 = vpop.f32.mrf.mxu0
        %v1221 = vadd.f32 %v1138, %v1220
        %v1222 = vpop.f32.mrf.mxu0
        %1223 = vdwg.mxu0
        %1224 = vmatprep.subr.mxu0 0.0
        %1225 = vmatpush1.msra.mxu0 0.0
        %1226 = vmatprep.subr.mxu0 0.0
        %1227 = vmatpush1.msra.mxu0 0.0
        %1228 = vmatprep.subr.mxu0 0.0
        %1229 = vmatpush1.msra.mxu0 0.0
        %1230 = vmatprep.subr.mxu0 0.0
        %1231 = vmatpush1.msra.mxu0 0.0
        %1232 = vmatprep.subr.mxu0 0.0
        %1233 = vmatpush1.msra.mxu0 0.0
        %1234 = vmatprep.subr.mxu0 0.0
        %1235 = vmatpush1.msra.mxu0 0.0
        %1236 = vmatprep.subr.mxu0 0.0
        %1237 = vmatpush1.msra.mxu0 0.0
        %1238 = vmatprep.subr.mxu0 0.0
        %1239 = vmatpush1.msra.mxu0 0.0
        %1240 = vmatprep.subr.mxu0 0.0
        %1241 = vmatpush1.msra.mxu0 0.0
        %1242 = vmatprep.subr.mxu0 0.0
        %1243 = vmatpush1.msra.mxu0 0.0
        %1244 = vmatprep.subr.mxu0 0.0
        %1245 = vmatpush1.msra.mxu0 0.0
        %1246 = vmatprep.subr.mxu0 0.0
        %1247 = vmatpush1.msra.mxu0 0.0
        %1248 = vmatprep.subr.mxu0 0.0
        %1249 = vmatpush1.msra.mxu0 0.0
        %1250 = vmatprep.subr.mxu0 0.0
        %1251 = vmatpush1.msra.mxu0 0.0
        %1252 = vmatprep.subr.mxu0 0.0
        %v1253 = vand.u32 %v277, 4294901760
        %1254 = vmatpush1.msra.mxu0 %v1253
        %1255 = vmatprep.subr.mxu0 0.0
        %v1256 = vand.u32 %v276, 4294901760
        %1257 = vmatpush1.msra.mxu0 %v1256
        %1258 = vmatprep.subr.mxu0 0.0
        %1259 = vmatpush2.msra.mxu0 0.0
        %1260 = vmatprep.subr.mxu0 0.0
        %1261 = vmatpush2.msra.mxu0 0.0
        %1262 = vmatprep.subr.mxu0 0.0
        %1263 = vmatpush2.msra.mxu0 0.0
        %1264 = vmatprep.subr.mxu0 0.0
        %1265 = vmatpush2.msra.mxu0 0.0
        %1266 = vmatprep.subr.mxu0 0.0
        %1267 = vmatpush2.msra.mxu0 0.0
        %1268 = vmatprep.subr.mxu0 0.0
        %1269 = vmatpush2.msra.mxu0 0.0
        %1270 = vmatprep.subr.mxu0 0.0
        %1271 = vmatpush2.msra.mxu0 0.0
        %1272 = vmatprep.subr.mxu0 0.0
        %1273 = vmatpush2.msra.mxu0 0.0
        %1274 = vmatprep.subr.mxu0 0.0
        %1275 = vmatpush2.msra.mxu0 0.0
        %1276 = vmatprep.subr.mxu0 0.0
        %1277 = vmatpush2.msra.mxu0 0.0
        %1278 = vmatprep.subr.mxu0 0.0
        %1279 = vmatpush2.msra.mxu0 0.0
        %1280 = vmatprep.subr.mxu0 0.0
        %1281 = vmatpush2.msra.mxu0 0.0
        %1282 = vmatprep.subr.mxu0 0.0
        %1283 = vmatpush2.msra.mxu0 0.0
        %1284 = vmatprep.subr.mxu0 0.0
        %1285 = vmatpush2.msra.mxu0 0.0
        %1286 = vmatprep.subr.mxu0 0.0
        %1287 = vmatpush2.msra.mxu0 0.0
        %1288 = vmatprep.subr.mxu0 0.0
        %1289 = vmatpush2.msra.mxu0 0.0
        %1290 = vmatprep.mubr.f32.mxu0 0.0
        %v1291 = vand.u32 %v796, 4294901760
        %1292 = vmatmul.mubr.f32.gmra.mxu0 %v1291
        %v1293 = vpop.f32.mrf.mxu0
        %v1294 = vadd.f32 %v1215, %v1293
        %v1295 = vpop.f32.mrf.mxu0
        %1296 = vmatprep.mubr.f32.mxu0 0.0
        %v1297 = vand.u32 %v799, 4294901760
        %1298 = vmatmul.mubr.f32.gmra.mxu0 %v1297
        %v1299 = vpop.f32.mrf.mxu0
        %v1300 = vadd.f32 %v1221, %v1299
        %v1301 = vpop.f32.mrf.mxu0
        %1302 = vdwg.mxu0
        %v1304 = vsel %vm286, %v272, 0
        %v1307 = vsel %vm286, %v273, 0
        %1309 = vmatprep.subr.mxu0 0.0
        %1310 = vmatpush1.msra.mxu0 0.0
        %1311 = vmatprep.subr.mxu0 0.0
        %1312 = vmatpush1.msra.mxu0 0.0
        %1313 = vmatprep.subr.mxu0 0.0
        %1314 = vmatpush1.msra.mxu0 0.0
        %1315 = vmatprep.subr.mxu0 0.0
        %1316 = vmatpush1.msra.mxu0 0.0
        %1317 = vmatprep.subr.mxu0 0.0
        %1318 = vmatpush1.msra.mxu0 0.0
        %1319 = vmatprep.subr.mxu0 0.0
        %1320 = vmatpush1.msra.mxu0 0.0
        %1321 = vmatprep.subr.mxu0 0.0
        %1322 = vmatpush1.msra.mxu0 0.0
        %1323 = vmatprep.subr.mxu0 0.0
        %1324 = vmatpush1.msra.mxu0 0.0
        %1325 = vmatprep.subr.mxu0 0.0
        %1326 = vmatpush1.msra.mxu0 0.0
        %1327 = vmatprep.subr.mxu0 0.0
        %1328 = vmatpush1.msra.mxu0 0.0
        %1329 = vmatprep.subr.mxu0 0.0
        %1330 = vmatpush1.msra.mxu0 0.0
        %1331 = vmatprep.subr.mxu0 0.0
        %1332 = vmatpush1.msra.mxu0 0.0
        %1333 = vmatprep.subr.mxu0 0.0
        %1334 = vmatpush1.msra.mxu0 0.0
        %1335 = vmatprep.subr.mxu0 0.0
        %1336 = vmatpush1.msra.mxu0 0.0
        %1337 = vmatprep.subr.mxu0 0.0
        %v1338 = vand.u32 %v277, 4294901760
        %1339 = vmatpush1.msra.mxu0 %v1338
        %1340 = vmatprep.subr.mxu0 0.0
        %v1341 = vand.u32 %v276, 4294901760
        %1342 = vmatpush1.msra.mxu0 %v1341
        %1343 = vmatprep.subr.mxu0 0.0
        %1344 = vmatpush2.msra.mxu0 0.0
        %1345 = vmatprep.subr.mxu0 0.0
        %1346 = vmatpush2.msra.mxu0 0.0
        %1347 = vmatprep.subr.mxu0 0.0
        %1348 = vmatpush2.msra.mxu0 0.0
        %1349 = vmatprep.subr.mxu0 0.0
        %1350 = vmatpush2.msra.mxu0 0.0
        %1351 = vmatprep.subr.mxu0 0.0
        %1352 = vmatpush2.msra.mxu0 0.0
        %1353 = vmatprep.subr.mxu0 0.0
        %1354 = vmatpush2.msra.mxu0 0.0
        %1355 = vmatprep.subr.mxu0 0.0
        %1356 = vmatpush2.msra.mxu0 0.0
        %1357 = vmatprep.subr.mxu0 0.0
        %1358 = vmatpush2.msra.mxu0 0.0
        %1359 = vmatprep.subr.mxu0 0.0
        %1360 = vmatpush2.msra.mxu0 0.0
        %1361 = vmatprep.subr.mxu0 0.0
        %1362 = vmatpush2.msra.mxu0 0.0
        %1363 = vmatprep.subr.mxu0 0.0
        %1364 = vmatpush2.msra.mxu0 0.0
        %1365 = vmatprep.subr.mxu0 0.0
        %1366 = vmatpush2.msra.mxu0 0.0
        %1367 = vmatprep.subr.mxu0 0.0
        %1368 = vmatpush2.msra.mxu0 0.0
        %1369 = vmatprep.subr.mxu0 0.0
        %1370 = vmatpush2.msra.mxu0 0.0
        %1371 = vmatprep.subr.mxu0 0.0
        %1372 = vmatpush2.msra.mxu0 0.0
        %1373 = vmatprep.subr.mxu0 0.0
        %1374 = vmatpush2.msra.mxu0 0.0
        %1375 = vmatprep.mubr.f32.mxu0 0.0
        %v1376 = vand.u32 %v1304, 4294901760
        %v1377 = vsub.f32 %v1304, %v1376
        %v1378 = vand.u32 %v1377, 4294901760
        %v1379 = vsub.f32 %v1377, %v1378
        %v1380 = vand.u32 %v1379, 4294901760
        %1381 = vmatmul.mubr.f32.gmra.mxu0 %v1380
        %v1382 = vpop.f32.mrf.mxu0
        %v1383 = vadd.f32 0.0, %v1382
        %v1384 = vpop.f32.mrf.mxu0
        %1385 = vmatprep.mubr.f32.mxu0 0.0
        %v1386 = vand.u32 %v1307, 4294901760
        %v1387 = vsub.f32 %v1307, %v1386
        %v1388 = vand.u32 %v1387, 4294901760
        %v1389 = vsub.f32 %v1387, %v1388
        %v1390 = vand.u32 %v1389, 4294901760
        %1391 = vmatmul.mubr.f32.gmra.mxu0 %v1390
        %v1392 = vpop.f32.mrf.mxu0
        %v1393 = vadd.f32 0.0, %v1392
        %v1394 = vpop.f32.mrf.mxu0
        %1395 = vdwg.mxu0
        %1396 = vmatprep.subr.mxu0 0.0
        %1397 = vmatpush1.msra.mxu0 0.0
        %1398 = vmatprep.subr.mxu0 0.0
        %1399 = vmatpush1.msra.mxu0 0.0
        %1400 = vmatprep.subr.mxu0 0.0
        %1401 = vmatpush1.msra.mxu0 0.0
        %1402 = vmatprep.subr.mxu0 0.0
        %1403 = vmatpush1.msra.mxu0 0.0
        %1404 = vmatprep.subr.mxu0 0.0
        %1405 = vmatpush1.msra.mxu0 0.0
        %1406 = vmatprep.subr.mxu0 0.0
        %1407 = vmatpush1.msra.mxu0 0.0
        %1408 = vmatprep.subr.mxu0 0.0
        %1409 = vmatpush1.msra.mxu0 0.0
        %1410 = vmatprep.subr.mxu0 0.0
        %1411 = vmatpush1.msra.mxu0 0.0
        %1412 = vmatprep.subr.mxu0 0.0
        %1413 = vmatpush1.msra.mxu0 0.0
        %1414 = vmatprep.subr.mxu0 0.0
        %1415 = vmatpush1.msra.mxu0 0.0
        %1416 = vmatprep.subr.mxu0 0.0
        %1417 = vmatpush1.msra.mxu0 0.0
        %1418 = vmatprep.subr.mxu0 0.0
        %1419 = vmatpush1.msra.mxu0 0.0
        %1420 = vmatprep.subr.mxu0 0.0
        %1421 = vmatpush1.msra.mxu0 0.0
        %1422 = vmatprep.subr.mxu0 0.0
        %1423 = vmatpush1.msra.mxu0 0.0
        %1424 = vmatprep.subr.mxu0 0.0
        %v1425 = vand.u32 %v277, 4294901760
        %v1426 = vsub.f32 %v277, %v1425
        %v1427 = vand.u32 %v1426, 4294901760
        %v1428 = vsub.f32 %v1426, %v1427
        %v1429 = vand.u32 %v1428, 4294901760
        %1430 = vmatpush1.msra.mxu0 %v1429
        %1431 = vmatprep.subr.mxu0 0.0
        %v1432 = vand.u32 %v276, 4294901760
        %v1433 = vsub.f32 %v276, %v1432
        %v1434 = vand.u32 %v1433, 4294901760
        %v1435 = vsub.f32 %v1433, %v1434
        %v1436 = vand.u32 %v1435, 4294901760
        %1437 = vmatpush1.msra.mxu0 %v1436
        %1438 = vmatprep.subr.mxu0 0.0
        %1439 = vmatpush2.msra.mxu0 0.0
        %1440 = vmatprep.subr.mxu0 0.0
        %1441 = vmatpush2.msra.mxu0 0.0
        %1442 = vmatprep.subr.mxu0 0.0
        %1443 = vmatpush2.msra.mxu0 0.0
        %1444 = vmatprep.subr.mxu0 0.0
        %1445 = vmatpush2.msra.mxu0 0.0
        %1446 = vmatprep.subr.mxu0 0.0
        %1447 = vmatpush2.msra.mxu0 0.0
        %1448 = vmatprep.subr.mxu0 0.0
        %1449 = vmatpush2.msra.mxu0 0.0
        %1450 = vmatprep.subr.mxu0 0.0
        %1451 = vmatpush2.msra.mxu0 0.0
        %1452 = vmatprep.subr.mxu0 0.0
        %1453 = vmatpush2.msra.mxu0 0.0
        %1454 = vmatprep.subr.mxu0 0.0
        %1455 = vmatpush2.msra.mxu0 0.0
        %1456 = vmatprep.subr.mxu0 0.0
        %1457 = vmatpush2.msra.mxu0 0.0
        %1458 = vmatprep.subr.mxu0 0.0
        %1459 = vmatpush2.msra.mxu0 0.0
        %1460 = vmatprep.subr.mxu0 0.0
        %1461 = vmatpush2.msra.mxu0 0.0
        %1462 = vmatprep.subr.mxu0 0.0
        %1463 = vmatpush2.msra.mxu0 0.0
        %1464 = vmatprep.subr.mxu0 0.0
        %1465 = vmatpush2.msra.mxu0 0.0
        %1466 = vmatprep.subr.mxu0 0.0
        %1467 = vmatpush2.msra.mxu0 0.0
        %1468 = vmatprep.subr.mxu0 0.0
        %1469 = vmatpush2.msra.mxu0 0.0
        %1470 = vmatprep.mubr.f32.mxu0 0.0
        %v1471 = vand.u32 %v1304, 4294901760
        %1472 = vmatmul.mubr.f32.gmra.mxu0 %v1471
        %v1473 = vpop.f32.mrf.mxu0
        %v1474 = vadd.f32 %v1383, %v1473
        %v1475 = vpop.f32.mrf.mxu0
        %1476 = vmatprep.mubr.f32.mxu0 0.0
        %v1477 = vand.u32 %v1307, 4294901760
        %1478 = vmatmul.mubr.f32.gmra.mxu0 %v1477
        %v1479 = vpop.f32.mrf.mxu0
        %v1480 = vadd.f32 %v1393, %v1479
        %v1481 = vpop.f32.mrf.mxu0
        %1482 = vdwg.mxu0
        %1483 = vmatprep.subr.mxu0 0.0
        %1484 = vmatpush1.msra.mxu0 0.0
        %1485 = vmatprep.subr.mxu0 0.0
        %1486 = vmatpush1.msra.mxu0 0.0
        %1487 = vmatprep.subr.mxu0 0.0
        %1488 = vmatpush1.msra.mxu0 0.0
        %1489 = vmatprep.subr.mxu0 0.0
        %1490 = vmatpush1.msra.mxu0 0.0
        %1491 = vmatprep.subr.mxu0 0.0
        %1492 = vmatpush1.msra.mxu0 0.0
        %1493 = vmatprep.subr.mxu0 0.0
        %1494 = vmatpush1.msra.mxu0 0.0
        %1495 = vmatprep.subr.mxu0 0.0
        %1496 = vmatpush1.msra.mxu0 0.0
        %1497 = vmatprep.subr.mxu0 0.0
        %1498 = vmatpush1.msra.mxu0 0.0
        %1499 = vmatprep.subr.mxu0 0.0
        %1500 = vmatpush1.msra.mxu0 0.0
        %1501 = vmatprep.subr.mxu0 0.0
        %1502 = vmatpush1.msra.mxu0 0.0
        %1503 = vmatprep.subr.mxu0 0.0
        %1504 = vmatpush1.msra.mxu0 0.0
        %1505 = vmatprep.subr.mxu0 0.0
        %1506 = vmatpush1.msra.mxu0 0.0
        %1507 = vmatprep.subr.mxu0 0.0
        %1508 = vmatpush1.msra.mxu0 0.0
        %1509 = vmatprep.subr.mxu0 0.0
        %1510 = vmatpush1.msra.mxu0 0.0
        %1511 = vmatprep.subr.mxu0 0.0
        %v1512 = vand.u32 %v277, 4294901760
        %v1513 = vsub.f32 %v277, %v1512
        %1514 = vmatpush1.msra.mxu0 %v1513
        %1515 = vmatprep.subr.mxu0 0.0
        %v1516 = vand.u32 %v276, 4294901760
        %v1517 = vsub.f32 %v276, %v1516
        %1518 = vmatpush1.msra.mxu0 %v1517
        %1519 = vmatprep.subr.mxu0 0.0
        %1520 = vmatpush2.msra.mxu0 0.0
        %1521 = vmatprep.subr.mxu0 0.0
        %1522 = vmatpush2.msra.mxu0 0.0
        %1523 = vmatprep.subr.mxu0 0.0
        %1524 = vmatpush2.msra.mxu0 0.0
        %1525 = vmatprep.subr.mxu0 0.0
        %1526 = vmatpush2.msra.mxu0 0.0
        %1527 = vmatprep.subr.mxu0 0.0
        %1528 = vmatpush2.msra.mxu0 0.0
        %1529 = vmatprep.subr.mxu0 0.0
        %1530 = vmatpush2.msra.mxu0 0.0
        %1531 = vmatprep.subr.mxu0 0.0
        %1532 = vmatpush2.msra.mxu0 0.0
        %1533 = vmatprep.subr.mxu0 0.0
        %1534 = vmatpush2.msra.mxu0 0.0
        %1535 = vmatprep.subr.mxu0 0.0
        %1536 = vmatpush2.msra.mxu0 0.0
        %1537 = vmatprep.subr.mxu0 0.0
        %1538 = vmatpush2.msra.mxu0 0.0
        %1539 = vmatprep.subr.mxu0 0.0
        %1540 = vmatpush2.msra.mxu0 0.0
        %1541 = vmatprep.subr.mxu0 0.0
        %1542 = vmatpush2.msra.mxu0 0.0
        %1543 = vmatprep.subr.mxu0 0.0
        %1544 = vmatpush2.msra.mxu0 0.0
        %1545 = vmatprep.subr.mxu0 0.0
        %1546 = vmatpush2.msra.mxu0 0.0
        %1547 = vmatprep.subr.mxu0 0.0
        %1548 = vmatpush2.msra.mxu0 0.0
        %1549 = vmatprep.subr.mxu0 0.0
        %1550 = vmatpush2.msra.mxu0 0.0
        %1551 = vmatprep.mubr.f32.mxu0 0.0
        %v1552 = vand.u32 %v1304, 4294901760
        %v1553 = vsub.f32 %v1304, %v1552
        %1554 = vmatmul.mubr.f32.gmra.mxu0 %v1553
        %v1555 = vpop.f32.mrf.mxu0
        %v1556 = vadd.f32 %v1474, %v1555
        %v1557 = vpop.f32.mrf.mxu0
        %1558 = vmatprep.mubr.f32.mxu0 0.0
        %v1559 = vand.u32 %v1307, 4294901760
        %v1560 = vsub.f32 %v1307, %v1559
        %1561 = vmatmul.mubr.f32.gmra.mxu0 %v1560
        %v1562 = vpop.f32.mrf.mxu0
        %v1563 = vadd.f32 %v1480, %v1562
        %v1564 = vpop.f32.mrf.mxu0
        %1565 = vdwg.mxu0
        %1566 = vmatprep.subr.mxu0 0.0
        %1567 = vmatpush1.msra.mxu0 0.0
        %1568 = vmatprep.subr.mxu0 0.0
        %1569 = vmatpush1.msra.mxu0 0.0
        %1570 = vmatprep.subr.mxu0 0.0
        %1571 = vmatpush1.msra.mxu0 0.0
        %1572 = vmatprep.subr.mxu0 0.0
        %1573 = vmatpush1.msra.mxu0 0.0
        %1574 = vmatprep.subr.mxu0 0.0
        %1575 = vmatpush1.msra.mxu0 0.0
        %1576 = vmatprep.subr.mxu0 0.0
        %1577 = vmatpush1.msra.mxu0 0.0
        %1578 = vmatprep.subr.mxu0 0.0
        %1579 = vmatpush1.msra.mxu0 0.0
        %1580 = vmatprep.subr.mxu0 0.0
        %1581 = vmatpush1.msra.mxu0 0.0
        %1582 = vmatprep.subr.mxu0 0.0
        %1583 = vmatpush1.msra.mxu0 0.0
        %1584 = vmatprep.subr.mxu0 0.0
        %1585 = vmatpush1.msra.mxu0 0.0
        %1586 = vmatprep.subr.mxu0 0.0
        %1587 = vmatpush1.msra.mxu0 0.0
        %1588 = vmatprep.subr.mxu0 0.0
        %1589 = vmatpush1.msra.mxu0 0.0
        %1590 = vmatprep.subr.mxu0 0.0
        %1591 = vmatpush1.msra.mxu0 0.0
        %1592 = vmatprep.subr.mxu0 0.0
        %1593 = vmatpush1.msra.mxu0 0.0
        %1594 = vmatprep.subr.mxu0 0.0
        %v1595 = vand.u32 %v277, 4294901760
        %1596 = vmatpush1.msra.mxu0 %v1595
        %1597 = vmatprep.subr.mxu0 0.0
        %v1598 = vand.u32 %v276, 4294901760
        %1599 = vmatpush1.msra.mxu0 %v1598
        %1600 = vmatprep.subr.mxu0 0.0
        %1601 = vmatpush2.msra.mxu0 0.0
        %1602 = vmatprep.subr.mxu0 0.0
        %1603 = vmatpush2.msra.mxu0 0.0
        %1604 = vmatprep.subr.mxu0 0.0
        %1605 = vmatpush2.msra.mxu0 0.0
        %1606 = vmatprep.subr.mxu0 0.0
        %1607 = vmatpush2.msra.mxu0 0.0
        %1608 = vmatprep.subr.mxu0 0.0
        %1609 = vmatpush2.msra.mxu0 0.0
        %1610 = vmatprep.subr.mxu0 0.0
        %1611 = vmatpush2.msra.mxu0 0.0
        %1612 = vmatprep.subr.mxu0 0.0
        %1613 = vmatpush2.msra.mxu0 0.0
        %1614 = vmatprep.subr.mxu0 0.0
        %1615 = vmatpush2.msra.mxu0 0.0
        %1616 = vmatprep.subr.mxu0 0.0
        %1617 = vmatpush2.msra.mxu0 0.0
        %1618 = vmatprep.subr.mxu0 0.0
        %1619 = vmatpush2.msra.mxu0 0.0
        %1620 = vmatprep.subr.mxu0 0.0
        %1621 = vmatpush2.msra.mxu0 0.0
        %1622 = vmatprep.subr.mxu0 0.0
        %1623 = vmatpush2.msra.mxu0 0.0
        %1624 = vmatprep.subr.mxu0 0.0
        %1625 = vmatpush2.msra.mxu0 0.0
        %1626 = vmatprep.subr.mxu0 0.0
        %1627 = vmatpush2.msra.mxu0 0.0
        %1628 = vmatprep.subr.mxu0 0.0
        %1629 = vmatpush2.msra.mxu0 0.0
        %1630 = vmatprep.subr.mxu0 0.0
        %1631 = vmatpush2.msra.mxu0 0.0
        %1632 = vmatprep.mubr.f32.mxu0 0.0
        %v1633 = vand.u32 %v1304, 4294901760
        %v1634 = vsub.f32 %v1304, %v1633
        %v1635 = vand.u32 %v1634, 4294901760
        %1636 = vmatmul.mubr.f32.gmra.mxu0 %v1635
        %v1637 = vpop.f32.mrf.mxu0
        %v1638 = vadd.f32 %v1556, %v1637
        %v1639 = vpop.f32.mrf.mxu0
        %1640 = vmatprep.mubr.f32.mxu0 0.0
        %v1641 = vand.u32 %v1307, 4294901760
        %v1642 = vsub.f32 %v1307, %v1641
        %v1643 = vand.u32 %v1642, 4294901760
        %1644 = vmatmul.mubr.f32.gmra.mxu0 %v1643
        %v1645 = vpop.f32.mrf.mxu0
        %v1646 = vadd.f32 %v1563, %v1645
        %v1647 = vpop.f32.mrf.mxu0
        %1648 = vdwg.mxu0
        %1649 = vmatprep.subr.mxu0 0.0
        %1650 = vmatpush1.msra.mxu0 0.0
        %1651 = vmatprep.subr.mxu0 0.0
        %1652 = vmatpush1.msra.mxu0 0.0
        %1653 = vmatprep.subr.mxu0 0.0
        %1654 = vmatpush1.msra.mxu0 0.0
        %1655 = vmatprep.subr.mxu0 0.0
        %1656 = vmatpush1.msra.mxu0 0.0
        %1657 = vmatprep.subr.mxu0 0.0
        %1658 = vmatpush1.msra.mxu0 0.0
        %1659 = vmatprep.subr.mxu0 0.0
        %1660 = vmatpush1.msra.mxu0 0.0
        %1661 = vmatprep.subr.mxu0 0.0
        %1662 = vmatpush1.msra.mxu0 0.0
        %1663 = vmatprep.subr.mxu0 0.0
        %1664 = vmatpush1.msra.mxu0 0.0
        %1665 = vmatprep.subr.mxu0 0.0
        %1666 = vmatpush1.msra.mxu0 0.0
        %1667 = vmatprep.subr.mxu0 0.0
        %1668 = vmatpush1.msra.mxu0 0.0
        %1669 = vmatprep.subr.mxu0 0.0
        %1670 = vmatpush1.msra.mxu0 0.0
        %1671 = vmatprep.subr.mxu0 0.0
        %1672 = vmatpush1.msra.mxu0 0.0
        %1673 = vmatprep.subr.mxu0 0.0
        %1674 = vmatpush1.msra.mxu0 0.0
        %1675 = vmatprep.subr.mxu0 0.0
        %1676 = vmatpush1.msra.mxu0 0.0
        %1677 = vmatprep.subr.mxu0 0.0
        %v1678 = vand.u32 %v277, 4294901760
        %v1679 = vsub.f32 %v277, %v1678
        %v1680 = vand.u32 %v1679, 4294901760
        %1681 = vmatpush1.msra.mxu0 %v1680
        %1682 = vmatprep.subr.mxu0 0.0
        %v1683 = vand.u32 %v276, 4294901760
        %v1684 = vsub.f32 %v276, %v1683
        %v1685 = vand.u32 %v1684, 4294901760
        %1686 = vmatpush1.msra.mxu0 %v1685
        %1687 = vmatprep.subr.mxu0 0.0
        %1688 = vmatpush2.msra.mxu0 0.0
        %1689 = vmatprep.subr.mxu0 0.0
        %1690 = vmatpush2.msra.mxu0 0.0
        %1691 = vmatprep.subr.mxu0 0.0
        %1692 = vmatpush2.msra.mxu0 0.0
        %1693 = vmatprep.subr.mxu0 0.0
        %1694 = vmatpush2.msra.mxu0 0.0
        %1695 = vmatprep.subr.mxu0 0.0
        %1696 = vmatpush2.msra.mxu0 0.0
        %1697 = vmatprep.subr.mxu0 0.0
        %1698 = vmatpush2.msra.mxu0 0.0
        %1699 = vmatprep.subr.mxu0 0.0
        %1700 = vmatpush2.msra.mxu0 0.0
        %1701 = vmatprep.subr.mxu0 0.0
        %1702 = vmatpush2.msra.mxu0 0.0
        %1703 = vmatprep.subr.mxu0 0.0
        %1704 = vmatpush2.msra.mxu0 0.0
        %1705 = vmatprep.subr.mxu0 0.0
        %1706 = vmatpush2.msra.mxu0 0.0
        %1707 = vmatprep.subr.mxu0 0.0
        %1708 = vmatpush2.msra.mxu0 0.0
        %1709 = vmatprep.subr.mxu0 0.0
        %1710 = vmatpush2.msra.mxu0 0.0
        %1711 = vmatprep.subr.mxu0 0.0
        %1712 = vmatpush2.msra.mxu0 0.0
        %1713 = vmatprep.subr.mxu0 0.0
        %1714 = vmatpush2.msra.mxu0 0.0
        %1715 = vmatprep.subr.mxu0 0.0
        %1716 = vmatpush2.msra.mxu0 0.0
        %1717 = vmatprep.subr.mxu0 0.0
        %1718 = vmatpush2.msra.mxu0 0.0
        %1719 = vmatprep.mubr.f32.mxu0 0.0
        %v1720 = vand.u32 %v1304, 4294901760
        %1721 = vmatmul.mubr.f32.gmra.mxu0 %v1720
        %v1722 = vpop.f32.mrf.mxu0
        %v1723 = vadd.f32 %v1638, %v1722
        %v1724 = vpop.f32.mrf.mxu0
        %1725 = vmatprep.mubr.f32.mxu0 0.0
        %v1726 = vand.u32 %v1307, 4294901760
        %1727 = vmatmul.mubr.f32.gmra.mxu0 %v1726
        %v1728 = vpop.f32.mrf.mxu0
        %v1729 = vadd.f32 %v1646, %v1728
        %v1730 = vpop.f32.mrf.mxu0
        %1731 = vdwg.mxu0
        %1732 = vmatprep.subr.mxu0 0.0
        %1733 = vmatpush1.msra.mxu0 0.0
        %1734 = vmatprep.subr.mxu0 0.0
        %1735 = vmatpush1.msra.mxu0 0.0
        %1736 = vmatprep.subr.mxu0 0.0
        %1737 = vmatpush1.msra.mxu0 0.0
        %1738 = vmatprep.subr.mxu0 0.0
        %1739 = vmatpush1.msra.mxu0 0.0
        %1740 = vmatprep.subr.mxu0 0.0
        %1741 = vmatpush1.msra.mxu0 0.0
        %1742 = vmatprep.subr.mxu0 0.0
        %1743 = vmatpush1.msra.mxu0 0.0
        %1744 = vmatprep.subr.mxu0 0.0
        %1745 = vmatpush1.msra.mxu0 0.0
        %1746 = vmatprep.subr.mxu0 0.0
        %1747 = vmatpush1.msra.mxu0 0.0
        %1748 = vmatprep.subr.mxu0 0.0
        %1749 = vmatpush1.msra.mxu0 0.0
        %1750 = vmatprep.subr.mxu0 0.0
        %1751 = vmatpush1.msra.mxu0 0.0
        %1752 = vmatprep.subr.mxu0 0.0
        %1753 = vmatpush1.msra.mxu0 0.0
        %1754 = vmatprep.subr.mxu0 0.0
        %1755 = vmatpush1.msra.mxu0 0.0
        %1756 = vmatprep.subr.mxu0 0.0
        %1757 = vmatpush1.msra.mxu0 0.0
        %1758 = vmatprep.subr.mxu0 0.0
        %1759 = vmatpush1.msra.mxu0 0.0
        %1760 = vmatprep.subr.mxu0 0.0
        %v1761 = vand.u32 %v277, 4294901760
        %1762 = vmatpush1.msra.mxu0 %v1761
        %1763 = vmatprep.subr.mxu0 0.0
        %v1764 = vand.u32 %v276, 4294901760
        %1765 = vmatpush1.msra.mxu0 %v1764
        %1766 = vmatprep.subr.mxu0 0.0
        %1767 = vmatpush2.msra.mxu0 0.0
        %1768 = vmatprep.subr.mxu0 0.0
        %1769 = vmatpush2.msra.mxu0 0.0
        %1770 = vmatprep.subr.mxu0 0.0
        %1771 = vmatpush2.msra.mxu0 0.0
        %1772 = vmatprep.subr.mxu0 0.0
        %1773 = vmatpush2.msra.mxu0 0.0
        %1774 = vmatprep.subr.mxu0 0.0
        %1775 = vmatpush2.msra.mxu0 0.0
        %1776 = vmatprep.subr.mxu0 0.0
        %1777 = vmatpush2.msra.mxu0 0.0
        %1778 = vmatprep.subr.mxu0 0.0
        %1779 = vmatpush2.msra.mxu0 0.0
        %1780 = vmatprep.subr.mxu0 0.0
        %1781 = vmatpush2.msra.mxu0 0.0
        %1782 = vmatprep.subr.mxu0 0.0
        %1783 = vmatpush2.msra.mxu0 0.0
        %1784 = vmatprep.subr.mxu0 0.0
        %1785 = vmatpush2.msra.mxu0 0.0
        %1786 = vmatprep.subr.mxu0 0.0
        %1787 = vmatpush2.msra.mxu0 0.0
        %1788 = vmatprep.subr.mxu0 0.0
        %1789 = vmatpush2.msra.mxu0 0.0
        %1790 = vmatprep.subr.mxu0 0.0
        %1791 = vmatpush2.msra.mxu0 0.0
        %1792 = vmatprep.subr.mxu0 0.0
        %1793 = vmatpush2.msra.mxu0 0.0
        %1794 = vmatprep.subr.mxu0 0.0
        %1795 = vmatpush2.msra.mxu0 0.0
        %1796 = vmatprep.subr.mxu0 0.0
        %1797 = vmatpush2.msra.mxu0 0.0
        %1798 = vmatprep.mubr.f32.mxu0 0.0
        %v1799 = vand.u32 %v1304, 4294901760
        %1800 = vmatmul.mubr.f32.gmra.mxu0 %v1799
        %v1801 = vpop.f32.mrf.mxu0
        %v1802 = vadd.f32 %v1723, %v1801
        %v1803 = vpop.f32.mrf.mxu0
        %1804 = vmatprep.mubr.f32.mxu0 0.0
        %v1805 = vand.u32 %v1307, 4294901760
        %1806 = vmatmul.mubr.f32.gmra.mxu0 %v1805
        %v1807 = vpop.f32.mrf.mxu0
        %v1808 = vadd.f32 %v1729, %v1807
        %v1809 = vpop.f32.mrf.mxu0
        %1810 = vdwg.mxu0
        %v1812 = vsel %vm286, %v263, 0
        %v1815 = vsel %vm286, %v264, 0
        %1817 = vmatprep.subr.mxu0 0.0
        %1818 = vmatpush1.msra.mxu0 0.0
        %1819 = vmatprep.subr.mxu0 0.0
        %1820 = vmatpush1.msra.mxu0 0.0
        %1821 = vmatprep.subr.mxu0 0.0
        %1822 = vmatpush1.msra.mxu0 0.0
        %1823 = vmatprep.subr.mxu0 0.0
        %1824 = vmatpush1.msra.mxu0 0.0
        %1825 = vmatprep.subr.mxu0 0.0
        %1826 = vmatpush1.msra.mxu0 0.0
        %1827 = vmatprep.subr.mxu0 0.0
        %1828 = vmatpush1.msra.mxu0 0.0
        %1829 = vmatprep.subr.mxu0 0.0
        %1830 = vmatpush1.msra.mxu0 0.0
        %1831 = vmatprep.subr.mxu0 0.0
        %1832 = vmatpush1.msra.mxu0 0.0
        %1833 = vmatprep.subr.mxu0 0.0
        %1834 = vmatpush1.msra.mxu0 0.0
        %1835 = vmatprep.subr.mxu0 0.0
        %1836 = vmatpush1.msra.mxu0 0.0
        %1837 = vmatprep.subr.mxu0 0.0
        %1838 = vmatpush1.msra.mxu0 0.0
        %1839 = vmatprep.subr.mxu0 0.0
        %1840 = vmatpush1.msra.mxu0 0.0
        %1841 = vmatprep.subr.mxu0 0.0
        %1842 = vmatpush1.msra.mxu0 0.0
        %1843 = vmatprep.subr.mxu0 0.0
        %1844 = vmatpush1.msra.mxu0 0.0
        %1845 = vmatprep.subr.mxu0 0.0
        %v1846 = vand.u32 %v275, 4294901760
        %1847 = vmatpush1.msra.mxu0 %v1846
        %1848 = vmatprep.subr.mxu0 0.0
        %v1849 = vand.u32 %v274, 4294901760
        %1850 = vmatpush1.msra.mxu0 %v1849
        %1851 = vmatprep.subr.mxu0 0.0
        %1852 = vmatpush2.msra.mxu0 0.0
        %1853 = vmatprep.subr.mxu0 0.0
        %1854 = vmatpush2.msra.mxu0 0.0
        %1855 = vmatprep.subr.mxu0 0.0
        %1856 = vmatpush2.msra.mxu0 0.0
        %1857 = vmatprep.subr.mxu0 0.0
        %1858 = vmatpush2.msra.mxu0 0.0
        %1859 = vmatprep.subr.mxu0 0.0
        %1860 = vmatpush2.msra.mxu0 0.0
        %1861 = vmatprep.subr.mxu0 0.0
        %1862 = vmatpush2.msra.mxu0 0.0
        %1863 = vmatprep.subr.mxu0 0.0
        %1864 = vmatpush2.msra.mxu0 0.0
        %1865 = vmatprep.subr.mxu0 0.0
        %1866 = vmatpush2.msra.mxu0 0.0
        %1867 = vmatprep.subr.mxu0 0.0
        %1868 = vmatpush2.msra.mxu0 0.0
        %1869 = vmatprep.subr.mxu0 0.0
        %1870 = vmatpush2.msra.mxu0 0.0
        %1871 = vmatprep.subr.mxu0 0.0
        %1872 = vmatpush2.msra.mxu0 0.0
        %1873 = vmatprep.subr.mxu0 0.0
        %1874 = vmatpush2.msra.mxu0 0.0
        %1875 = vmatprep.subr.mxu0 0.0
        %1876 = vmatpush2.msra.mxu0 0.0
        %1877 = vmatprep.subr.mxu0 0.0
        %1878 = vmatpush2.msra.mxu0 0.0
        %1879 = vmatprep.subr.mxu0 0.0
        %1880 = vmatpush2.msra.mxu0 0.0
        %1881 = vmatprep.subr.mxu0 0.0
        %1882 = vmatpush2.msra.mxu0 0.0
        %1883 = vmatprep.mubr.f32.mxu0 0.0
        %v1884 = vand.u32 %v1812, 4294901760
        %v1885 = vsub.f32 %v1812, %v1884
        %v1886 = vand.u32 %v1885, 4294901760
        %v1887 = vsub.f32 %v1885, %v1886
        %v1888 = vand.u32 %v1887, 4294901760
        %1889 = vmatmul.mubr.f32.gmra.mxu0 %v1888
        %v1890 = vpop.f32.mrf.mxu0
        %v1891 = vadd.f32 %v1294, %v1890
        %v1892 = vpop.f32.mrf.mxu0
        %1893 = vmatprep.mubr.f32.mxu0 0.0
        %v1894 = vand.u32 %v1815, 4294901760
        %v1895 = vsub.f32 %v1815, %v1894
        %v1896 = vand.u32 %v1895, 4294901760
        %v1897 = vsub.f32 %v1895, %v1896
        %v1898 = vand.u32 %v1897, 4294901760
        %1899 = vmatmul.mubr.f32.gmra.mxu0 %v1898
        %v1900 = vpop.f32.mrf.mxu0
        %v1901 = vadd.f32 %v1300, %v1900
        %v1902 = vpop.f32.mrf.mxu0
        %1903 = vdwg.mxu0
        %1904 = vmatprep.subr.mxu0 0.0
        %1905 = vmatpush1.msra.mxu0 0.0
        %1906 = vmatprep.subr.mxu0 0.0
        %1907 = vmatpush1.msra.mxu0 0.0
        %1908 = vmatprep.subr.mxu0 0.0
        %1909 = vmatpush1.msra.mxu0 0.0
        %1910 = vmatprep.subr.mxu0 0.0
        %1911 = vmatpush1.msra.mxu0 0.0
        %1912 = vmatprep.subr.mxu0 0.0
        %1913 = vmatpush1.msra.mxu0 0.0
        %1914 = vmatprep.subr.mxu0 0.0
        %1915 = vmatpush1.msra.mxu0 0.0
        %1916 = vmatprep.subr.mxu0 0.0
        %1917 = vmatpush1.msra.mxu0 0.0
        %1918 = vmatprep.subr.mxu0 0.0
        %1919 = vmatpush1.msra.mxu0 0.0
        %1920 = vmatprep.subr.mxu0 0.0
        %1921 = vmatpush1.msra.mxu0 0.0
        %1922 = vmatprep.subr.mxu0 0.0
        %1923 = vmatpush1.msra.mxu0 0.0
        %1924 = vmatprep.subr.mxu0 0.0
        %1925 = vmatpush1.msra.mxu0 0.0
        %1926 = vmatprep.subr.mxu0 0.0
        %1927 = vmatpush1.msra.mxu0 0.0
        %1928 = vmatprep.subr.mxu0 0.0
        %1929 = vmatpush1.msra.mxu0 0.0
        %1930 = vmatprep.subr.mxu0 0.0
        %1931 = vmatpush1.msra.mxu0 0.0
        %1932 = vmatprep.subr.mxu0 0.0
        %v1933 = vand.u32 %v275, 4294901760
        %v1934 = vsub.f32 %v275, %v1933
        %v1935 = vand.u32 %v1934, 4294901760
        %v1936 = vsub.f32 %v1934, %v1935
        %v1937 = vand.u32 %v1936, 4294901760
        %1938 = vmatpush1.msra.mxu0 %v1937
        %1939 = vmatprep.subr.mxu0 0.0
        %v1940 = vand.u32 %v274, 4294901760
        %v1941 = vsub.f32 %v274, %v1940
        %v1942 = vand.u32 %v1941, 4294901760
        %v1943 = vsub.f32 %v1941, %v1942
        %v1944 = vand.u32 %v1943, 4294901760
        %1945 = vmatpush1.msra.mxu0 %v1944
        %1946 = vmatprep.subr.mxu0 0.0
        %1947 = vmatpush2.msra.mxu0 0.0
        %1948 = vmatprep.subr.mxu0 0.0
        %1949 = vmatpush2.msra.mxu0 0.0
        %1950 = vmatprep.subr.mxu0 0.0
        %1951 = vmatpush2.msra.mxu0 0.0
        %1952 = vmatprep.subr.mxu0 0.0
        %1953 = vmatpush2.msra.mxu0 0.0
        %1954 = vmatprep.subr.mxu0 0.0
        %1955 = vmatpush2.msra.mxu0 0.0
        %1956 = vmatprep.subr.mxu0 0.0
        %1957 = vmatpush2.msra.mxu0 0.0
        %1958 = vmatprep.subr.mxu0 0.0
        %1959 = vmatpush2.msra.mxu0 0.0
        %1960 = vmatprep.subr.mxu0 0.0
        %1961 = vmatpush2.msra.mxu0 0.0
        %1962 = vmatprep.subr.mxu0 0.0
        %1963 = vmatpush2.msra.mxu0 0.0
        %1964 = vmatprep.subr.mxu0 0.0
        %1965 = vmatpush2.msra.mxu0 0.0
        %1966 = vmatprep.subr.mxu0 0.0
        %1967 = vmatpush2.msra.mxu0 0.0
        %1968 = vmatprep.subr.mxu0 0.0
        %1969 = vmatpush2.msra.mxu0 0.0
        %1970 = vmatprep.subr.mxu0 0.0
        %1971 = vmatpush2.msra.mxu0 0.0
        %1972 = vmatprep.subr.mxu0 0.0
        %1973 = vmatpush2.msra.mxu0 0.0
        %1974 = vmatprep.subr.mxu0 0.0
        %1975 = vmatpush2.msra.mxu0 0.0
        %1976 = vmatprep.subr.mxu0 0.0
        %1977 = vmatpush2.msra.mxu0 0.0
        %1978 = vmatprep.mubr.f32.mxu0 0.0
        %v1979 = vand.u32 %v1812, 4294901760
        %1980 = vmatmul.mubr.f32.gmra.mxu0 %v1979
        %v1981 = vpop.f32.mrf.mxu0
        %v1982 = vadd.f32 %v1891, %v1981
        %v1983 = vpop.f32.mrf.mxu0
        %1984 = vmatprep.mubr.f32.mxu0 0.0
        %v1985 = vand.u32 %v1815, 4294901760
        %1986 = vmatmul.mubr.f32.gmra.mxu0 %v1985
        %v1987 = vpop.f32.mrf.mxu0
        %v1988 = vadd.f32 %v1901, %v1987
        %v1989 = vpop.f32.mrf.mxu0
        %1990 = vdwg.mxu0
        %1991 = vmatprep.subr.mxu0 0.0
        %1992 = vmatpush1.msra.mxu0 0.0
        %1993 = vmatprep.subr.mxu0 0.0
        %1994 = vmatpush1.msra.mxu0 0.0
        %1995 = vmatprep.subr.mxu0 0.0
        %1996 = vmatpush1.msra.mxu0 0.0
        %1997 = vmatprep.subr.mxu0 0.0
        %1998 = vmatpush1.msra.mxu0 0.0
        %1999 = vmatprep.subr.mxu0 0.0
        %2000 = vmatpush1.msra.mxu0 0.0
        %2001 = vmatprep.subr.mxu0 0.0
        %2002 = vmatpush1.msra.mxu0 0.0
        %2003 = vmatprep.subr.mxu0 0.0
        %2004 = vmatpush1.msra.mxu0 0.0
        %2005 = vmatprep.subr.mxu0 0.0
        %2006 = vmatpush1.msra.mxu0 0.0
        %2007 = vmatprep.subr.mxu0 0.0
        %2008 = vmatpush1.msra.mxu0 0.0
        %2009 = vmatprep.subr.mxu0 0.0
        %2010 = vmatpush1.msra.mxu0 0.0
        %2011 = vmatprep.subr.mxu0 0.0
        %2012 = vmatpush1.msra.mxu0 0.0
        %2013 = vmatprep.subr.mxu0 0.0
        %2014 = vmatpush1.msra.mxu0 0.0
        %2015 = vmatprep.subr.mxu0 0.0
        %2016 = vmatpush1.msra.mxu0 0.0
        %2017 = vmatprep.subr.mxu0 0.0
        %2018 = vmatpush1.msra.mxu0 0.0
        %2019 = vmatprep.subr.mxu0 0.0
        %v2020 = vand.u32 %v275, 4294901760
        %v2021 = vsub.f32 %v275, %v2020
        %2022 = vmatpush1.msra.mxu0 %v2021
        %2023 = vmatprep.subr.mxu0 0.0
        %v2024 = vand.u32 %v274, 4294901760
        %v2025 = vsub.f32 %v274, %v2024
        %2026 = vmatpush1.msra.mxu0 %v2025
        %2027 = vmatprep.subr.mxu0 0.0
        %2028 = vmatpush2.msra.mxu0 0.0
        %2029 = vmatprep.subr.mxu0 0.0
        %2030 = vmatpush2.msra.mxu0 0.0
        %2031 = vmatprep.subr.mxu0 0.0
        %2032 = vmatpush2.msra.mxu0 0.0
        %2033 = vmatprep.subr.mxu0 0.0
        %2034 = vmatpush2.msra.mxu0 0.0
        %2035 = vmatprep.subr.mxu0 0.0
        %2036 = vmatpush2.msra.mxu0 0.0
        %2037 = vmatprep.subr.mxu0 0.0
        %2038 = vmatpush2.msra.mxu0 0.0
        %2039 = vmatprep.subr.mxu0 0.0
        %2040 = vmatpush2.msra.mxu0 0.0
        %2041 = vmatprep.subr.mxu0 0.0
        %2042 = vmatpush2.msra.mxu0 0.0
        %2043 = vmatprep.subr.mxu0 0.0
        %2044 = vmatpush2.msra.mxu0 0.0
        %2045 = vmatprep.subr.mxu0 0.0
        %2046 = vmatpush2.msra.mxu0 0.0
        %2047 = vmatprep.subr.mxu0 0.0
        %2048 = vmatpush2.msra.mxu0 0.0
        %2049 = vmatprep.subr.mxu0 0.0
        %2050 = vmatpush2.msra.mxu0 0.0
        %2051 = vmatprep.subr.mxu0 0.0
        %2052 = vmatpush2.msra.mxu0 0.0
        %2053 = vmatprep.subr.mxu0 0.0
        %2054 = vmatpush2.msra.mxu0 0.0
        %2055 = vmatprep.subr.mxu0 0.0
        %2056 = vmatpush2.msra.mxu0 0.0
        %2057 = vmatprep.subr.mxu0 0.0
        %2058 = vmatpush2.msra.mxu0 0.0
        %2059 = vmatprep.mubr.f32.mxu0 0.0
        %v2060 = vand.u32 %v1812, 4294901760
        %v2061 = vsub.f32 %v1812, %v2060
        %2062 = vmatmul.mubr.f32.gmra.mxu0 %v2061
        %v2063 = vpop.f32.mrf.mxu0
        %v2064 = vadd.f32 %v1982, %v2063
        %v2065 = vpop.f32.mrf.mxu0
        %2066 = vmatprep.mubr.f32.mxu0 0.0
        %v2067 = vand.u32 %v1815, 4294901760
        %v2068 = vsub.f32 %v1815, %v2067
        %2069 = vmatmul.mubr.f32.gmra.mxu0 %v2068
        %v2070 = vpop.f32.mrf.mxu0
        %v2071 = vadd.f32 %v1988, %v2070
        %v2072 = vpop.f32.mrf.mxu0
        %2073 = vdwg.mxu0
        %2074 = vmatprep.subr.mxu0 0.0
        %2075 = vmatpush1.msra.mxu0 0.0
        %2076 = vmatprep.subr.mxu0 0.0
        %2077 = vmatpush1.msra.mxu0 0.0
        %2078 = vmatprep.subr.mxu0 0.0
        %2079 = vmatpush1.msra.mxu0 0.0
        %2080 = vmatprep.subr.mxu0 0.0
        %2081 = vmatpush1.msra.mxu0 0.0
        %2082 = vmatprep.subr.mxu0 0.0
        %2083 = vmatpush1.msra.mxu0 0.0
        %2084 = vmatprep.subr.mxu0 0.0
        %2085 = vmatpush1.msra.mxu0 0.0
        %2086 = vmatprep.subr.mxu0 0.0
        %2087 = vmatpush1.msra.mxu0 0.0
        %2088 = vmatprep.subr.mxu0 0.0
        %2089 = vmatpush1.msra.mxu0 0.0
        %2090 = vmatprep.subr.mxu0 0.0
        %2091 = vmatpush1.msra.mxu0 0.0
        %2092 = vmatprep.subr.mxu0 0.0
        %2093 = vmatpush1.msra.mxu0 0.0
        %2094 = vmatprep.subr.mxu0 0.0
        %2095 = vmatpush1.msra.mxu0 0.0
        %2096 = vmatprep.subr.mxu0 0.0
        %2097 = vmatpush1.msra.mxu0 0.0
        %2098 = vmatprep.subr.mxu0 0.0
        %2099 = vmatpush1.msra.mxu0 0.0
        %2100 = vmatprep.subr.mxu0 0.0
        %2101 = vmatpush1.msra.mxu0 0.0
        %2102 = vmatprep.subr.mxu0 0.0
        %v2103 = vand.u32 %v275, 4294901760
        %2104 = vmatpush1.msra.mxu0 %v2103
        %2105 = vmatprep.subr.mxu0 0.0
        %v2106 = vand.u32 %v274, 4294901760
        %2107 = vmatpush1.msra.mxu0 %v2106
        %2108 = vmatprep.subr.mxu0 0.0
        %2109 = vmatpush2.msra.mxu0 0.0
        %2110 = vmatprep.subr.mxu0 0.0
        %2111 = vmatpush2.msra.mxu0 0.0
        %2112 = vmatprep.subr.mxu0 0.0
        %2113 = vmatpush2.msra.mxu0 0.0
        %2114 = vmatprep.subr.mxu0 0.0
        %2115 = vmatpush2.msra.mxu0 0.0
        %2116 = vmatprep.subr.mxu0 0.0
        %2117 = vmatpush2.msra.mxu0 0.0
        %2118 = vmatprep.subr.mxu0 0.0
        %2119 = vmatpush2.msra.mxu0 0.0
        %2120 = vmatprep.subr.mxu0 0.0
        %2121 = vmatpush2.msra.mxu0 0.0
        %2122 = vmatprep.subr.mxu0 0.0
        %2123 = vmatpush2.msra.mxu0 0.0
        %2124 = vmatprep.subr.mxu0 0.0
        %2125 = vmatpush2.msra.mxu0 0.0
        %2126 = vmatprep.subr.mxu0 0.0
        %2127 = vmatpush2.msra.mxu0 0.0
        %2128 = vmatprep.subr.mxu0 0.0
        %2129 = vmatpush2.msra.mxu0 0.0
        %2130 = vmatprep.subr.mxu0 0.0
        %2131 = vmatpush2.msra.mxu0 0.0
        %2132 = vmatprep.subr.mxu0 0.0
        %2133 = vmatpush2.msra.mxu0 0.0
        %2134 = vmatprep.subr.mxu0 0.0
        %2135 = vmatpush2.msra.mxu0 0.0
        %2136 = vmatprep.subr.mxu0 0.0
        %2137 = vmatpush2.msra.mxu0 0.0
        %2138 = vmatprep.subr.mxu0 0.0
        %2139 = vmatpush2.msra.mxu0 0.0
        %2140 = vmatprep.mubr.f32.mxu0 0.0
        %v2141 = vand.u32 %v1812, 4294901760
        %v2142 = vsub.f32 %v1812, %v2141
        %v2143 = vand.u32 %v2142, 4294901760
        %2144 = vmatmul.mubr.f32.gmra.mxu0 %v2143
        %v2145 = vpop.f32.mrf.mxu0
        %v2146 = vadd.f32 %v2064, %v2145
        %v2147 = vpop.f32.mrf.mxu0
        %2148 = vmatprep.mubr.f32.mxu0 0.0
        %v2149 = vand.u32 %v1815, 4294901760
        %v2150 = vsub.f32 %v1815, %v2149
        %v2151 = vand.u32 %v2150, 4294901760
        %2152 = vmatmul.mubr.f32.gmra.mxu0 %v2151
        %v2153 = vpop.f32.mrf.mxu0
        %v2154 = vadd.f32 %v2071, %v2153
        %v2155 = vpop.f32.mrf.mxu0
        %2156 = vdwg.mxu0
        %2157 = vmatprep.subr.mxu0 0.0
        %2158 = vmatpush1.msra.mxu0 0.0
        %2159 = vmatprep.subr.mxu0 0.0
        %2160 = vmatpush1.msra.mxu0 0.0
        %2161 = vmatprep.subr.mxu0 0.0
        %2162 = vmatpush1.msra.mxu0 0.0
        %2163 = vmatprep.subr.mxu0 0.0
        %2164 = vmatpush1.msra.mxu0 0.0
        %2165 = vmatprep.subr.mxu0 0.0
        %2166 = vmatpush1.msra.mxu0 0.0
        %2167 = vmatprep.subr.mxu0 0.0
        %2168 = vmatpush1.msra.mxu0 0.0
        %2169 = vmatprep.subr.mxu0 0.0
        %2170 = vmatpush1.msra.mxu0 0.0
        %2171 = vmatprep.subr.mxu0 0.0
        %2172 = vmatpush1.msra.mxu0 0.0
        %2173 = vmatprep.subr.mxu0 0.0
        %2174 = vmatpush1.msra.mxu0 0.0
        %2175 = vmatprep.subr.mxu0 0.0
        %2176 = vmatpush1.msra.mxu0 0.0
        %2177 = vmatprep.subr.mxu0 0.0
        %2178 = vmatpush1.msra.mxu0 0.0
        %2179 = vmatprep.subr.mxu0 0.0
        %2180 = vmatpush1.msra.mxu0 0.0
        %2181 = vmatprep.subr.mxu0 0.0
        %2182 = vmatpush1.msra.mxu0 0.0
        %2183 = vmatprep.subr.mxu0 0.0
        %2184 = vmatpush1.msra.mxu0 0.0
        %2185 = vmatprep.subr.mxu0 0.0
        %v2186 = vand.u32 %v275, 4294901760
        %v2187 = vsub.f32 %v275, %v2186
        %v2188 = vand.u32 %v2187, 4294901760
        %2189 = vmatpush1.msra.mxu0 %v2188
        %2190 = vmatprep.subr.mxu0 0.0
        %v2191 = vand.u32 %v274, 4294901760
        %v2192 = vsub.f32 %v274, %v2191
        %v2193 = vand.u32 %v2192, 4294901760
        %2194 = vmatpush1.msra.mxu0 %v2193
        %2195 = vmatprep.subr.mxu0 0.0
        %2196 = vmatpush2.msra.mxu0 0.0
        %2197 = vmatprep.subr.mxu0 0.0
        %2198 = vmatpush2.msra.mxu0 0.0
        %2199 = vmatprep.subr.mxu0 0.0
        %2200 = vmatpush2.msra.mxu0 0.0
        %2201 = vmatprep.subr.mxu0 0.0
        %2202 = vmatpush2.msra.mxu0 0.0
        %2203 = vmatprep.subr.mxu0 0.0
        %2204 = vmatpush2.msra.mxu0 0.0
        %2205 = vmatprep.subr.mxu0 0.0
        %2206 = vmatpush2.msra.mxu0 0.0
        %2207 = vmatprep.subr.mxu0 0.0
        %2208 = vmatpush2.msra.mxu0 0.0
        %2209 = vmatprep.subr.mxu0 0.0
        %2210 = vmatpush2.msra.mxu0 0.0
        %2211 = vmatprep.subr.mxu0 0.0
        %2212 = vmatpush2.msra.mxu0 0.0
        %2213 = vmatprep.subr.mxu0 0.0
        %2214 = vmatpush2.msra.mxu0 0.0
        %2215 = vmatprep.subr.mxu0 0.0
        %2216 = vmatpush2.msra.mxu0 0.0
        %2217 = vmatprep.subr.mxu0 0.0
        %2218 = vmatpush2.msra.mxu0 0.0
        %2219 = vmatprep.subr.mxu0 0.0
        %2220 = vmatpush2.msra.mxu0 0.0
        %2221 = vmatprep.subr.mxu0 0.0
        %2222 = vmatpush2.msra.mxu0 0.0
        %2223 = vmatprep.subr.mxu0 0.0
        %2224 = vmatpush2.msra.mxu0 0.0
        %2225 = vmatprep.subr.mxu0 0.0
        %2226 = vmatpush2.msra.mxu0 0.0
        %2227 = vmatprep.mubr.f32.mxu0 0.0
        %v2228 = vand.u32 %v1812, 4294901760
        %2229 = vmatmul.mubr.f32.gmra.mxu0 %v2228
        %v2230 = vpop.f32.mrf.mxu0
        %v2231 = vadd.f32 %v2146, %v2230
        %v2232 = vpop.f32.mrf.mxu0
        %2233 = vmatprep.mubr.f32.mxu0 0.0
        %v2234 = vand.u32 %v1815, 4294901760
        %2235 = vmatmul.mubr.f32.gmra.mxu0 %v2234
        %v2236 = vpop.f32.mrf.mxu0
        %v2237 = vadd.f32 %v2154, %v2236
        %v2238 = vpop.f32.mrf.mxu0
        %2239 = vdwg.mxu0
        %2240 = vmatprep.subr.mxu0 0.0
        %2241 = vmatpush1.msra.mxu0 0.0
        %2242 = vmatprep.subr.mxu0 0.0
        %2243 = vmatpush1.msra.mxu0 0.0
        %2244 = vmatprep.subr.mxu0 0.0
        %2245 = vmatpush1.msra.mxu0 0.0
        %2246 = vmatprep.subr.mxu0 0.0
        %2247 = vmatpush1.msra.mxu0 0.0
        %2248 = vmatprep.subr.mxu0 0.0
        %2249 = vmatpush1.msra.mxu0 0.0
        %2250 = vmatprep.subr.mxu0 0.0
        %2251 = vmatpush1.msra.mxu0 0.0
        %2252 = vmatprep.subr.mxu0 0.0
        %2253 = vmatpush1.msra.mxu0 0.0
        %2254 = vmatprep.subr.mxu0 0.0
        %2255 = vmatpush1.msra.mxu0 0.0
        %2256 = vmatprep.subr.mxu0 0.0
        %2257 = vmatpush1.msra.mxu0 0.0
        %2258 = vmatprep.subr.mxu0 0.0
        %2259 = vmatpush1.msra.mxu0 0.0
        %2260 = vmatprep.subr.mxu0 0.0
        %2261 = vmatpush1.msra.mxu0 0.0
        %2262 = vmatprep.subr.mxu0 0.0
        %2263 = vmatpush1.msra.mxu0 0.0
        %2264 = vmatprep.subr.mxu0 0.0
        %2265 = vmatpush1.msra.mxu0 0.0
        %2266 = vmatprep.subr.mxu0 0.0
        %2267 = vmatpush1.msra.mxu0 0.0
        %2268 = vmatprep.subr.mxu0 0.0
        %v2269 = vand.u32 %v275, 4294901760
        %2270 = vmatpush1.msra.mxu0 %v2269
        %2271 = vmatprep.subr.mxu0 0.0
        %v2272 = vand.u32 %v274, 4294901760
        %2273 = vmatpush1.msra.mxu0 %v2272
        %2274 = vmatprep.subr.mxu0 0.0
        %2275 = vmatpush2.msra.mxu0 0.0
        %2276 = vmatprep.subr.mxu0 0.0
        %2277 = vmatpush2.msra.mxu0 0.0
        %2278 = vmatprep.subr.mxu0 0.0
        %2279 = vmatpush2.msra.mxu0 0.0
        %2280 = vmatprep.subr.mxu0 0.0
        %2281 = vmatpush2.msra.mxu0 0.0
        %2282 = vmatprep.subr.mxu0 0.0
        %2283 = vmatpush2.msra.mxu0 0.0
        %2284 = vmatprep.subr.mxu0 0.0
        %2285 = vmatpush2.msra.mxu0 0.0
        %2286 = vmatprep.subr.mxu0 0.0
        %2287 = vmatpush2.msra.mxu0 0.0
        %2288 = vmatprep.subr.mxu0 0.0
        %2289 = vmatpush2.msra.mxu0 0.0
        %2290 = vmatprep.subr.mxu0 0.0
        %2291 = vmatpush2.msra.mxu0 0.0
        %2292 = vmatprep.subr.mxu0 0.0
        %2293 = vmatpush2.msra.mxu0 0.0
        %2294 = vmatprep.subr.mxu0 0.0
        %2295 = vmatpush2.msra.mxu0 0.0
        %2296 = vmatprep.subr.mxu0 0.0
        %2297 = vmatpush2.msra.mxu0 0.0
        %2298 = vmatprep.subr.mxu0 0.0
        %2299 = vmatpush2.msra.mxu0 0.0
        %2300 = vmatprep.subr.mxu0 0.0
        %2301 = vmatpush2.msra.mxu0 0.0
        %2302 = vmatprep.subr.mxu0 0.0
        %2303 = vmatpush2.msra.mxu0 0.0
        %2304 = vmatprep.subr.mxu0 0.0
        %2305 = vmatpush2.msra.mxu0 0.0
        %2306 = vmatprep.mubr.f32.mxu0 0.0
        %v2307 = vand.u32 %v1812, 4294901760
        %2308 = vmatmul.mubr.f32.gmra.mxu0 %v2307
        %v2309 = vpop.f32.mrf.mxu0
        %v2310 = vadd.f32 %v2231, %v2309
        %v2311 = vpop.f32.mrf.mxu0
        %2312 = vmatprep.mubr.f32.mxu0 0.0
        %v2313 = vand.u32 %v1815, 4294901760
        %2314 = vmatmul.mubr.f32.gmra.mxu0 %v2313
        %v2315 = vpop.f32.mrf.mxu0
        %v2316 = vadd.f32 %v2237, %v2315
        %v2317 = vpop.f32.mrf.mxu0
        %2318 = vdwg.mxu0
        %vm2319 = vcmask 64512
        %v2321 = vsel %vm2319, %v282, 0
        %v2324 = vsel %vm2319, %v283, 0
        %v2327 = vsel %vm2319, %v284, 0
        %v2330 = vsel %vm2319, %v285, 0
        %2332 = vmatprep.subr.mxu0 0.0
        %2333 = vmatpush1.msra.mxu0 0.0
        %2334 = vmatprep.subr.mxu0 0.0
        %2335 = vmatpush1.msra.mxu0 0.0
        %2336 = vmatprep.subr.mxu0 0.0
        %2337 = vmatpush1.msra.mxu0 0.0
        %2338 = vmatprep.subr.mxu0 0.0
        %2339 = vmatpush1.msra.mxu0 0.0
        %2340 = vmatprep.subr.mxu0 0.0
        %2341 = vmatpush1.msra.mxu0 0.0
        %2342 = vmatprep.subr.mxu0 0.0
        %2343 = vmatpush1.msra.mxu0 0.0
        %2344 = vmatprep.subr.mxu0 0.0
        %2345 = vmatpush1.msra.mxu0 0.0
        %2346 = vmatprep.subr.mxu0 0.0
        %2347 = vmatpush1.msra.mxu0 0.0
        %2348 = vmatprep.subr.mxu0 0.0
        %2349 = vmatpush1.msra.mxu0 0.0
        %2350 = vmatprep.subr.mxu0 0.0
        %2351 = vmatpush1.msra.mxu0 0.0
        %2352 = vmatprep.subr.mxu0 0.0
        %2353 = vmatpush1.msra.mxu0 0.0
        %2354 = vmatprep.subr.mxu0 0.0
        %2355 = vmatpush1.msra.mxu0 0.0
        %2356 = vmatprep.subr.mxu0 0.0
        %2357 = vmatpush1.msra.mxu0 0.0
        %2358 = vmatprep.subr.mxu0 0.0
        %2359 = vmatpush1.msra.mxu0 0.0
        %2360 = vmatprep.subr.mxu0 0.0
        %2361 = vmatpush1.msra.mxu0 0.0
        %2362 = vmatprep.subr.mxu0 0.0
        %v2363 = vand.u32 %v786, 4294901760
        %2364 = vmatpush1.msra.mxu0 %v2363
        %2365 = vmatprep.subr.mxu0 0.0
        %2366 = vmatpush2.msra.mxu0 0.0
        %2367 = vmatprep.subr.mxu0 0.0
        %2368 = vmatpush2.msra.mxu0 0.0
        %2369 = vmatprep.subr.mxu0 0.0
        %2370 = vmatpush2.msra.mxu0 0.0
        %2371 = vmatprep.subr.mxu0 0.0
        %2372 = vmatpush2.msra.mxu0 0.0
        %2373 = vmatprep.subr.mxu0 0.0
        %2374 = vmatpush2.msra.mxu0 0.0
        %2375 = vmatprep.subr.mxu0 0.0
        %2376 = vmatpush2.msra.mxu0 0.0
        %2377 = vmatprep.subr.mxu0 0.0
        %2378 = vmatpush2.msra.mxu0 0.0
        %2379 = vmatprep.subr.mxu0 0.0
        %2380 = vmatpush2.msra.mxu0 0.0
        %2381 = vmatprep.subr.mxu0 0.0
        %2382 = vmatpush2.msra.mxu0 0.0
        %2383 = vmatprep.subr.mxu0 0.0
        %2384 = vmatpush2.msra.mxu0 0.0
        %2385 = vmatprep.subr.mxu0 0.0
        %2386 = vmatpush2.msra.mxu0 0.0
        %2387 = vmatprep.subr.mxu0 0.0
        %2388 = vmatpush2.msra.mxu0 0.0
        %2389 = vmatprep.subr.mxu0 0.0
        %2390 = vmatpush2.msra.mxu0 0.0
        %2391 = vmatprep.subr.mxu0 0.0
        %2392 = vmatpush2.msra.mxu0 0.0
        %2393 = vmatprep.subr.mxu0 0.0
        %2394 = vmatpush2.msra.mxu0 0.0
        %2395 = vmatprep.subr.mxu0 0.0
        %2396 = vmatpush2.msra.mxu0 0.0
        %2397 = vmatprep.mubr.f32.mxu0 0.0
        %v2398 = vand.u32 %v2321, 4294901760
        %v2399 = vsub.f32 %v2321, %v2398
        %v2400 = vand.u32 %v2399, 4294901760
        %v2401 = vsub.f32 %v2399, %v2400
        %v2402 = vand.u32 %v2401, 4294901760
        %2403 = vmatmul.mubr.f32.gmra.mxu0 %v2402
        %v2404 = vpop.f32.mrf.mxu0
        %v2405 = vadd.f32 0.0, %v2404
        %v2406 = vpop.f32.mrf.mxu0
        %2407 = vmatprep.mubr.f32.mxu0 0.0
        %v2408 = vand.u32 %v2324, 4294901760
        %v2409 = vsub.f32 %v2324, %v2408
        %v2410 = vand.u32 %v2409, 4294901760
        %v2411 = vsub.f32 %v2409, %v2410
        %v2412 = vand.u32 %v2411, 4294901760
        %2413 = vmatmul.mubr.f32.gmra.mxu0 %v2412
        %v2414 = vpop.f32.mrf.mxu0
        %v2415 = vadd.f32 0.0, %v2414
        %v2416 = vpop.f32.mrf.mxu0
        %2417 = vmatprep.mubr.f32.mxu0 0.0
        %v2418 = vand.u32 %v2327, 4294901760
        %v2419 = vsub.f32 %v2327, %v2418
        %v2420 = vand.u32 %v2419, 4294901760
        %v2421 = vsub.f32 %v2419, %v2420
        %v2422 = vand.u32 %v2421, 4294901760
        %2423 = vmatmul.mubr.f32.gmra.mxu0 %v2422
        %v2424 = vpop.f32.mrf.mxu0
        %v2425 = vadd.f32 0.0, %v2424
        %v2426 = vpop.f32.mrf.mxu0
        %2427 = vmatprep.mubr.f32.mxu0 0.0
        %v2428 = vand.u32 %v2330, 4294901760
        %v2429 = vsub.f32 %v2330, %v2428
        %v2430 = vand.u32 %v2429, 4294901760
        %v2431 = vsub.f32 %v2429, %v2430
        %v2432 = vand.u32 %v2431, 4294901760
        %2433 = vmatmul.mubr.f32.gmra.mxu0 %v2432
        %v2434 = vpop.f32.mrf.mxu0
        %v2435 = vadd.f32 0.0, %v2434
        %v2436 = vpop.f32.mrf.mxu0
        %2437 = vdwg.mxu0
        %2438 = vmatprep.subr.mxu0 0.0
        %2439 = vmatpush1.msra.mxu0 0.0
        %2440 = vmatprep.subr.mxu0 0.0
        %2441 = vmatpush1.msra.mxu0 0.0
        %2442 = vmatprep.subr.mxu0 0.0
        %2443 = vmatpush1.msra.mxu0 0.0
        %2444 = vmatprep.subr.mxu0 0.0
        %2445 = vmatpush1.msra.mxu0 0.0
        %2446 = vmatprep.subr.mxu0 0.0
        %2447 = vmatpush1.msra.mxu0 0.0
        %2448 = vmatprep.subr.mxu0 0.0
        %2449 = vmatpush1.msra.mxu0 0.0
        %2450 = vmatprep.subr.mxu0 0.0
        %2451 = vmatpush1.msra.mxu0 0.0
        %2452 = vmatprep.subr.mxu0 0.0
        %2453 = vmatpush1.msra.mxu0 0.0
        %2454 = vmatprep.subr.mxu0 0.0
        %2455 = vmatpush1.msra.mxu0 0.0
        %2456 = vmatprep.subr.mxu0 0.0
        %2457 = vmatpush1.msra.mxu0 0.0
        %2458 = vmatprep.subr.mxu0 0.0
        %2459 = vmatpush1.msra.mxu0 0.0
        %2460 = vmatprep.subr.mxu0 0.0
        %2461 = vmatpush1.msra.mxu0 0.0
        %2462 = vmatprep.subr.mxu0 0.0
        %2463 = vmatpush1.msra.mxu0 0.0
        %2464 = vmatprep.subr.mxu0 0.0
        %2465 = vmatpush1.msra.mxu0 0.0
        %2466 = vmatprep.subr.mxu0 0.0
        %2467 = vmatpush1.msra.mxu0 0.0
        %2468 = vmatprep.subr.mxu0 0.0
        %v2469 = vand.u32 %v786, 4294901760
        %v2470 = vsub.f32 %v786, %v2469
        %v2471 = vand.u32 %v2470, 4294901760
        %v2472 = vsub.f32 %v2470, %v2471
        %v2473 = vand.u32 %v2472, 4294901760
        %2474 = vmatpush1.msra.mxu0 %v2473
        %2475 = vmatprep.subr.mxu0 0.0
        %2476 = vmatpush2.msra.mxu0 0.0
        %2477 = vmatprep.subr.mxu0 0.0
        %2478 = vmatpush2.msra.mxu0 0.0
        %2479 = vmatprep.subr.mxu0 0.0
        %2480 = vmatpush2.msra.mxu0 0.0
        %2481 = vmatprep.subr.mxu0 0.0
        %2482 = vmatpush2.msra.mxu0 0.0
        %2483 = vmatprep.subr.mxu0 0.0
        %2484 = vmatpush2.msra.mxu0 0.0
        %2485 = vmatprep.subr.mxu0 0.0
        %2486 = vmatpush2.msra.mxu0 0.0
        %2487 = vmatprep.subr.mxu0 0.0
        %2488 = vmatpush2.msra.mxu0 0.0
        %2489 = vmatprep.subr.mxu0 0.0
        %2490 = vmatpush2.msra.mxu0 0.0
        %2491 = vmatprep.subr.mxu0 0.0
        %2492 = vmatpush2.msra.mxu0 0.0
        %2493 = vmatprep.subr.mxu0 0.0
        %2494 = vmatpush2.msra.mxu0 0.0
        %2495 = vmatprep.subr.mxu0 0.0
        %2496 = vmatpush2.msra.mxu0 0.0
        %2497 = vmatprep.subr.mxu0 0.0
        %2498 = vmatpush2.msra.mxu0 0.0
        %2499 = vmatprep.subr.mxu0 0.0
        %2500 = vmatpush2.msra.mxu0 0.0
        %2501 = vmatprep.subr.mxu0 0.0
        %2502 = vmatpush2.msra.mxu0 0.0
        %2503 = vmatprep.subr.mxu0 0.0
        %2504 = vmatpush2.msra.mxu0 0.0
        %2505 = vmatprep.subr.mxu0 0.0
        %2506 = vmatpush2.msra.mxu0 0.0
        %2507 = vmatprep.mubr.f32.mxu0 0.0
        %v2508 = vand.u32 %v2321, 4294901760
        %2509 = vmatmul.mubr.f32.gmra.mxu0 %v2508
        %v2510 = vpop.f32.mrf.mxu0
        %v2511 = vadd.f32 %v2405, %v2510
        %v2512 = vpop.f32.mrf.mxu0
        %2513 = vmatprep.mubr.f32.mxu0 0.0
        %v2514 = vand.u32 %v2324, 4294901760
        %2515 = vmatmul.mubr.f32.gmra.mxu0 %v2514
        %v2516 = vpop.f32.mrf.mxu0
        %v2517 = vadd.f32 %v2415, %v2516
        %v2518 = vpop.f32.mrf.mxu0
        %2519 = vmatprep.mubr.f32.mxu0 0.0
        %v2520 = vand.u32 %v2327, 4294901760
        %2521 = vmatmul.mubr.f32.gmra.mxu0 %v2520
        %v2522 = vpop.f32.mrf.mxu0
        %v2523 = vadd.f32 %v2425, %v2522
        %v2524 = vpop.f32.mrf.mxu0
        %2525 = vmatprep.mubr.f32.mxu0 0.0
        %v2526 = vand.u32 %v2330, 4294901760
        %2527 = vmatmul.mubr.f32.gmra.mxu0 %v2526
        %v2528 = vpop.f32.mrf.mxu0
        %v2529 = vadd.f32 %v2435, %v2528
        %v2530 = vpop.f32.mrf.mxu0
        %2531 = vdwg.mxu0
        %2532 = vmatprep.subr.mxu0 0.0
        %2533 = vmatpush1.msra.mxu0 0.0
        %2534 = vmatprep.subr.mxu0 0.0
        %2535 = vmatpush1.msra.mxu0 0.0
        %2536 = vmatprep.subr.mxu0 0.0
        %2537 = vmatpush1.msra.mxu0 0.0
        %2538 = vmatprep.subr.mxu0 0.0
        %2539 = vmatpush1.msra.mxu0 0.0
        %2540 = vmatprep.subr.mxu0 0.0
        %2541 = vmatpush1.msra.mxu0 0.0
        %2542 = vmatprep.subr.mxu0 0.0
        %2543 = vmatpush1.msra.mxu0 0.0
        %2544 = vmatprep.subr.mxu0 0.0
        %2545 = vmatpush1.msra.mxu0 0.0
        %2546 = vmatprep.subr.mxu0 0.0
        %2547 = vmatpush1.msra.mxu0 0.0
        %2548 = vmatprep.subr.mxu0 0.0
        %2549 = vmatpush1.msra.mxu0 0.0
        %2550 = vmatprep.subr.mxu0 0.0
        %2551 = vmatpush1.msra.mxu0 0.0
        %2552 = vmatprep.subr.mxu0 0.0
        %2553 = vmatpush1.msra.mxu0 0.0
        %2554 = vmatprep.subr.mxu0 0.0
        %2555 = vmatpush1.msra.mxu0 0.0
        %2556 = vmatprep.subr.mxu0 0.0
        %2557 = vmatpush1.msra.mxu0 0.0
        %2558 = vmatprep.subr.mxu0 0.0
        %2559 = vmatpush1.msra.mxu0 0.0
        %2560 = vmatprep.subr.mxu0 0.0
        %2561 = vmatpush1.msra.mxu0 0.0
        %2562 = vmatprep.subr.mxu0 0.0
        %v2563 = vand.u32 %v786, 4294901760
        %v2564 = vsub.f32 %v786, %v2563
        %2565 = vmatpush1.msra.mxu0 %v2564
        %2566 = vmatprep.subr.mxu0 0.0
        %2567 = vmatpush2.msra.mxu0 0.0
        %2568 = vmatprep.subr.mxu0 0.0
        %2569 = vmatpush2.msra.mxu0 0.0
        %2570 = vmatprep.subr.mxu0 0.0
        %2571 = vmatpush2.msra.mxu0 0.0
        %2572 = vmatprep.subr.mxu0 0.0
        %2573 = vmatpush2.msra.mxu0 0.0
        %2574 = vmatprep.subr.mxu0 0.0
        %2575 = vmatpush2.msra.mxu0 0.0
        %2576 = vmatprep.subr.mxu0 0.0
        %2577 = vmatpush2.msra.mxu0 0.0
        %2578 = vmatprep.subr.mxu0 0.0
        %2579 = vmatpush2.msra.mxu0 0.0
        %2580 = vmatprep.subr.mxu0 0.0
        %2581 = vmatpush2.msra.mxu0 0.0
        %2582 = vmatprep.subr.mxu0 0.0
        %2583 = vmatpush2.msra.mxu0 0.0
        %2584 = vmatprep.subr.mxu0 0.0
        %2585 = vmatpush2.msra.mxu0 0.0
        %2586 = vmatprep.subr.mxu0 0.0
        %2587 = vmatpush2.msra.mxu0 0.0
        %2588 = vmatprep.subr.mxu0 0.0
        %2589 = vmatpush2.msra.mxu0 0.0
        %2590 = vmatprep.subr.mxu0 0.0
        %2591 = vmatpush2.msra.mxu0 0.0
        %2592 = vmatprep.subr.mxu0 0.0
        %2593 = vmatpush2.msra.mxu0 0.0
        %2594 = vmatprep.subr.mxu0 0.0
        %2595 = vmatpush2.msra.mxu0 0.0
        %2596 = vmatprep.subr.mxu0 0.0
        %2597 = vmatpush2.msra.mxu0 0.0
        %2598 = vmatprep.mubr.f32.mxu0 0.0
        %v2599 = vand.u32 %v2321, 4294901760
        %v2600 = vsub.f32 %v2321, %v2599
        %2601 = vmatmul.mubr.f32.gmra.mxu0 %v2600
        %v2602 = vpop.f32.mrf.mxu0
        %v2603 = vadd.f32 %v2511, %v2602
        %v2604 = vpop.f32.mrf.mxu0
        %2605 = vmatprep.mubr.f32.mxu0 0.0
        %v2606 = vand.u32 %v2324, 4294901760
        %v2607 = vsub.f32 %v2324, %v2606
        %2608 = vmatmul.mubr.f32.gmra.mxu0 %v2607
        %v2609 = vpop.f32.mrf.mxu0
        %v2610 = vadd.f32 %v2517, %v2609
        %v2611 = vpop.f32.mrf.mxu0
        %2612 = vmatprep.mubr.f32.mxu0 0.0
        %v2613 = vand.u32 %v2327, 4294901760
        %v2614 = vsub.f32 %v2327, %v2613
        %2615 = vmatmul.mubr.f32.gmra.mxu0 %v2614
        %v2616 = vpop.f32.mrf.mxu0
        %v2617 = vadd.f32 %v2523, %v2616
        %v2618 = vpop.f32.mrf.mxu0
        %2619 = vmatprep.mubr.f32.mxu0 0.0
        %v2620 = vand.u32 %v2330, 4294901760
        %v2621 = vsub.f32 %v2330, %v2620
        %2622 = vmatmul.mubr.f32.gmra.mxu0 %v2621
        %v2623 = vpop.f32.mrf.mxu0
        %v2624 = vadd.f32 %v2529, %v2623
        %v2625 = vpop.f32.mrf.mxu0
        %2626 = vdwg.mxu0
        %2627 = vmatprep.subr.mxu0 0.0
        %2628 = vmatpush1.msra.mxu0 0.0
        %2629 = vmatprep.subr.mxu0 0.0
        %2630 = vmatpush1.msra.mxu0 0.0
        %2631 = vmatprep.subr.mxu0 0.0
        %2632 = vmatpush1.msra.mxu0 0.0
        %2633 = vmatprep.subr.mxu0 0.0
        %2634 = vmatpush1.msra.mxu0 0.0
        %2635 = vmatprep.subr.mxu0 0.0
        %2636 = vmatpush1.msra.mxu0 0.0
        %2637 = vmatprep.subr.mxu0 0.0
        %2638 = vmatpush1.msra.mxu0 0.0
        %2639 = vmatprep.subr.mxu0 0.0
        %2640 = vmatpush1.msra.mxu0 0.0
        %2641 = vmatprep.subr.mxu0 0.0
        %2642 = vmatpush1.msra.mxu0 0.0
        %2643 = vmatprep.subr.mxu0 0.0
        %2644 = vmatpush1.msra.mxu0 0.0
        %2645 = vmatprep.subr.mxu0 0.0
        %2646 = vmatpush1.msra.mxu0 0.0
        %2647 = vmatprep.subr.mxu0 0.0
        %2648 = vmatpush1.msra.mxu0 0.0
        %2649 = vmatprep.subr.mxu0 0.0
        %2650 = vmatpush1.msra.mxu0 0.0
        %2651 = vmatprep.subr.mxu0 0.0
        %2652 = vmatpush1.msra.mxu0 0.0
        %2653 = vmatprep.subr.mxu0 0.0
        %2654 = vmatpush1.msra.mxu0 0.0
        %2655 = vmatprep.subr.mxu0 0.0
        %2656 = vmatpush1.msra.mxu0 0.0
        %2657 = vmatprep.subr.mxu0 0.0
        %v2658 = vand.u32 %v786, 4294901760
        %2659 = vmatpush1.msra.mxu0 %v2658
        %2660 = vmatprep.subr.mxu0 0.0
        %2661 = vmatpush2.msra.mxu0 0.0
        %2662 = vmatprep.subr.mxu0 0.0
        %2663 = vmatpush2.msra.mxu0 0.0
        %2664 = vmatprep.subr.mxu0 0.0
        %2665 = vmatpush2.msra.mxu0 0.0
        %2666 = vmatprep.subr.mxu0 0.0
        %2667 = vmatpush2.msra.mxu0 0.0
        %2668 = vmatprep.subr.mxu0 0.0
        %2669 = vmatpush2.msra.mxu0 0.0
        %2670 = vmatprep.subr.mxu0 0.0
        %2671 = vmatpush2.msra.mxu0 0.0
        %2672 = vmatprep.subr.mxu0 0.0
        %2673 = vmatpush2.msra.mxu0 0.0
        %2674 = vmatprep.subr.mxu0 0.0
        %2675 = vmatpush2.msra.mxu0 0.0
        %2676 = vmatprep.subr.mxu0 0.0
        %2677 = vmatpush2.msra.mxu0 0.0
        %2678 = vmatprep.subr.mxu0 0.0
        %2679 = vmatpush2.msra.mxu0 0.0
        %2680 = vmatprep.subr.mxu0 0.0
        %2681 = vmatpush2.msra.mxu0 0.0
        %2682 = vmatprep.subr.mxu0 0.0
        %2683 = vmatpush2.msra.mxu0 0.0
        %2684 = vmatprep.subr.mxu0 0.0
        %2685 = vmatpush2.msra.mxu0 0.0
        %2686 = vmatprep.subr.mxu0 0.0
        %2687 = vmatpush2.msra.mxu0 0.0
        %2688 = vmatprep.subr.mxu0 0.0
        %2689 = vmatpush2.msra.mxu0 0.0
        %2690 = vmatprep.subr.mxu0 0.0
        %2691 = vmatpush2.msra.mxu0 0.0
        %2692 = vmatprep.mubr.f32.mxu0 0.0
        %v2693 = vand.u32 %v2321, 4294901760
        %v2694 = vsub.f32 %v2321, %v2693
        %v2695 = vand.u32 %v2694, 4294901760
        %2696 = vmatmul.mubr.f32.gmra.mxu0 %v2695
        %v2697 = vpop.f32.mrf.mxu0
        %v2698 = vadd.f32 %v2603, %v2697
        %v2699 = vpop.f32.mrf.mxu0
        %2700 = vmatprep.mubr.f32.mxu0 0.0
        %v2701 = vand.u32 %v2324, 4294901760
        %v2702 = vsub.f32 %v2324, %v2701
        %v2703 = vand.u32 %v2702, 4294901760
        %2704 = vmatmul.mubr.f32.gmra.mxu0 %v2703
        %v2705 = vpop.f32.mrf.mxu0
        %v2706 = vadd.f32 %v2610, %v2705
        %v2707 = vpop.f32.mrf.mxu0
        %2708 = vmatprep.mubr.f32.mxu0 0.0
        %v2709 = vand.u32 %v2327, 4294901760
        %v2710 = vsub.f32 %v2327, %v2709
        %v2711 = vand.u32 %v2710, 4294901760
        %2712 = vmatmul.mubr.f32.gmra.mxu0 %v2711
        %v2713 = vpop.f32.mrf.mxu0
        %v2714 = vadd.f32 %v2617, %v2713
        %v2715 = vpop.f32.mrf.mxu0
        %2716 = vmatprep.mubr.f32.mxu0 0.0
        %v2717 = vand.u32 %v2330, 4294901760
        %v2718 = vsub.f32 %v2330, %v2717
        %v2719 = vand.u32 %v2718, 4294901760
        %2720 = vmatmul.mubr.f32.gmra.mxu0 %v2719
        %v2721 = vpop.f32.mrf.mxu0
        %v2722 = vadd.f32 %v2624, %v2721
        %v2723 = vpop.f32.mrf.mxu0
        %2724 = vdwg.mxu0
        %2725 = vmatprep.subr.mxu0 0.0
        %2726 = vmatpush1.msra.mxu0 0.0
        %2727 = vmatprep.subr.mxu0 0.0
        %2728 = vmatpush1.msra.mxu0 0.0
        %2729 = vmatprep.subr.mxu0 0.0
        %2730 = vmatpush1.msra.mxu0 0.0
        %2731 = vmatprep.subr.mxu0 0.0
        %2732 = vmatpush1.msra.mxu0 0.0
        %2733 = vmatprep.subr.mxu0 0.0
        %2734 = vmatpush1.msra.mxu0 0.0
        %2735 = vmatprep.subr.mxu0 0.0
        %2736 = vmatpush1.msra.mxu0 0.0
        %2737 = vmatprep.subr.mxu0 0.0
        %2738 = vmatpush1.msra.mxu0 0.0
        %2739 = vmatprep.subr.mxu0 0.0
        %2740 = vmatpush1.msra.mxu0 0.0
        %2741 = vmatprep.subr.mxu0 0.0
        %2742 = vmatpush1.msra.mxu0 0.0
        %2743 = vmatprep.subr.mxu0 0.0
        %2744 = vmatpush1.msra.mxu0 0.0
        %2745 = vmatprep.subr.mxu0 0.0
        %2746 = vmatpush1.msra.mxu0 0.0
        %2747 = vmatprep.subr.mxu0 0.0
        %2748 = vmatpush1.msra.mxu0 0.0
        %2749 = vmatprep.subr.mxu0 0.0
        %2750 = vmatpush1.msra.mxu0 0.0
        %2751 = vmatprep.subr.mxu0 0.0
        %2752 = vmatpush1.msra.mxu0 0.0
        %2753 = vmatprep.subr.mxu0 0.0
        %2754 = vmatpush1.msra.mxu0 0.0
        %2755 = vmatprep.subr.mxu0 0.0
        %v2756 = vand.u32 %v786, 4294901760
        %v2757 = vsub.f32 %v786, %v2756
        %v2758 = vand.u32 %v2757, 4294901760
        %2759 = vmatpush1.msra.mxu0 %v2758
        %2760 = vmatprep.subr.mxu0 0.0
        %2761 = vmatpush2.msra.mxu0 0.0
        %2762 = vmatprep.subr.mxu0 0.0
        %2763 = vmatpush2.msra.mxu0 0.0
        %2764 = vmatprep.subr.mxu0 0.0
        %2765 = vmatpush2.msra.mxu0 0.0
        %2766 = vmatprep.subr.mxu0 0.0
        %2767 = vmatpush2.msra.mxu0 0.0
        %2768 = vmatprep.subr.mxu0 0.0
        %2769 = vmatpush2.msra.mxu0 0.0
        %2770 = vmatprep.subr.mxu0 0.0
        %2771 = vmatpush2.msra.mxu0 0.0
        %2772 = vmatprep.subr.mxu0 0.0
        %2773 = vmatpush2.msra.mxu0 0.0
        %2774 = vmatprep.subr.mxu0 0.0
        %2775 = vmatpush2.msra.mxu0 0.0
        %2776 = vmatprep.subr.mxu0 0.0
        %2777 = vmatpush2.msra.mxu0 0.0
        %2778 = vmatprep.subr.mxu0 0.0
        %2779 = vmatpush2.msra.mxu0 0.0
        %2780 = vmatprep.subr.mxu0 0.0
        %2781 = vmatpush2.msra.mxu0 0.0
        %2782 = vmatprep.subr.mxu0 0.0
        %2783 = vmatpush2.msra.mxu0 0.0
        %2784 = vmatprep.subr.mxu0 0.0
        %2785 = vmatpush2.msra.mxu0 0.0
        %2786 = vmatprep.subr.mxu0 0.0
        %2787 = vmatpush2.msra.mxu0 0.0
        %2788 = vmatprep.subr.mxu0 0.0
        %2789 = vmatpush2.msra.mxu0 0.0
        %2790 = vmatprep.subr.mxu0 0.0
        %2791 = vmatpush2.msra.mxu0 0.0
        %2792 = vmatprep.mubr.f32.mxu0 0.0
        %v2793 = vand.u32 %v2321, 4294901760
        %2794 = vmatmul.mubr.f32.gmra.mxu0 %v2793
        %v2795 = vpop.f32.mrf.mxu0
        %v2796 = vadd.f32 %v2698, %v2795
        %v2797 = vpop.f32.mrf.mxu0
        %2798 = vmatprep.mubr.f32.mxu0 0.0
        %v2799 = vand.u32 %v2324, 4294901760
        %2800 = vmatmul.mubr.f32.gmra.mxu0 %v2799
        %v2801 = vpop.f32.mrf.mxu0
        %v2802 = vadd.f32 %v2706, %v2801
        %v2803 = vpop.f32.mrf.mxu0
        %2804 = vmatprep.mubr.f32.mxu0 0.0
        %v2805 = vand.u32 %v2327, 4294901760
        %2806 = vmatmul.mubr.f32.gmra.mxu0 %v2805
        %v2807 = vpop.f32.mrf.mxu0
        %v2808 = vadd.f32 %v2714, %v2807
        %v2809 = vpop.f32.mrf.mxu0
        %2810 = vmatprep.mubr.f32.mxu0 0.0
        %v2811 = vand.u32 %v2330, 4294901760
        %2812 = vmatmul.mubr.f32.gmra.mxu0 %v2811
        %v2813 = vpop.f32.mrf.mxu0
        %v2814 = vadd.f32 %v2722, %v2813
        %v2815 = vpop.f32.mrf.mxu0
        %2816 = vdwg.mxu0
        %2817 = vmatprep.subr.mxu0 0.0
        %2818 = vmatpush1.msra.mxu0 0.0
        %2819 = vmatprep.subr.mxu0 0.0
        %2820 = vmatpush1.msra.mxu0 0.0
        %2821 = vmatprep.subr.mxu0 0.0
        %2822 = vmatpush1.msra.mxu0 0.0
        %2823 = vmatprep.subr.mxu0 0.0
        %2824 = vmatpush1.msra.mxu0 0.0
        %2825 = vmatprep.subr.mxu0 0.0
        %2826 = vmatpush1.msra.mxu0 0.0
        %2827 = vmatprep.subr.mxu0 0.0
        %2828 = vmatpush1.msra.mxu0 0.0
        %2829 = vmatprep.subr.mxu0 0.0
        %2830 = vmatpush1.msra.mxu0 0.0
        %2831 = vmatprep.subr.mxu0 0.0
        %2832 = vmatpush1.msra.mxu0 0.0
        %2833 = vmatprep.subr.mxu0 0.0
        %2834 = vmatpush1.msra.mxu0 0.0
        %2835 = vmatprep.subr.mxu0 0.0
        %2836 = vmatpush1.msra.mxu0 0.0
        %2837 = vmatprep.subr.mxu0 0.0
        %2838 = vmatpush1.msra.mxu0 0.0
        %2839 = vmatprep.subr.mxu0 0.0
        %2840 = vmatpush1.msra.mxu0 0.0
        %2841 = vmatprep.subr.mxu0 0.0
        %2842 = vmatpush1.msra.mxu0 0.0
        %2843 = vmatprep.subr.mxu0 0.0
        %2844 = vmatpush1.msra.mxu0 0.0
        %2845 = vmatprep.subr.mxu0 0.0
        %2846 = vmatpush1.msra.mxu0 0.0
        %2847 = vmatprep.subr.mxu0 0.0
        %v2848 = vand.u32 %v786, 4294901760
        %2849 = vmatpush1.msra.mxu0 %v2848
        %2850 = vmatprep.subr.mxu0 0.0
        %2851 = vmatpush2.msra.mxu0 0.0
        %2852 = vmatprep.subr.mxu0 0.0
        %2853 = vmatpush2.msra.mxu0 0.0
        %2854 = vmatprep.subr.mxu0 0.0
        %2855 = vmatpush2.msra.mxu0 0.0
        %2856 = vmatprep.subr.mxu0 0.0
        %2857 = vmatpush2.msra.mxu0 0.0
        %2858 = vmatprep.subr.mxu0 0.0
        %2859 = vmatpush2.msra.mxu0 0.0
        %2860 = vmatprep.subr.mxu0 0.0
        %2861 = vmatpush2.msra.mxu0 0.0
        %2862 = vmatprep.subr.mxu0 0.0
        %2863 = vmatpush2.msra.mxu0 0.0
        %2864 = vmatprep.subr.mxu0 0.0
        %2865 = vmatpush2.msra.mxu0 0.0
        %2866 = vmatprep.subr.mxu0 0.0
        %2867 = vmatpush2.msra.mxu0 0.0
        %2868 = vmatprep.subr.mxu0 0.0
        %2869 = vmatpush2.msra.mxu0 0.0
        %2870 = vmatprep.subr.mxu0 0.0
        %2871 = vmatpush2.msra.mxu0 0.0
        %2872 = vmatprep.subr.mxu0 0.0
        %2873 = vmatpush2.msra.mxu0 0.0
        %2874 = vmatprep.subr.mxu0 0.0
        %2875 = vmatpush2.msra.mxu0 0.0
        %2876 = vmatprep.subr.mxu0 0.0
        %2877 = vmatpush2.msra.mxu0 0.0
        %2878 = vmatprep.subr.mxu0 0.0
        %2879 = vmatpush2.msra.mxu0 0.0
        %2880 = vmatprep.subr.mxu0 0.0
        %2881 = vmatpush2.msra.mxu0 0.0
        %2882 = vmatprep.mubr.f32.mxu0 0.0
        %v2883 = vand.u32 %v2321, 4294901760
        %2884 = vmatmul.mubr.f32.gmra.mxu0 %v2883
        %v2885 = vpop.f32.mrf.mxu0
        %v2886 = vadd.f32 %v2796, %v2885
        %v2887 = vpop.f32.mrf.mxu0
        %2888 = vmatprep.mubr.f32.mxu0 0.0
        %v2889 = vand.u32 %v2324, 4294901760
        %2890 = vmatmul.mubr.f32.gmra.mxu0 %v2889
        %v2891 = vpop.f32.mrf.mxu0
        %v2892 = vadd.f32 %v2802, %v2891
        %v2893 = vpop.f32.mrf.mxu0
        %2894 = vmatprep.mubr.f32.mxu0 0.0
        %v2895 = vand.u32 %v2327, 4294901760
        %2896 = vmatmul.mubr.f32.gmra.mxu0 %v2895
        %v2897 = vpop.f32.mrf.mxu0
        %v2898 = vadd.f32 %v2808, %v2897
        %v2899 = vpop.f32.mrf.mxu0
        %2900 = vmatprep.mubr.f32.mxu0 0.0
        %v2901 = vand.u32 %v2330, 4294901760
        %2902 = vmatmul.mubr.f32.gmra.mxu0 %v2901
        %v2903 = vpop.f32.mrf.mxu0
        %v2904 = vadd.f32 %v2814, %v2903
        %v2905 = vpop.f32.mrf.mxu0
        %2906 = vdwg.mxu0
        %v2908 = vsel %vm2319, %v278, 0
        %v2911 = vsel %vm2319, %v279, 0
        %v2914 = vsel %vm2319, %v280, 0
        %v2917 = vsel %vm2319, %v281, 0
        %2919 = vmatprep.subr.mxu0 0.0
        %2920 = vmatpush1.msra.mxu0 0.0
        %2921 = vmatprep.subr.mxu0 0.0
        %2922 = vmatpush1.msra.mxu0 0.0
        %2923 = vmatprep.subr.mxu0 0.0
        %2924 = vmatpush1.msra.mxu0 0.0
        %2925 = vmatprep.subr.mxu0 0.0
        %2926 = vmatpush1.msra.mxu0 0.0
        %2927 = vmatprep.subr.mxu0 0.0
        %2928 = vmatpush1.msra.mxu0 0.0
        %2929 = vmatprep.subr.mxu0 0.0
        %2930 = vmatpush1.msra.mxu0 0.0
        %2931 = vmatprep.subr.mxu0 0.0
        %2932 = vmatpush1.msra.mxu0 0.0
        %2933 = vmatprep.subr.mxu0 0.0
        %2934 = vmatpush1.msra.mxu0 0.0
        %2935 = vmatprep.subr.mxu0 0.0
        %2936 = vmatpush1.msra.mxu0 0.0
        %2937 = vmatprep.subr.mxu0 0.0
        %2938 = vmatpush1.msra.mxu0 0.0
        %2939 = vmatprep.subr.mxu0 0.0
        %2940 = vmatpush1.msra.mxu0 0.0
        %2941 = vmatprep.subr.mxu0 0.0
        %2942 = vmatpush1.msra.mxu0 0.0
        %2943 = vmatprep.subr.mxu0 0.0
        %2944 = vmatpush1.msra.mxu0 0.0
        %2945 = vmatprep.subr.mxu0 0.0
        %2946 = vmatpush1.msra.mxu0 0.0
        %2947 = vmatprep.subr.mxu0 0.0
        %2948 = vmatpush1.msra.mxu0 0.0
        %2949 = vmatprep.subr.mxu0 0.0
        %v2950 = vand.u32 %v2310, 4294901760
        %2951 = vmatpush1.msra.mxu0 %v2950
        %2952 = vmatprep.subr.mxu0 0.0
        %2953 = vmatpush2.msra.mxu0 0.0
        %2954 = vmatprep.subr.mxu0 0.0
        %2955 = vmatpush2.msra.mxu0 0.0
        %2956 = vmatprep.subr.mxu0 0.0
        %2957 = vmatpush2.msra.mxu0 0.0
        %2958 = vmatprep.subr.mxu0 0.0
        %2959 = vmatpush2.msra.mxu0 0.0
        %2960 = vmatprep.subr.mxu0 0.0
        %2961 = vmatpush2.msra.mxu0 0.0
        %2962 = vmatprep.subr.mxu0 0.0
        %2963 = vmatpush2.msra.mxu0 0.0
        %2964 = vmatprep.subr.mxu0 0.0
        %2965 = vmatpush2.msra.mxu0 0.0
        %2966 = vmatprep.subr.mxu0 0.0
        %2967 = vmatpush2.msra.mxu0 0.0
        %2968 = vmatprep.subr.mxu0 0.0
        %2969 = vmatpush2.msra.mxu0 0.0
        %2970 = vmatprep.subr.mxu0 0.0
        %2971 = vmatpush2.msra.mxu0 0.0
        %2972 = vmatprep.subr.mxu0 0.0
        %2973 = vmatpush2.msra.mxu0 0.0
        %2974 = vmatprep.subr.mxu0 0.0
        %2975 = vmatpush2.msra.mxu0 0.0
        %2976 = vmatprep.subr.mxu0 0.0
        %2977 = vmatpush2.msra.mxu0 0.0
        %2978 = vmatprep.subr.mxu0 0.0
        %2979 = vmatpush2.msra.mxu0 0.0
        %2980 = vmatprep.subr.mxu0 0.0
        %2981 = vmatpush2.msra.mxu0 0.0
        %2982 = vmatprep.subr.mxu0 0.0
        %2983 = vmatpush2.msra.mxu0 0.0
        %2984 = vmatprep.mubr.f32.mxu0 0.0
        %v2985 = vand.u32 %v2908, 4294901760
        %v2986 = vsub.f32 %v2908, %v2985
        %v2987 = vand.u32 %v2986, 4294901760
        %v2988 = vsub.f32 %v2986, %v2987
        %v2989 = vand.u32 %v2988, 4294901760
        %2990 = vmatmul.mubr.f32.gmra.mxu0 %v2989
        %v2991 = vpop.f32.mrf.mxu0
        %v2992 = vadd.f32 %v2886, %v2991
        %v2993 = vpop.f32.mrf.mxu0
        %2994 = vmatprep.mubr.f32.mxu0 0.0
        %v2995 = vand.u32 %v2911, 4294901760
        %v2996 = vsub.f32 %v2911, %v2995
        %v2997 = vand.u32 %v2996, 4294901760
        %v2998 = vsub.f32 %v2996, %v2997
        %v2999 = vand.u32 %v2998, 4294901760
        %3000 = vmatmul.mubr.f32.gmra.mxu0 %v2999
        %v3001 = vpop.f32.mrf.mxu0
        %v3002 = vadd.f32 %v2892, %v3001
        %v3003 = vpop.f32.mrf.mxu0
        %3004 = vmatprep.mubr.f32.mxu0 0.0
        %v3005 = vand.u32 %v2914, 4294901760
        %v3006 = vsub.f32 %v2914, %v3005
        %v3007 = vand.u32 %v3006, 4294901760
        %v3008 = vsub.f32 %v3006, %v3007
        %v3009 = vand.u32 %v3008, 4294901760
        %3010 = vmatmul.mubr.f32.gmra.mxu0 %v3009
        %v3011 = vpop.f32.mrf.mxu0
        %v3012 = vadd.f32 %v2898, %v3011
        %v3013 = vpop.f32.mrf.mxu0
        %3014 = vmatprep.mubr.f32.mxu0 0.0
        %v3015 = vand.u32 %v2917, 4294901760
        %v3016 = vsub.f32 %v2917, %v3015
        %v3017 = vand.u32 %v3016, 4294901760
        %v3018 = vsub.f32 %v3016, %v3017
        %v3019 = vand.u32 %v3018, 4294901760
        %3020 = vmatmul.mubr.f32.gmra.mxu0 %v3019
        %v3021 = vpop.f32.mrf.mxu0
        %v3022 = vadd.f32 %v2904, %v3021
        %v3023 = vpop.f32.mrf.mxu0
        %3024 = vdwg.mxu0
        %3025 = vmatprep.subr.mxu0 0.0
        %3026 = vmatpush1.msra.mxu0 0.0
        %3027 = vmatprep.subr.mxu0 0.0
        %3028 = vmatpush1.msra.mxu0 0.0
        %3029 = vmatprep.subr.mxu0 0.0
        %3030 = vmatpush1.msra.mxu0 0.0
        %3031 = vmatprep.subr.mxu0 0.0
        %3032 = vmatpush1.msra.mxu0 0.0
        %3033 = vmatprep.subr.mxu0 0.0
        %3034 = vmatpush1.msra.mxu0 0.0
        %3035 = vmatprep.subr.mxu0 0.0
        %3036 = vmatpush1.msra.mxu0 0.0
        %3037 = vmatprep.subr.mxu0 0.0
        %3038 = vmatpush1.msra.mxu0 0.0
        %3039 = vmatprep.subr.mxu0 0.0
        %3040 = vmatpush1.msra.mxu0 0.0
        %3041 = vmatprep.subr.mxu0 0.0
        %3042 = vmatpush1.msra.mxu0 0.0
        %3043 = vmatprep.subr.mxu0 0.0
        %3044 = vmatpush1.msra.mxu0 0.0
        %3045 = vmatprep.subr.mxu0 0.0
        %3046 = vmatpush1.msra.mxu0 0.0
        %3047 = vmatprep.subr.mxu0 0.0
        %3048 = vmatpush1.msra.mxu0 0.0
        %3049 = vmatprep.subr.mxu0 0.0
        %3050 = vmatpush1.msra.mxu0 0.0
        %3051 = vmatprep.subr.mxu0 0.0
        %3052 = vmatpush1.msra.mxu0 0.0
        %3053 = vmatprep.subr.mxu0 0.0
        %3054 = vmatpush1.msra.mxu0 0.0
        %3055 = vmatprep.subr.mxu0 0.0
        %v3056 = vand.u32 %v2310, 4294901760
        %v3057 = vsub.f32 %v2310, %v3056
        %v3058 = vand.u32 %v3057, 4294901760
        %v3059 = vsub.f32 %v3057, %v3058
        %v3060 = vand.u32 %v3059, 4294901760
        %3061 = vmatpush1.msra.mxu0 %v3060
        %3062 = vmatprep.subr.mxu0 0.0
        %3063 = vmatpush2.msra.mxu0 0.0
        %3064 = vmatprep.subr.mxu0 0.0
        %3065 = vmatpush2.msra.mxu0 0.0
        %3066 = vmatprep.subr.mxu0 0.0
        %3067 = vmatpush2.msra.mxu0 0.0
        %3068 = vmatprep.subr.mxu0 0.0
        %3069 = vmatpush2.msra.mxu0 0.0
        %3070 = vmatprep.subr.mxu0 0.0
        %3071 = vmatpush2.msra.mxu0 0.0
        %3072 = vmatprep.subr.mxu0 0.0
        %3073 = vmatpush2.msra.mxu0 0.0
        %3074 = vmatprep.subr.mxu0 0.0
        %3075 = vmatpush2.msra.mxu0 0.0
        %3076 = vmatprep.subr.mxu0 0.0
        %3077 = vmatpush2.msra.mxu0 0.0
        %3078 = vmatprep.subr.mxu0 0.0
        %3079 = vmatpush2.msra.mxu0 0.0
        %3080 = vmatprep.subr.mxu0 0.0
        %3081 = vmatpush2.msra.mxu0 0.0
        %3082 = vmatprep.subr.mxu0 0.0
        %3083 = vmatpush2.msra.mxu0 0.0
        %3084 = vmatprep.subr.mxu0 0.0
        %3085 = vmatpush2.msra.mxu0 0.0
        %3086 = vmatprep.subr.mxu0 0.0
        %3087 = vmatpush2.msra.mxu0 0.0
        %3088 = vmatprep.subr.mxu0 0.0
        %3089 = vmatpush2.msra.mxu0 0.0
        %3090 = vmatprep.subr.mxu0 0.0
        %3091 = vmatpush2.msra.mxu0 0.0
        %3092 = vmatprep.subr.mxu0 0.0
        %3093 = vmatpush2.msra.mxu0 0.0
        %3094 = vmatprep.mubr.f32.mxu0 0.0
        %v3095 = vand.u32 %v2908, 4294901760
        %3096 = vmatmul.mubr.f32.gmra.mxu0 %v3095
        %v3097 = vpop.f32.mrf.mxu0
        %v3098 = vadd.f32 %v2992, %v3097
        %v3099 = vpop.f32.mrf.mxu0
        %3100 = vmatprep.mubr.f32.mxu0 0.0
        %v3101 = vand.u32 %v2911, 4294901760
        %3102 = vmatmul.mubr.f32.gmra.mxu0 %v3101
        %v3103 = vpop.f32.mrf.mxu0
        %v3104 = vadd.f32 %v3002, %v3103
        %v3105 = vpop.f32.mrf.mxu0
        %3106 = vmatprep.mubr.f32.mxu0 0.0
        %v3107 = vand.u32 %v2914, 4294901760
        %3108 = vmatmul.mubr.f32.gmra.mxu0 %v3107
        %v3109 = vpop.f32.mrf.mxu0
        %v3110 = vadd.f32 %v3012, %v3109
        %v3111 = vpop.f32.mrf.mxu0
        %3112 = vmatprep.mubr.f32.mxu0 0.0
        %v3113 = vand.u32 %v2917, 4294901760
        %3114 = vmatmul.mubr.f32.gmra.mxu0 %v3113
        %v3115 = vpop.f32.mrf.mxu0
        %v3116 = vadd.f32 %v3022, %v3115
        %v3117 = vpop.f32.mrf.mxu0
        %3118 = vdwg.mxu0
        %3119 = vmatprep.subr.mxu0 0.0
        %3120 = vmatpush1.msra.mxu0 0.0
        %3121 = vmatprep.subr.mxu0 0.0
        %3122 = vmatpush1.msra.mxu0 0.0
        %3123 = vmatprep.subr.mxu0 0.0
        %3124 = vmatpush1.msra.mxu0 0.0
        %3125 = vmatprep.subr.mxu0 0.0
        %3126 = vmatpush1.msra.mxu0 0.0
        %3127 = vmatprep.subr.mxu0 0.0
        %3128 = vmatpush1.msra.mxu0 0.0
        %3129 = vmatprep.subr.mxu0 0.0
        %3130 = vmatpush1.msra.mxu0 0.0
        %3131 = vmatprep.subr.mxu0 0.0
        %3132 = vmatpush1.msra.mxu0 0.0
        %3133 = vmatprep.subr.mxu0 0.0
        %3134 = vmatpush1.msra.mxu0 0.0
        %3135 = vmatprep.subr.mxu0 0.0
        %3136 = vmatpush1.msra.mxu0 0.0
        %3137 = vmatprep.subr.mxu0 0.0
        %3138 = vmatpush1.msra.mxu0 0.0
        %3139 = vmatprep.subr.mxu0 0.0
        %3140 = vmatpush1.msra.mxu0 0.0
        %3141 = vmatprep.subr.mxu0 0.0
        %3142 = vmatpush1.msra.mxu0 0.0
        %3143 = vmatprep.subr.mxu0 0.0
        %3144 = vmatpush1.msra.mxu0 0.0
        %3145 = vmatprep.subr.mxu0 0.0
        %3146 = vmatpush1.msra.mxu0 0.0
        %3147 = vmatprep.subr.mxu0 0.0
        %3148 = vmatpush1.msra.mxu0 0.0
        %3149 = vmatprep.subr.mxu0 0.0
        %v3150 = vand.u32 %v2310, 4294901760
        %v3151 = vsub.f32 %v2310, %v3150
        %3152 = vmatpush1.msra.mxu0 %v3151
        %3153 = vmatprep.subr.mxu0 0.0
        %3154 = vmatpush2.msra.mxu0 0.0
        %3155 = vmatprep.subr.mxu0 0.0
        %3156 = vmatpush2.msra.mxu0 0.0
        %3157 = vmatprep.subr.mxu0 0.0
        %3158 = vmatpush2.msra.mxu0 0.0
        %3159 = vmatprep.subr.mxu0 0.0
        %3160 = vmatpush2.msra.mxu0 0.0
        %3161 = vmatprep.subr.mxu0 0.0
        %3162 = vmatpush2.msra.mxu0 0.0
        %3163 = vmatprep.subr.mxu0 0.0
        %3164 = vmatpush2.msra.mxu0 0.0
        %3165 = vmatprep.subr.mxu0 0.0
        %3166 = vmatpush2.msra.mxu0 0.0
        %3167 = vmatprep.subr.mxu0 0.0
        %3168 = vmatpush2.msra.mxu0 0.0
        %3169 = vmatprep.subr.mxu0 0.0
        %3170 = vmatpush2.msra.mxu0 0.0
        %3171 = vmatprep.subr.mxu0 0.0
        %3172 = vmatpush2.msra.mxu0 0.0
        %3173 = vmatprep.subr.mxu0 0.0
        %3174 = vmatpush2.msra.mxu0 0.0
        %3175 = vmatprep.subr.mxu0 0.0
        %3176 = vmatpush2.msra.mxu0 0.0
        %3177 = vmatprep.subr.mxu0 0.0
        %3178 = vmatpush2.msra.mxu0 0.0
        %3179 = vmatprep.subr.mxu0 0.0
        %3180 = vmatpush2.msra.mxu0 0.0
        %3181 = vmatprep.subr.mxu0 0.0
        %3182 = vmatpush2.msra.mxu0 0.0
        %3183 = vmatprep.subr.mxu0 0.0
        %3184 = vmatpush2.msra.mxu0 0.0
        %3185 = vmatprep.mubr.f32.mxu0 0.0
        %v3186 = vand.u32 %v2908, 4294901760
        %v3187 = vsub.f32 %v2908, %v3186
        %3188 = vmatmul.mubr.f32.gmra.mxu0 %v3187
        %v3189 = vpop.f32.mrf.mxu0
        %v3190 = vadd.f32 %v3098, %v3189
        %v3191 = vpop.f32.mrf.mxu0
        %3192 = vmatprep.mubr.f32.mxu0 0.0
        %v3193 = vand.u32 %v2911, 4294901760
        %v3194 = vsub.f32 %v2911, %v3193
        %3195 = vmatmul.mubr.f32.gmra.mxu0 %v3194
        %v3196 = vpop.f32.mrf.mxu0
        %v3197 = vadd.f32 %v3104, %v3196
        %v3198 = vpop.f32.mrf.mxu0
        %3199 = vmatprep.mubr.f32.mxu0 0.0
        %v3200 = vand.u32 %v2914, 4294901760
        %v3201 = vsub.f32 %v2914, %v3200
        %3202 = vmatmul.mubr.f32.gmra.mxu0 %v3201
        %v3203 = vpop.f32.mrf.mxu0
        %v3204 = vadd.f32 %v3110, %v3203
        %v3205 = vpop.f32.mrf.mxu0
        %3206 = vmatprep.mubr.f32.mxu0 0.0
        %v3207 = vand.u32 %v2917, 4294901760
        %v3208 = vsub.f32 %v2917, %v3207
        %3209 = vmatmul.mubr.f32.gmra.mxu0 %v3208
        %v3210 = vpop.f32.mrf.mxu0
        %v3211 = vadd.f32 %v3116, %v3210
        %v3212 = vpop.f32.mrf.mxu0
        %3213 = vdwg.mxu0
        %3214 = vmatprep.subr.mxu0 0.0
        %3215 = vmatpush1.msra.mxu0 0.0
        %3216 = vmatprep.subr.mxu0 0.0
        %3217 = vmatpush1.msra.mxu0 0.0
        %3218 = vmatprep.subr.mxu0 0.0
        %3219 = vmatpush1.msra.mxu0 0.0
        %3220 = vmatprep.subr.mxu0 0.0
        %3221 = vmatpush1.msra.mxu0 0.0
        %3222 = vmatprep.subr.mxu0 0.0
        %3223 = vmatpush1.msra.mxu0 0.0
        %3224 = vmatprep.subr.mxu0 0.0
        %3225 = vmatpush1.msra.mxu0 0.0
        %3226 = vmatprep.subr.mxu0 0.0
        %3227 = vmatpush1.msra.mxu0 0.0
        %3228 = vmatprep.subr.mxu0 0.0
        %3229 = vmatpush1.msra.mxu0 0.0
        %3230 = vmatprep.subr.mxu0 0.0
        %3231 = vmatpush1.msra.mxu0 0.0
        %3232 = vmatprep.subr.mxu0 0.0
        %3233 = vmatpush1.msra.mxu0 0.0
        %3234 = vmatprep.subr.mxu0 0.0
        %3235 = vmatpush1.msra.mxu0 0.0
        %3236 = vmatprep.subr.mxu0 0.0
        %3237 = vmatpush1.msra.mxu0 0.0
        %3238 = vmatprep.subr.mxu0 0.0
        %3239 = vmatpush1.msra.mxu0 0.0
        %3240 = vmatprep.subr.mxu0 0.0
        %3241 = vmatpush1.msra.mxu0 0.0
        %3242 = vmatprep.subr.mxu0 0.0
        %3243 = vmatpush1.msra.mxu0 0.0
        %3244 = vmatprep.subr.mxu0 0.0
        %v3245 = vand.u32 %v2310, 4294901760
        %3246 = vmatpush1.msra.mxu0 %v3245
        %3247 = vmatprep.subr.mxu0 0.0
        %3248 = vmatpush2.msra.mxu0 0.0
        %3249 = vmatprep.subr.mxu0 0.0
        %3250 = vmatpush2.msra.mxu0 0.0
        %3251 = vmatprep.subr.mxu0 0.0
        %3252 = vmatpush2.msra.mxu0 0.0
        %3253 = vmatprep.subr.mxu0 0.0
        %3254 = vmatpush2.msra.mxu0 0.0
        %3255 = vmatprep.subr.mxu0 0.0
        %3256 = vmatpush2.msra.mxu0 0.0
        %3257 = vmatprep.subr.mxu0 0.0
        %3258 = vmatpush2.msra.mxu0 0.0
        %3259 = vmatprep.subr.mxu0 0.0
        %3260 = vmatpush2.msra.mxu0 0.0
        %3261 = vmatprep.subr.mxu0 0.0
        %3262 = vmatpush2.msra.mxu0 0.0
        %3263 = vmatprep.subr.mxu0 0.0
        %3264 = vmatpush2.msra.mxu0 0.0
        %3265 = vmatprep.subr.mxu0 0.0
        %3266 = vmatpush2.msra.mxu0 0.0
        %3267 = vmatprep.subr.mxu0 0.0
        %3268 = vmatpush2.msra.mxu0 0.0
        %3269 = vmatprep.subr.mxu0 0.0
        %3270 = vmatpush2.msra.mxu0 0.0
        %3271 = vmatprep.subr.mxu0 0.0
        %3272 = vmatpush2.msra.mxu0 0.0
        %3273 = vmatprep.subr.mxu0 0.0
        %3274 = vmatpush2.msra.mxu0 0.0
        %3275 = vmatprep.subr.mxu0 0.0
        %3276 = vmatpush2.msra.mxu0 0.0
        %3277 = vmatprep.subr.mxu0 0.0
        %3278 = vmatpush2.msra.mxu0 0.0
        %3279 = vmatprep.mubr.f32.mxu0 0.0
        %v3280 = vand.u32 %v2908, 4294901760
        %v3281 = vsub.f32 %v2908, %v3280
        %v3282 = vand.u32 %v3281, 4294901760
        %3283 = vmatmul.mubr.f32.gmra.mxu0 %v3282
        %v3284 = vpop.f32.mrf.mxu0
        %v3285 = vadd.f32 %v3190, %v3284
        %v3286 = vpop.f32.mrf.mxu0
        %3287 = vmatprep.mubr.f32.mxu0 0.0
        %v3288 = vand.u32 %v2911, 4294901760
        %v3289 = vsub.f32 %v2911, %v3288
        %v3290 = vand.u32 %v3289, 4294901760
        %3291 = vmatmul.mubr.f32.gmra.mxu0 %v3290
        %v3292 = vpop.f32.mrf.mxu0
        %v3293 = vadd.f32 %v3197, %v3292
        %v3294 = vpop.f32.mrf.mxu0
        %3295 = vmatprep.mubr.f32.mxu0 0.0
        %v3296 = vand.u32 %v2914, 4294901760
        %v3297 = vsub.f32 %v2914, %v3296
        %v3298 = vand.u32 %v3297, 4294901760
        %3299 = vmatmul.mubr.f32.gmra.mxu0 %v3298
        %v3300 = vpop.f32.mrf.mxu0
        %v3301 = vadd.f32 %v3204, %v3300
        %v3302 = vpop.f32.mrf.mxu0
        %3303 = vmatprep.mubr.f32.mxu0 0.0
        %v3304 = vand.u32 %v2917, 4294901760
        %v3305 = vsub.f32 %v2917, %v3304
        %v3306 = vand.u32 %v3305, 4294901760
        %3307 = vmatmul.mubr.f32.gmra.mxu0 %v3306
        %v3308 = vpop.f32.mrf.mxu0
        %v3309 = vadd.f32 %v3211, %v3308
        %v3310 = vpop.f32.mrf.mxu0
        %3311 = vdwg.mxu0
        %3312 = vmatprep.subr.mxu0 0.0
        %3313 = vmatpush1.msra.mxu0 0.0
        %3314 = vmatprep.subr.mxu0 0.0
        %3315 = vmatpush1.msra.mxu0 0.0
        %3316 = vmatprep.subr.mxu0 0.0
        %3317 = vmatpush1.msra.mxu0 0.0
        %3318 = vmatprep.subr.mxu0 0.0
        %3319 = vmatpush1.msra.mxu0 0.0
        %3320 = vmatprep.subr.mxu0 0.0
        %3321 = vmatpush1.msra.mxu0 0.0
        %3322 = vmatprep.subr.mxu0 0.0
        %3323 = vmatpush1.msra.mxu0 0.0
        %3324 = vmatprep.subr.mxu0 0.0
        %3325 = vmatpush1.msra.mxu0 0.0
        %3326 = vmatprep.subr.mxu0 0.0
        %3327 = vmatpush1.msra.mxu0 0.0
        %3328 = vmatprep.subr.mxu0 0.0
        %3329 = vmatpush1.msra.mxu0 0.0
        %3330 = vmatprep.subr.mxu0 0.0
        %3331 = vmatpush1.msra.mxu0 0.0
        %3332 = vmatprep.subr.mxu0 0.0
        %3333 = vmatpush1.msra.mxu0 0.0
        %3334 = vmatprep.subr.mxu0 0.0
        %3335 = vmatpush1.msra.mxu0 0.0
        %3336 = vmatprep.subr.mxu0 0.0
        %3337 = vmatpush1.msra.mxu0 0.0
        %3338 = vmatprep.subr.mxu0 0.0
        %3339 = vmatpush1.msra.mxu0 0.0
        %3340 = vmatprep.subr.mxu0 0.0
        %3341 = vmatpush1.msra.mxu0 0.0
        %3342 = vmatprep.subr.mxu0 0.0
        %v3343 = vand.u32 %v2310, 4294901760
        %v3344 = vsub.f32 %v2310, %v3343
        %v3345 = vand.u32 %v3344, 4294901760
        %3346 = vmatpush1.msra.mxu0 %v3345
        %3347 = vmatprep.subr.mxu0 0.0
        %3348 = vmatpush2.msra.mxu0 0.0
        %3349 = vmatprep.subr.mxu0 0.0
        %3350 = vmatpush2.msra.mxu0 0.0
        %3351 = vmatprep.subr.mxu0 0.0
        %3352 = vmatpush2.msra.mxu0 0.0
        %3353 = vmatprep.subr.mxu0 0.0
        %3354 = vmatpush2.msra.mxu0 0.0
        %3355 = vmatprep.subr.mxu0 0.0
        %3356 = vmatpush2.msra.mxu0 0.0
        %3357 = vmatprep.subr.mxu0 0.0
        %3358 = vmatpush2.msra.mxu0 0.0
        %3359 = vmatprep.subr.mxu0 0.0
        %3360 = vmatpush2.msra.mxu0 0.0
        %3361 = vmatprep.subr.mxu0 0.0
        %3362 = vmatpush2.msra.mxu0 0.0
        %3363 = vmatprep.subr.mxu0 0.0
        %3364 = vmatpush2.msra.mxu0 0.0
        %3365 = vmatprep.subr.mxu0 0.0
        %3366 = vmatpush2.msra.mxu0 0.0
        %3367 = vmatprep.subr.mxu0 0.0
        %3368 = vmatpush2.msra.mxu0 0.0
        %3369 = vmatprep.subr.mxu0 0.0
        %3370 = vmatpush2.msra.mxu0 0.0
        %3371 = vmatprep.subr.mxu0 0.0
        %3372 = vmatpush2.msra.mxu0 0.0
        %3373 = vmatprep.subr.mxu0 0.0
        %3374 = vmatpush2.msra.mxu0 0.0
        %3375 = vmatprep.subr.mxu0 0.0
        %3376 = vmatpush2.msra.mxu0 0.0
        %3377 = vmatprep.subr.mxu0 0.0
        %3378 = vmatpush2.msra.mxu0 0.0
        %3379 = vmatprep.mubr.f32.mxu0 0.0
        %v3380 = vand.u32 %v2908, 4294901760
        %3381 = vmatmul.mubr.f32.gmra.mxu0 %v3380
        %v3382 = vpop.f32.mrf.mxu0
        %v3383 = vadd.f32 %v3285, %v3382
        %v3384 = vpop.f32.mrf.mxu0
        %3385 = vmatprep.mubr.f32.mxu0 0.0
        %v3386 = vand.u32 %v2911, 4294901760
        %3387 = vmatmul.mubr.f32.gmra.mxu0 %v3386
        %v3388 = vpop.f32.mrf.mxu0
        %v3389 = vadd.f32 %v3293, %v3388
        %v3390 = vpop.f32.mrf.mxu0
        %3391 = vmatprep.mubr.f32.mxu0 0.0
        %v3392 = vand.u32 %v2914, 4294901760
        %3393 = vmatmul.mubr.f32.gmra.mxu0 %v3392
        %v3394 = vpop.f32.mrf.mxu0
        %v3395 = vadd.f32 %v3301, %v3394
        %v3396 = vpop.f32.mrf.mxu0
        %3397 = vmatprep.mubr.f32.mxu0 0.0
        %v3398 = vand.u32 %v2917, 4294901760
        %3399 = vmatmul.mubr.f32.gmra.mxu0 %v3398
        %v3400 = vpop.f32.mrf.mxu0
        %v3401 = vadd.f32 %v3309, %v3400
        %v3402 = vpop.f32.mrf.mxu0
        %3403 = vdwg.mxu0
        %3404 = vmatprep.subr.mxu0 0.0
        %3405 = vmatpush1.msra.mxu0 0.0
        %3406 = vmatprep.subr.mxu0 0.0
        %3407 = vmatpush1.msra.mxu0 0.0
        %3408 = vmatprep.subr.mxu0 0.0
        %3409 = vmatpush1.msra.mxu0 0.0
        %3410 = vmatprep.subr.mxu0 0.0
        %3411 = vmatpush1.msra.mxu0 0.0
        %3412 = vmatprep.subr.mxu0 0.0
        %3413 = vmatpush1.msra.mxu0 0.0
        %3414 = vmatprep.subr.mxu0 0.0
        %3415 = vmatpush1.msra.mxu0 0.0
        %3416 = vmatprep.subr.mxu0 0.0
        %3417 = vmatpush1.msra.mxu0 0.0
        %3418 = vmatprep.subr.mxu0 0.0
        %3419 = vmatpush1.msra.mxu0 0.0
        %3420 = vmatprep.subr.mxu0 0.0
        %3421 = vmatpush1.msra.mxu0 0.0
        %3422 = vmatprep.subr.mxu0 0.0
        %3423 = vmatpush1.msra.mxu0 0.0
        %3424 = vmatprep.subr.mxu0 0.0
        %3425 = vmatpush1.msra.mxu0 0.0
        %3426 = vmatprep.subr.mxu0 0.0
        %3427 = vmatpush1.msra.mxu0 0.0
        %3428 = vmatprep.subr.mxu0 0.0
        %3429 = vmatpush1.msra.mxu0 0.0
        %3430 = vmatprep.subr.mxu0 0.0
        %3431 = vmatpush1.msra.mxu0 0.0
        %3432 = vmatprep.subr.mxu0 0.0
        %3433 = vmatpush1.msra.mxu0 0.0
        %3434 = vmatprep.subr.mxu0 0.0
        %v3435 = vand.u32 %v2310, 4294901760
        %3436 = vmatpush1.msra.mxu0 %v3435
        %3437 = vmatprep.subr.mxu0 0.0
        %3438 = vmatpush2.msra.mxu0 0.0
        %3439 = vmatprep.subr.mxu0 0.0
        %3440 = vmatpush2.msra.mxu0 0.0
        %3441 = vmatprep.subr.mxu0 0.0
        %3442 = vmatpush2.msra.mxu0 0.0
        %3443 = vmatprep.subr.mxu0 0.0
        %3444 = vmatpush2.msra.mxu0 0.0
        %3445 = vmatprep.subr.mxu0 0.0
        %3446 = vmatpush2.msra.mxu0 0.0
        %3447 = vmatprep.subr.mxu0 0.0
        %3448 = vmatpush2.msra.mxu0 0.0
        %3449 = vmatprep.subr.mxu0 0.0
        %3450 = vmatpush2.msra.mxu0 0.0
        %3451 = vmatprep.subr.mxu0 0.0
        %3452 = vmatpush2.msra.mxu0 0.0
        %3453 = vmatprep.subr.mxu0 0.0
        %3454 = vmatpush2.msra.mxu0 0.0
        %3455 = vmatprep.subr.mxu0 0.0
        %3456 = vmatpush2.msra.mxu0 0.0
        %3457 = vmatprep.subr.mxu0 0.0
        %3458 = vmatpush2.msra.mxu0 0.0
        %3459 = vmatprep.subr.mxu0 0.0
        %3460 = vmatpush2.msra.mxu0 0.0
        %3461 = vmatprep.subr.mxu0 0.0
        %3462 = vmatpush2.msra.mxu0 0.0
        %3463 = vmatprep.subr.mxu0 0.0
        %3464 = vmatpush2.msra.mxu0 0.0
        %3465 = vmatprep.subr.mxu0 0.0
        %3466 = vmatpush2.msra.mxu0 0.0
        %3467 = vmatprep.subr.mxu0 0.0
        %3468 = vmatpush2.msra.mxu0 0.0
        %3469 = vmatprep.mubr.f32.mxu0 0.0
        %v3470 = vand.u32 %v2908, 4294901760
        %3471 = vmatmul.mubr.f32.gmra.mxu0 %v3470
        %v3472 = vpop.f32.mrf.mxu0
        %v3473 = vadd.f32 %v3383, %v3472
        %v3474 = vpop.f32.mrf.mxu0
        %3475 = vmatprep.mubr.f32.mxu0 0.0
        %v3476 = vand.u32 %v2911, 4294901760
        %3477 = vmatmul.mubr.f32.gmra.mxu0 %v3476
        %v3478 = vpop.f32.mrf.mxu0
        %v3479 = vadd.f32 %v3389, %v3478
        %v3480 = vpop.f32.mrf.mxu0
        %3481 = vmatprep.mubr.f32.mxu0 0.0
        %v3482 = vand.u32 %v2914, 4294901760
        %3483 = vmatmul.mubr.f32.gmra.mxu0 %v3482
        %v3484 = vpop.f32.mrf.mxu0
        %v3485 = vadd.f32 %v3395, %v3484
        %v3486 = vpop.f32.mrf.mxu0
        %3487 = vmatprep.mubr.f32.mxu0 0.0
        %v3488 = vand.u32 %v2917, 4294901760
        %3489 = vmatmul.mubr.f32.gmra.mxu0 %v3488
        %v3490 = vpop.f32.mrf.mxu0
        %v3491 = vadd.f32 %v3401, %v3490
        %v3492 = vpop.f32.mrf.mxu0
        %3493 = vdwg.mxu0
        %3494 = vmatprep.subr.mxu0 0.0
        %3495 = vmatpush1.msra.mxu0 0.0
        %3496 = vmatprep.subr.mxu0 0.0
        %3497 = vmatpush1.msra.mxu0 0.0
        %3498 = vmatprep.subr.mxu0 0.0
        %3499 = vmatpush1.msra.mxu0 0.0
        %3500 = vmatprep.subr.mxu0 0.0
        %3501 = vmatpush1.msra.mxu0 0.0
        %3502 = vmatprep.subr.mxu0 0.0
        %3503 = vmatpush1.msra.mxu0 0.0
        %3504 = vmatprep.subr.mxu0 0.0
        %3505 = vmatpush1.msra.mxu0 0.0
        %3506 = vmatprep.subr.mxu0 0.0
        %3507 = vmatpush1.msra.mxu0 0.0
        %3508 = vmatprep.subr.mxu0 0.0
        %3509 = vmatpush1.msra.mxu0 0.0
        %3510 = vmatprep.subr.mxu0 0.0
        %3511 = vmatpush1.msra.mxu0 0.0
        %3512 = vmatprep.subr.mxu0 0.0
        %3513 = vmatpush1.msra.mxu0 0.0
        %3514 = vmatprep.subr.mxu0 0.0
        %3515 = vmatpush1.msra.mxu0 0.0
        %3516 = vmatprep.subr.mxu0 0.0
        %3517 = vmatpush1.msra.mxu0 0.0
        %3518 = vmatprep.subr.mxu0 0.0
        %3519 = vmatpush1.msra.mxu0 0.0
        %3520 = vmatprep.subr.mxu0 0.0
        %3521 = vmatpush1.msra.mxu0 0.0
        %3522 = vmatprep.subr.mxu0 0.0
        %3523 = vmatpush1.msra.mxu0 0.0
        %3524 = vmatprep.subr.mxu0 0.0
        %v3525 = vand.u32 %v1802, 4294901760
        %3526 = vmatpush1.msra.mxu0 %v3525
        %3527 = vmatprep.subr.mxu0 0.0
        %3528 = vmatpush2.msra.mxu0 0.0
        %3529 = vmatprep.subr.mxu0 0.0
        %3530 = vmatpush2.msra.mxu0 0.0
        %3531 = vmatprep.subr.mxu0 0.0
        %3532 = vmatpush2.msra.mxu0 0.0
        %3533 = vmatprep.subr.mxu0 0.0
        %3534 = vmatpush2.msra.mxu0 0.0
        %3535 = vmatprep.subr.mxu0 0.0
        %3536 = vmatpush2.msra.mxu0 0.0
        %3537 = vmatprep.subr.mxu0 0.0
        %3538 = vmatpush2.msra.mxu0 0.0
        %3539 = vmatprep.subr.mxu0 0.0
        %3540 = vmatpush2.msra.mxu0 0.0
        %3541 = vmatprep.subr.mxu0 0.0
        %3542 = vmatpush2.msra.mxu0 0.0
        %3543 = vmatprep.subr.mxu0 0.0
        %3544 = vmatpush2.msra.mxu0 0.0
        %3545 = vmatprep.subr.mxu0 0.0
        %3546 = vmatpush2.msra.mxu0 0.0
        %3547 = vmatprep.subr.mxu0 0.0
        %3548 = vmatpush2.msra.mxu0 0.0
        %3549 = vmatprep.subr.mxu0 0.0
        %3550 = vmatpush2.msra.mxu0 0.0
        %3551 = vmatprep.subr.mxu0 0.0
        %3552 = vmatpush2.msra.mxu0 0.0
        %3553 = vmatprep.subr.mxu0 0.0
        %3554 = vmatpush2.msra.mxu0 0.0
        %3555 = vmatprep.subr.mxu0 0.0
        %3556 = vmatpush2.msra.mxu0 0.0
        %3557 = vmatprep.subr.mxu0 0.0
        %3558 = vmatpush2.msra.mxu0 0.0
        %3559 = vmatprep.mubr.f32.mxu0 0.0
        %v3560 = vand.u32 %v2908, 4294901760
        %v3561 = vsub.f32 %v2908, %v3560
        %v3562 = vand.u32 %v3561, 4294901760
        %v3563 = vsub.f32 %v3561, %v3562
        %v3564 = vand.u32 %v3563, 4294901760
        %3565 = vmatmul.mubr.f32.gmra.mxu0 %v3564
        %v3566 = vpop.f32.mrf.mxu0
        %v3567 = vadd.f32 0.0, %v3566
        %v3568 = vpop.f32.mrf.mxu0
        %3569 = vmatprep.mubr.f32.mxu0 0.0
        %v3570 = vand.u32 %v2911, 4294901760
        %v3571 = vsub.f32 %v2911, %v3570
        %v3572 = vand.u32 %v3571, 4294901760
        %v3573 = vsub.f32 %v3571, %v3572
        %v3574 = vand.u32 %v3573, 4294901760
        %3575 = vmatmul.mubr.f32.gmra.mxu0 %v3574
        %v3576 = vpop.f32.mrf.mxu0
        %v3577 = vadd.f32 0.0, %v3576
        %v3578 = vpop.f32.mrf.mxu0
        %3579 = vmatprep.mubr.f32.mxu0 0.0
        %v3580 = vand.u32 %v2914, 4294901760
        %v3581 = vsub.f32 %v2914, %v3580
        %v3582 = vand.u32 %v3581, 4294901760
        %v3583 = vsub.f32 %v3581, %v3582
        %v3584 = vand.u32 %v3583, 4294901760
        %3585 = vmatmul.mubr.f32.gmra.mxu0 %v3584
        %v3586 = vpop.f32.mrf.mxu0
        %v3587 = vadd.f32 0.0, %v3586
        %v3588 = vpop.f32.mrf.mxu0
        %3589 = vmatprep.mubr.f32.mxu0 0.0
        %v3590 = vand.u32 %v2917, 4294901760
        %v3591 = vsub.f32 %v2917, %v3590
        %v3592 = vand.u32 %v3591, 4294901760
        %v3593 = vsub.f32 %v3591, %v3592
        %v3594 = vand.u32 %v3593, 4294901760
        %3595 = vmatmul.mubr.f32.gmra.mxu0 %v3594
        %v3596 = vpop.f32.mrf.mxu0
        %v3597 = vadd.f32 0.0, %v3596
        %v3598 = vpop.f32.mrf.mxu0
        %3599 = vdwg.mxu0
        %3600 = vmatprep.subr.mxu0 0.0
        %3601 = vmatpush1.msra.mxu0 0.0
        %3602 = vmatprep.subr.mxu0 0.0
        %3603 = vmatpush1.msra.mxu0 0.0
        %3604 = vmatprep.subr.mxu0 0.0
        %3605 = vmatpush1.msra.mxu0 0.0
        %3606 = vmatprep.subr.mxu0 0.0
        %3607 = vmatpush1.msra.mxu0 0.0
        %3608 = vmatprep.subr.mxu0 0.0
        %3609 = vmatpush1.msra.mxu0 0.0
        %3610 = vmatprep.subr.mxu0 0.0
        %3611 = vmatpush1.msra.mxu0 0.0
        %3612 = vmatprep.subr.mxu0 0.0
        %3613 = vmatpush1.msra.mxu0 0.0
        %3614 = vmatprep.subr.mxu0 0.0
        %3615 = vmatpush1.msra.mxu0 0.0
        %3616 = vmatprep.subr.mxu0 0.0
        %3617 = vmatpush1.msra.mxu0 0.0
        %3618 = vmatprep.subr.mxu0 0.0
        %3619 = vmatpush1.msra.mxu0 0.0
        %3620 = vmatprep.subr.mxu0 0.0
        %3621 = vmatpush1.msra.mxu0 0.0
        %3622 = vmatprep.subr.mxu0 0.0
        %3623 = vmatpush1.msra.mxu0 0.0
        %3624 = vmatprep.subr.mxu0 0.0
        %3625 = vmatpush1.msra.mxu0 0.0
        %3626 = vmatprep.subr.mxu0 0.0
        %3627 = vmatpush1.msra.mxu0 0.0
        %3628 = vmatprep.subr.mxu0 0.0
        %3629 = vmatpush1.msra.mxu0 0.0
        %3630 = vmatprep.subr.mxu0 0.0
        %v3631 = vand.u32 %v1802, 4294901760
        %v3632 = vsub.f32 %v1802, %v3631
        %v3633 = vand.u32 %v3632, 4294901760
        %v3634 = vsub.f32 %v3632, %v3633
        %v3635 = vand.u32 %v3634, 4294901760
        %3636 = vmatpush1.msra.mxu0 %v3635
        %3637 = vmatprep.subr.mxu0 0.0
        %3638 = vmatpush2.msra.mxu0 0.0
        %3639 = vmatprep.subr.mxu0 0.0
        %3640 = vmatpush2.msra.mxu0 0.0
        %3641 = vmatprep.subr.mxu0 0.0
        %3642 = vmatpush2.msra.mxu0 0.0
        %3643 = vmatprep.subr.mxu0 0.0
        %3644 = vmatpush2.msra.mxu0 0.0
        %3645 = vmatprep.subr.mxu0 0.0
        %3646 = vmatpush2.msra.mxu0 0.0
        %3647 = vmatprep.subr.mxu0 0.0
        %3648 = vmatpush2.msra.mxu0 0.0
        %3649 = vmatprep.subr.mxu0 0.0
        %3650 = vmatpush2.msra.mxu0 0.0
        %3651 = vmatprep.subr.mxu0 0.0
        %3652 = vmatpush2.msra.mxu0 0.0
        %3653 = vmatprep.subr.mxu0 0.0
        %3654 = vmatpush2.msra.mxu0 0.0
        %3655 = vmatprep.subr.mxu0 0.0
        %3656 = vmatpush2.msra.mxu0 0.0
        %3657 = vmatprep.subr.mxu0 0.0
        %3658 = vmatpush2.msra.mxu0 0.0
        %3659 = vmatprep.subr.mxu0 0.0
        %3660 = vmatpush2.msra.mxu0 0.0
        %3661 = vmatprep.subr.mxu0 0.0
        %3662 = vmatpush2.msra.mxu0 0.0
        %3663 = vmatprep.subr.mxu0 0.0
        %3664 = vmatpush2.msra.mxu0 0.0
        %3665 = vmatprep.subr.mxu0 0.0
        %3666 = vmatpush2.msra.mxu0 0.0
        %3667 = vmatprep.subr.mxu0 0.0
        %3668 = vmatpush2.msra.mxu0 0.0
        %3669 = vmatprep.mubr.f32.mxu0 0.0
        %v3670 = vand.u32 %v2908, 4294901760
        %3671 = vmatmul.mubr.f32.gmra.mxu0 %v3670
        %v3672 = vpop.f32.mrf.mxu0
        %v3673 = vadd.f32 %v3567, %v3672
        %v3674 = vpop.f32.mrf.mxu0
        %3675 = vmatprep.mubr.f32.mxu0 0.0
        %v3676 = vand.u32 %v2911, 4294901760
        %3677 = vmatmul.mubr.f32.gmra.mxu0 %v3676
        %v3678 = vpop.f32.mrf.mxu0
        %v3679 = vadd.f32 %v3577, %v3678
        %v3680 = vpop.f32.mrf.mxu0
        %3681 = vmatprep.mubr.f32.mxu0 0.0
        %v3682 = vand.u32 %v2914, 4294901760
        %3683 = vmatmul.mubr.f32.gmra.mxu0 %v3682
        %v3684 = vpop.f32.mrf.mxu0
        %v3685 = vadd.f32 %v3587, %v3684
        %v3686 = vpop.f32.mrf.mxu0
        %3687 = vmatprep.mubr.f32.mxu0 0.0
        %v3688 = vand.u32 %v2917, 4294901760
        %3689 = vmatmul.mubr.f32.gmra.mxu0 %v3688
        %v3690 = vpop.f32.mrf.mxu0
        %v3691 = vadd.f32 %v3597, %v3690
        %v3692 = vpop.f32.mrf.mxu0
        %3693 = vdwg.mxu0
        %3694 = vmatprep.subr.mxu0 0.0
        %3695 = vmatpush1.msra.mxu0 0.0
        %3696 = vmatprep.subr.mxu0 0.0
        %3697 = vmatpush1.msra.mxu0 0.0
        %3698 = vmatprep.subr.mxu0 0.0
        %3699 = vmatpush1.msra.mxu0 0.0
        %3700 = vmatprep.subr.mxu0 0.0
        %3701 = vmatpush1.msra.mxu0 0.0
        %3702 = vmatprep.subr.mxu0 0.0
        %3703 = vmatpush1.msra.mxu0 0.0
        %3704 = vmatprep.subr.mxu0 0.0
        %3705 = vmatpush1.msra.mxu0 0.0
        %3706 = vmatprep.subr.mxu0 0.0
        %3707 = vmatpush1.msra.mxu0 0.0
        %3708 = vmatprep.subr.mxu0 0.0
        %3709 = vmatpush1.msra.mxu0 0.0
        %3710 = vmatprep.subr.mxu0 0.0
        %3711 = vmatpush1.msra.mxu0 0.0
        %3712 = vmatprep.subr.mxu0 0.0
        %3713 = vmatpush1.msra.mxu0 0.0
        %3714 = vmatprep.subr.mxu0 0.0
        %3715 = vmatpush1.msra.mxu0 0.0
        %3716 = vmatprep.subr.mxu0 0.0
        %3717 = vmatpush1.msra.mxu0 0.0
        %3718 = vmatprep.subr.mxu0 0.0
        %3719 = vmatpush1.msra.mxu0 0.0
        %3720 = vmatprep.subr.mxu0 0.0
        %3721 = vmatpush1.msra.mxu0 0.0
        %3722 = vmatprep.subr.mxu0 0.0
        %3723 = vmatpush1.msra.mxu0 0.0
        %3724 = vmatprep.subr.mxu0 0.0
        %v3725 = vand.u32 %v1802, 4294901760
        %v3726 = vsub.f32 %v1802, %v3725
        %3727 = vmatpush1.msra.mxu0 %v3726
        %3728 = vmatprep.subr.mxu0 0.0
        %3729 = vmatpush2.msra.mxu0 0.0
        %3730 = vmatprep.subr.mxu0 0.0
        %3731 = vmatpush2.msra.mxu0 0.0
        %3732 = vmatprep.subr.mxu0 0.0
        %3733 = vmatpush2.msra.mxu0 0.0
        %3734 = vmatprep.subr.mxu0 0.0
        %3735 = vmatpush2.msra.mxu0 0.0
        %3736 = vmatprep.subr.mxu0 0.0
        %3737 = vmatpush2.msra.mxu0 0.0
        %3738 = vmatprep.subr.mxu0 0.0
        %3739 = vmatpush2.msra.mxu0 0.0
        %3740 = vmatprep.subr.mxu0 0.0
        %3741 = vmatpush2.msra.mxu0 0.0
        %3742 = vmatprep.subr.mxu0 0.0
        %3743 = vmatpush2.msra.mxu0 0.0
        %3744 = vmatprep.subr.mxu0 0.0
        %3745 = vmatpush2.msra.mxu0 0.0
        %3746 = vmatprep.subr.mxu0 0.0
        %3747 = vmatpush2.msra.mxu0 0.0
        %3748 = vmatprep.subr.mxu0 0.0
        %3749 = vmatpush2.msra.mxu0 0.0
        %3750 = vmatprep.subr.mxu0 0.0
        %3751 = vmatpush2.msra.mxu0 0.0
        %3752 = vmatprep.subr.mxu0 0.0
        %3753 = vmatpush2.msra.mxu0 0.0
        %3754 = vmatprep.subr.mxu0 0.0
        %3755 = vmatpush2.msra.mxu0 0.0
        %3756 = vmatprep.subr.mxu0 0.0
        %3757 = vmatpush2.msra.mxu0 0.0
        %3758 = vmatprep.subr.mxu0 0.0
        %3759 = vmatpush2.msra.mxu0 0.0
        %3760 = vmatprep.mubr.f32.mxu0 0.0
        %v3761 = vand.u32 %v2908, 4294901760
        %v3762 = vsub.f32 %v2908, %v3761
        %3763 = vmatmul.mubr.f32.gmra.mxu0 %v3762
        %v3764 = vpop.f32.mrf.mxu0
        %v3765 = vadd.f32 %v3673, %v3764
        %v3766 = vpop.f32.mrf.mxu0
        %3767 = vmatprep.mubr.f32.mxu0 0.0
        %v3768 = vand.u32 %v2911, 4294901760
        %v3769 = vsub.f32 %v2911, %v3768
        %3770 = vmatmul.mubr.f32.gmra.mxu0 %v3769
        %v3771 = vpop.f32.mrf.mxu0
        %v3772 = vadd.f32 %v3679, %v3771
        %v3773 = vpop.f32.mrf.mxu0
        %3774 = vmatprep.mubr.f32.mxu0 0.0
        %v3775 = vand.u32 %v2914, 4294901760
        %v3776 = vsub.f32 %v2914, %v3775
        %3777 = vmatmul.mubr.f32.gmra.mxu0 %v3776
        %v3778 = vpop.f32.mrf.mxu0
        %v3779 = vadd.f32 %v3685, %v3778
        %v3780 = vpop.f32.mrf.mxu0
        %3781 = vmatprep.mubr.f32.mxu0 0.0
        %v3782 = vand.u32 %v2917, 4294901760
        %v3783 = vsub.f32 %v2917, %v3782
        %3784 = vmatmul.mubr.f32.gmra.mxu0 %v3783
        %v3785 = vpop.f32.mrf.mxu0
        %v3786 = vadd.f32 %v3691, %v3785
        %v3787 = vpop.f32.mrf.mxu0
        %3788 = vdwg.mxu0
        %3789 = vmatprep.subr.mxu0 0.0
        %3790 = vmatpush1.msra.mxu0 0.0
        %3791 = vmatprep.subr.mxu0 0.0
        %3792 = vmatpush1.msra.mxu0 0.0
        %3793 = vmatprep.subr.mxu0 0.0
        %3794 = vmatpush1.msra.mxu0 0.0
        %3795 = vmatprep.subr.mxu0 0.0
        %3796 = vmatpush1.msra.mxu0 0.0
        %3797 = vmatprep.subr.mxu0 0.0
        %3798 = vmatpush1.msra.mxu0 0.0
        %3799 = vmatprep.subr.mxu0 0.0
        %3800 = vmatpush1.msra.mxu0 0.0
        %3801 = vmatprep.subr.mxu0 0.0
        %3802 = vmatpush1.msra.mxu0 0.0
        %3803 = vmatprep.subr.mxu0 0.0
        %3804 = vmatpush1.msra.mxu0 0.0
        %3805 = vmatprep.subr.mxu0 0.0
        %3806 = vmatpush1.msra.mxu0 0.0
        %3807 = vmatprep.subr.mxu0 0.0
        %3808 = vmatpush1.msra.mxu0 0.0
        %3809 = vmatprep.subr.mxu0 0.0
        %3810 = vmatpush1.msra.mxu0 0.0
        %3811 = vmatprep.subr.mxu0 0.0
        %3812 = vmatpush1.msra.mxu0 0.0
        %3813 = vmatprep.subr.mxu0 0.0
        %3814 = vmatpush1.msra.mxu0 0.0
        %3815 = vmatprep.subr.mxu0 0.0
        %3816 = vmatpush1.msra.mxu0 0.0
        %3817 = vmatprep.subr.mxu0 0.0
        %3818 = vmatpush1.msra.mxu0 0.0
        %3819 = vmatprep.subr.mxu0 0.0
        %v3820 = vand.u32 %v1802, 4294901760
        %3821 = vmatpush1.msra.mxu0 %v3820
        %3822 = vmatprep.subr.mxu0 0.0
        %3823 = vmatpush2.msra.mxu0 0.0
        %3824 = vmatprep.subr.mxu0 0.0
        %3825 = vmatpush2.msra.mxu0 0.0
        %3826 = vmatprep.subr.mxu0 0.0
        %3827 = vmatpush2.msra.mxu0 0.0
        %3828 = vmatprep.subr.mxu0 0.0
        %3829 = vmatpush2.msra.mxu0 0.0
        %3830 = vmatprep.subr.mxu0 0.0
        %3831 = vmatpush2.msra.mxu0 0.0
        %3832 = vmatprep.subr.mxu0 0.0
        %3833 = vmatpush2.msra.mxu0 0.0
        %3834 = vmatprep.subr.mxu0 0.0
        %3835 = vmatpush2.msra.mxu0 0.0
        %3836 = vmatprep.subr.mxu0 0.0
        %3837 = vmatpush2.msra.mxu0 0.0
        %3838 = vmatprep.subr.mxu0 0.0
        %3839 = vmatpush2.msra.mxu0 0.0
        %3840 = vmatprep.subr.mxu0 0.0
        %3841 = vmatpush2.msra.mxu0 0.0
        %3842 = vmatprep.subr.mxu0 0.0
        %3843 = vmatpush2.msra.mxu0 0.0
        %3844 = vmatprep.subr.mxu0 0.0
        %3845 = vmatpush2.msra.mxu0 0.0
        %3846 = vmatprep.subr.mxu0 0.0
        %3847 = vmatpush2.msra.mxu0 0.0
        %3848 = vmatprep.subr.mxu0 0.0
        %3849 = vmatpush2.msra.mxu0 0.0
        %3850 = vmatprep.subr.mxu0 0.0
        %3851 = vmatpush2.msra.mxu0 0.0
        %3852 = vmatprep.subr.mxu0 0.0
        %3853 = vmatpush2.msra.mxu0 0.0
        %3854 = vmatprep.mubr.f32.mxu0 0.0
        %v3855 = vand.u32 %v2908, 4294901760
        %v3856 = vsub.f32 %v2908, %v3855
        %v3857 = vand.u32 %v3856, 4294901760
        %3858 = vmatmul.mubr.f32.gmra.mxu0 %v3857
        %v3859 = vpop.f32.mrf.mxu0
        %v3860 = vadd.f32 %v3765, %v3859
        %v3861 = vpop.f32.mrf.mxu0
        %3862 = vmatprep.mubr.f32.mxu0 0.0
        %v3863 = vand.u32 %v2911, 4294901760
        %v3864 = vsub.f32 %v2911, %v3863
        %v3865 = vand.u32 %v3864, 4294901760
        %3866 = vmatmul.mubr.f32.gmra.mxu0 %v3865
        %v3867 = vpop.f32.mrf.mxu0
        %v3868 = vadd.f32 %v3772, %v3867
        %v3869 = vpop.f32.mrf.mxu0
        %3870 = vmatprep.mubr.f32.mxu0 0.0
        %v3871 = vand.u32 %v2914, 4294901760
        %v3872 = vsub.f32 %v2914, %v3871
        %v3873 = vand.u32 %v3872, 4294901760
        %3874 = vmatmul.mubr.f32.gmra.mxu0 %v3873
        %v3875 = vpop.f32.mrf.mxu0
        %v3876 = vadd.f32 %v3779, %v3875
        %v3877 = vpop.f32.mrf.mxu0
        %3878 = vmatprep.mubr.f32.mxu0 0.0
        %v3879 = vand.u32 %v2917, 4294901760
        %v3880 = vsub.f32 %v2917, %v3879
        %v3881 = vand.u32 %v3880, 4294901760
        %3882 = vmatmul.mubr.f32.gmra.mxu0 %v3881
        %v3883 = vpop.f32.mrf.mxu0
        %v3884 = vadd.f32 %v3786, %v3883
        %v3885 = vpop.f32.mrf.mxu0
        %3886 = vdwg.mxu0
        %3887 = vmatprep.subr.mxu0 0.0
        %3888 = vmatpush1.msra.mxu0 0.0
        %3889 = vmatprep.subr.mxu0 0.0
        %3890 = vmatpush1.msra.mxu0 0.0
        %3891 = vmatprep.subr.mxu0 0.0
        %3892 = vmatpush1.msra.mxu0 0.0
        %3893 = vmatprep.subr.mxu0 0.0
        %3894 = vmatpush1.msra.mxu0 0.0
        %3895 = vmatprep.subr.mxu0 0.0
        %3896 = vmatpush1.msra.mxu0 0.0
        %3897 = vmatprep.subr.mxu0 0.0
        %3898 = vmatpush1.msra.mxu0 0.0
        %3899 = vmatprep.subr.mxu0 0.0
        %3900 = vmatpush1.msra.mxu0 0.0
        %3901 = vmatprep.subr.mxu0 0.0
        %3902 = vmatpush1.msra.mxu0 0.0
        %3903 = vmatprep.subr.mxu0 0.0
        %3904 = vmatpush1.msra.mxu0 0.0
        %3905 = vmatprep.subr.mxu0 0.0
        %3906 = vmatpush1.msra.mxu0 0.0
        %3907 = vmatprep.subr.mxu0 0.0
        %3908 = vmatpush1.msra.mxu0 0.0
        %3909 = vmatprep.subr.mxu0 0.0
        %3910 = vmatpush1.msra.mxu0 0.0
        %3911 = vmatprep.subr.mxu0 0.0
        %3912 = vmatpush1.msra.mxu0 0.0
        %3913 = vmatprep.subr.mxu0 0.0
        %3914 = vmatpush1.msra.mxu0 0.0
        %3915 = vmatprep.subr.mxu0 0.0
        %3916 = vmatpush1.msra.mxu0 0.0
        %3917 = vmatprep.subr.mxu0 0.0
        %v3918 = vand.u32 %v1802, 4294901760
        %v3919 = vsub.f32 %v1802, %v3918
        %v3920 = vand.u32 %v3919, 4294901760
        %3921 = vmatpush1.msra.mxu0 %v3920
        %3922 = vmatprep.subr.mxu0 0.0
        %3923 = vmatpush2.msra.mxu0 0.0
        %3924 = vmatprep.subr.mxu0 0.0
        %3925 = vmatpush2.msra.mxu0 0.0
        %3926 = vmatprep.subr.mxu0 0.0
        %3927 = vmatpush2.msra.mxu0 0.0
        %3928 = vmatprep.subr.mxu0 0.0
        %3929 = vmatpush2.msra.mxu0 0.0
        %3930 = vmatprep.subr.mxu0 0.0
        %3931 = vmatpush2.msra.mxu0 0.0
        %3932 = vmatprep.subr.mxu0 0.0
        %3933 = vmatpush2.msra.mxu0 0.0
        %3934 = vmatprep.subr.mxu0 0.0
        %3935 = vmatpush2.msra.mxu0 0.0
        %3936 = vmatprep.subr.mxu0 0.0
        %3937 = vmatpush2.msra.mxu0 0.0
        %3938 = vmatprep.subr.mxu0 0.0
        %3939 = vmatpush2.msra.mxu0 0.0
        %3940 = vmatprep.subr.mxu0 0.0
        %3941 = vmatpush2.msra.mxu0 0.0
        %3942 = vmatprep.subr.mxu0 0.0
        %3943 = vmatpush2.msra.mxu0 0.0
        %3944 = vmatprep.subr.mxu0 0.0
        %3945 = vmatpush2.msra.mxu0 0.0
        %3946 = vmatprep.subr.mxu0 0.0
        %3947 = vmatpush2.msra.mxu0 0.0
        %3948 = vmatprep.subr.mxu0 0.0
        %3949 = vmatpush2.msra.mxu0 0.0
        %3950 = vmatprep.subr.mxu0 0.0
        %3951 = vmatpush2.msra.mxu0 0.0
        %3952 = vmatprep.subr.mxu0 0.0
        %3953 = vmatpush2.msra.mxu0 0.0
        %3954 = vmatprep.mubr.f32.mxu0 0.0
        %v3955 = vand.u32 %v2908, 4294901760
        %3956 = vmatmul.mubr.f32.gmra.mxu0 %v3955
        %v3957 = vpop.f32.mrf.mxu0
        %v3958 = vadd.f32 %v3860, %v3957
        %v3959 = vpop.f32.mrf.mxu0
        %3960 = vmatprep.mubr.f32.mxu0 0.0
        %v3961 = vand.u32 %v2911, 4294901760
        %3962 = vmatmul.mubr.f32.gmra.mxu0 %v3961
        %v3963 = vpop.f32.mrf.mxu0
        %v3964 = vadd.f32 %v3868, %v3963
        %v3965 = vpop.f32.mrf.mxu0
        %3966 = vmatprep.mubr.f32.mxu0 0.0
        %v3967 = vand.u32 %v2914, 4294901760
        %3968 = vmatmul.mubr.f32.gmra.mxu0 %v3967
        %v3969 = vpop.f32.mrf.mxu0
        %v3970 = vadd.f32 %v3876, %v3969
        %v3971 = vpop.f32.mrf.mxu0
        %3972 = vmatprep.mubr.f32.mxu0 0.0
        %v3973 = vand.u32 %v2917, 4294901760
        %3974 = vmatmul.mubr.f32.gmra.mxu0 %v3973
        %v3975 = vpop.f32.mrf.mxu0
        %v3976 = vadd.f32 %v3884, %v3975
        %v3977 = vpop.f32.mrf.mxu0
        %3978 = vdwg.mxu0
        %3979 = vmatprep.subr.mxu0 0.0
        %3980 = vmatpush1.msra.mxu0 0.0
        %3981 = vmatprep.subr.mxu0 0.0
        %3982 = vmatpush1.msra.mxu0 0.0
        %3983 = vmatprep.subr.mxu0 0.0
        %3984 = vmatpush1.msra.mxu0 0.0
        %3985 = vmatprep.subr.mxu0 0.0
        %3986 = vmatpush1.msra.mxu0 0.0
        %3987 = vmatprep.subr.mxu0 0.0
        %3988 = vmatpush1.msra.mxu0 0.0
        %3989 = vmatprep.subr.mxu0 0.0
        %3990 = vmatpush1.msra.mxu0 0.0
        %3991 = vmatprep.subr.mxu0 0.0
        %3992 = vmatpush1.msra.mxu0 0.0
        %3993 = vmatprep.subr.mxu0 0.0
        %3994 = vmatpush1.msra.mxu0 0.0
        %3995 = vmatprep.subr.mxu0 0.0
        %3996 = vmatpush1.msra.mxu0 0.0
        %3997 = vmatprep.subr.mxu0 0.0
        %3998 = vmatpush1.msra.mxu0 0.0
        %3999 = vmatprep.subr.mxu0 0.0
        %4000 = vmatpush1.msra.mxu0 0.0
        %4001 = vmatprep.subr.mxu0 0.0
        %4002 = vmatpush1.msra.mxu0 0.0
        %4003 = vmatprep.subr.mxu0 0.0
        %4004 = vmatpush1.msra.mxu0 0.0
        %4005 = vmatprep.subr.mxu0 0.0
        %4006 = vmatpush1.msra.mxu0 0.0
        %4007 = vmatprep.subr.mxu0 0.0
        %4008 = vmatpush1.msra.mxu0 0.0
        %4009 = vmatprep.subr.mxu0 0.0
        %v4010 = vand.u32 %v1802, 4294901760
        %4011 = vmatpush1.msra.mxu0 %v4010
        %4012 = vmatprep.subr.mxu0 0.0
        %4013 = vmatpush2.msra.mxu0 0.0
        %4014 = vmatprep.subr.mxu0 0.0
        %4015 = vmatpush2.msra.mxu0 0.0
        %4016 = vmatprep.subr.mxu0 0.0
        %4017 = vmatpush2.msra.mxu0 0.0
        %4018 = vmatprep.subr.mxu0 0.0
        %4019 = vmatpush2.msra.mxu0 0.0
        %4020 = vmatprep.subr.mxu0 0.0
        %4021 = vmatpush2.msra.mxu0 0.0
        %4022 = vmatprep.subr.mxu0 0.0
        %4023 = vmatpush2.msra.mxu0 0.0
        %4024 = vmatprep.subr.mxu0 0.0
        %4025 = vmatpush2.msra.mxu0 0.0
        %4026 = vmatprep.subr.mxu0 0.0
        %4027 = vmatpush2.msra.mxu0 0.0
        %4028 = vmatprep.subr.mxu0 0.0
        %4029 = vmatpush2.msra.mxu0 0.0
        %4030 = vmatprep.subr.mxu0 0.0
        %4031 = vmatpush2.msra.mxu0 0.0
        %4032 = vmatprep.subr.mxu0 0.0
        %4033 = vmatpush2.msra.mxu0 0.0
        %4034 = vmatprep.subr.mxu0 0.0
        %4035 = vmatpush2.msra.mxu0 0.0
        %4036 = vmatprep.subr.mxu0 0.0
        %4037 = vmatpush2.msra.mxu0 0.0
        %4038 = vmatprep.subr.mxu0 0.0
        %4039 = vmatpush2.msra.mxu0 0.0
        %4040 = vmatprep.subr.mxu0 0.0
        %4041 = vmatpush2.msra.mxu0 0.0
        %4042 = vmatprep.subr.mxu0 0.0
        %4043 = vmatpush2.msra.mxu0 0.0
        %4044 = vmatprep.mubr.f32.mxu0 0.0
        %v4045 = vand.u32 %v2908, 4294901760
        %4046 = vmatmul.mubr.f32.gmra.mxu0 %v4045
        %v4047 = vpop.f32.mrf.mxu0
        %v4048 = vadd.f32 %v3958, %v4047
        %v4049 = vpop.f32.mrf.mxu0
        %4050 = vmatprep.mubr.f32.mxu0 0.0
        %v4051 = vand.u32 %v2911, 4294901760
        %4052 = vmatmul.mubr.f32.gmra.mxu0 %v4051
        %v4053 = vpop.f32.mrf.mxu0
        %v4054 = vadd.f32 %v3964, %v4053
        %v4055 = vpop.f32.mrf.mxu0
        %4056 = vmatprep.mubr.f32.mxu0 0.0
        %v4057 = vand.u32 %v2914, 4294901760
        %4058 = vmatmul.mubr.f32.gmra.mxu0 %v4057
        %v4059 = vpop.f32.mrf.mxu0
        %v4060 = vadd.f32 %v3970, %v4059
        %v4061 = vpop.f32.mrf.mxu0
        %4062 = vmatprep.mubr.f32.mxu0 0.0
        %v4063 = vand.u32 %v2917, 4294901760
        %4064 = vmatmul.mubr.f32.gmra.mxu0 %v4063
        %v4065 = vpop.f32.mrf.mxu0
        %v4066 = vadd.f32 %v3976, %v4065
        %v4067 = vpop.f32.mrf.mxu0
        %4068 = vdwg.mxu0
        %v4069 = vrcp.pop %v3473
        %v4070 = vrcp.pop %v3479
        %v4071 = vrcp.pop %v3485
        %v4072 = vrcp.pop %v3491
        %v4073 = vmul.f32 %v4048, %v4069
        %v4074 = vmul.f32 %v4054, %v4070
        %v4075 = vmul.f32 %v4060, %v4071
        %v4076 = vmul.f32 %v4066, %v4072
        %vm4077 = vcmask 523264
        %4078 = vst.msk [vmem:[%s260] sm:$0xff] %vm4077, %v4073
        %4079 = vst.msk [vmem:[%s260 + $0x8] sm:$0xff] %vm4077, %v4074
        %4080 = vst.msk [vmem:[%s260 + $0x10] sm:$0xff] %vm4077, %v4075
        %4081 = vst.msk [vmem:[%s260 + $0x18] sm:$0xff] %vm4077, %v4076
        %4082 = vmatprep.subr.mxu0 0.0
        %4083 = vmatpush1.msra.mxu0 0.0
        %4084 = vmatprep.subr.mxu0 0.0
        %4085 = vmatpush1.msra.mxu0 0.0
        %4086 = vmatprep.subr.mxu0 0.0
        %4087 = vmatpush1.msra.mxu0 0.0
        %4088 = vmatprep.subr.mxu0 0.0
        %4089 = vmatpush1.msra.mxu0 0.0
        %4090 = vmatprep.subr.mxu0 0.0
        %4091 = vmatpush1.msra.mxu0 0.0
        %4092 = vmatprep.subr.mxu0 0.0
        %4093 = vmatpush1.msra.mxu0 0.0
        %4094 = vmatprep.subr.mxu0 0.0
        %4095 = vmatpush1.msra.mxu0 0.0
        %4096 = vmatprep.subr.mxu0 0.0
        %4097 = vmatpush1.msra.mxu0 0.0
        %4098 = vmatprep.subr.mxu0 0.0
        %4099 = vmatpush1.msra.mxu0 0.0
        %4100 = vmatprep.subr.mxu0 0.0
        %4101 = vmatpush1.msra.mxu0 0.0
        %4102 = vmatprep.subr.mxu0 0.0
        %4103 = vmatpush1.msra.mxu0 0.0
        %4104 = vmatprep.subr.mxu0 0.0
        %4105 = vmatpush1.msra.mxu0 0.0
        %4106 = vmatprep.subr.mxu0 0.0
        %4107 = vmatpush1.msra.mxu0 0.0
        %4108 = vmatprep.subr.mxu0 0.0
        %4109 = vmatpush1.msra.mxu0 0.0
        %4110 = vmatprep.subr.mxu0 0.0
        %4111 = vmatpush1.msra.mxu0 0.0
        %4112 = vmatprep.subr.mxu0 0.0
        %v4113 = vand.u32 %v792, 4294901760
        %4114 = vmatpush1.msra.mxu0 %v4113
        %4115 = vmatprep.subr.mxu0 0.0
        %4116 = vmatpush2.msra.mxu0 0.0
        %4117 = vmatprep.subr.mxu0 0.0
        %4118 = vmatpush2.msra.mxu0 0.0
        %4119 = vmatprep.subr.mxu0 0.0
        %4120 = vmatpush2.msra.mxu0 0.0
        %4121 = vmatprep.subr.mxu0 0.0
        %4122 = vmatpush2.msra.mxu0 0.0
        %4123 = vmatprep.subr.mxu0 0.0
        %4124 = vmatpush2.msra.mxu0 0.0
        %4125 = vmatprep.subr.mxu0 0.0
        %4126 = vmatpush2.msra.mxu0 0.0
        %4127 = vmatprep.subr.mxu0 0.0
        %4128 = vmatpush2.msra.mxu0 0.0
        %4129 = vmatprep.subr.mxu0 0.0
        %4130 = vmatpush2.msra.mxu0 0.0
        %4131 = vmatprep.subr.mxu0 0.0
        %4132 = vmatpush2.msra.mxu0 0.0
        %4133 = vmatprep.subr.mxu0 0.0
        %4134 = vmatpush2.msra.mxu0 0.0
        %4135 = vmatprep.subr.mxu0 0.0
        %4136 = vmatpush2.msra.mxu0 0.0
        %4137 = vmatprep.subr.mxu0 0.0
        %4138 = vmatpush2.msra.mxu0 0.0
        %4139 = vmatprep.subr.mxu0 0.0
        %4140 = vmatpush2.msra.mxu0 0.0
        %4141 = vmatprep.subr.mxu0 0.0
        %4142 = vmatpush2.msra.mxu0 0.0
        %4143 = vmatprep.subr.mxu0 0.0
        %4144 = vmatpush2.msra.mxu0 0.0
        %4145 = vmatprep.subr.mxu0 0.0
        %4146 = vmatpush2.msra.mxu0 0.0
        %4147 = vmatprep.mubr.f32.mxu0 0.0
        %v4148 = vand.u32 %v2321, 4294901760
        %v4149 = vsub.f32 %v2321, %v4148
        %v4150 = vand.u32 %v4149, 4294901760
        %v4151 = vsub.f32 %v4149, %v4150
        %v4152 = vand.u32 %v4151, 4294901760
        %4153 = vmatmul.mubr.f32.gmra.mxu0 %v4152
        %v4154 = vpop.f32.mrf.mxu0
        %v4155 = vadd.f32 0.0, %v4154
        %v4156 = vpop.f32.mrf.mxu0
        %4157 = vmatprep.mubr.f32.mxu0 0.0
        %v4158 = vand.u32 %v2324, 4294901760
        %v4159 = vsub.f32 %v2324, %v4158
        %v4160 = vand.u32 %v4159, 4294901760
        %v4161 = vsub.f32 %v4159, %v4160
        %v4162 = vand.u32 %v4161, 4294901760
        %4163 = vmatmul.mubr.f32.gmra.mxu0 %v4162
        %v4164 = vpop.f32.mrf.mxu0
        %v4165 = vadd.f32 0.0, %v4164
        %v4166 = vpop.f32.mrf.mxu0
        %4167 = vmatprep.mubr.f32.mxu0 0.0
        %v4168 = vand.u32 %v2327, 4294901760
        %v4169 = vsub.f32 %v2327, %v4168
        %v4170 = vand.u32 %v4169, 4294901760
        %v4171 = vsub.f32 %v4169, %v4170
        %v4172 = vand.u32 %v4171, 4294901760
        %4173 = vmatmul.mubr.f32.gmra.mxu0 %v4172
        %v4174 = vpop.f32.mrf.mxu0
        %v4175 = vadd.f32 0.0, %v4174
        %v4176 = vpop.f32.mrf.mxu0
        %4177 = vmatprep.mubr.f32.mxu0 0.0
        %v4178 = vand.u32 %v2330, 4294901760
        %v4179 = vsub.f32 %v2330, %v4178
        %v4180 = vand.u32 %v4179, 4294901760
        %v4181 = vsub.f32 %v4179, %v4180
        %v4182 = vand.u32 %v4181, 4294901760
        %4183 = vmatmul.mubr.f32.gmra.mxu0 %v4182
        %v4184 = vpop.f32.mrf.mxu0
        %v4185 = vadd.f32 0.0, %v4184
        %v4186 = vpop.f32.mrf.mxu0
        %4187 = vdwg.mxu0
        %4188 = vmatprep.subr.mxu0 0.0
        %4189 = vmatpush1.msra.mxu0 0.0
        %4190 = vmatprep.subr.mxu0 0.0
        %4191 = vmatpush1.msra.mxu0 0.0
        %4192 = vmatprep.subr.mxu0 0.0
        %4193 = vmatpush1.msra.mxu0 0.0
        %4194 = vmatprep.subr.mxu0 0.0
        %4195 = vmatpush1.msra.mxu0 0.0
        %4196 = vmatprep.subr.mxu0 0.0
        %4197 = vmatpush1.msra.mxu0 0.0
        %4198 = vmatprep.subr.mxu0 0.0
        %4199 = vmatpush1.msra.mxu0 0.0
        %4200 = vmatprep.subr.mxu0 0.0
        %4201 = vmatpush1.msra.mxu0 0.0
        %4202 = vmatprep.subr.mxu0 0.0
        %4203 = vmatpush1.msra.mxu0 0.0
        %4204 = vmatprep.subr.mxu0 0.0
        %4205 = vmatpush1.msra.mxu0 0.0
        %4206 = vmatprep.subr.mxu0 0.0
        %4207 = vmatpush1.msra.mxu0 0.0
        %4208 = vmatprep.subr.mxu0 0.0
        %4209 = vmatpush1.msra.mxu0 0.0
        %4210 = vmatprep.subr.mxu0 0.0
        %4211 = vmatpush1.msra.mxu0 0.0
        %4212 = vmatprep.subr.mxu0 0.0
        %4213 = vmatpush1.msra.mxu0 0.0
        %4214 = vmatprep.subr.mxu0 0.0
        %4215 = vmatpush1.msra.mxu0 0.0
        %4216 = vmatprep.subr.mxu0 0.0
        %4217 = vmatpush1.msra.mxu0 0.0
        %4218 = vmatprep.subr.mxu0 0.0
        %v4219 = vand.u32 %v792, 4294901760
        %v4220 = vsub.f32 %v792, %v4219
        %v4221 = vand.u32 %v4220, 4294901760
        %v4222 = vsub.f32 %v4220, %v4221
        %v4223 = vand.u32 %v4222, 4294901760
        %4224 = vmatpush1.msra.mxu0 %v4223
        %4225 = vmatprep.subr.mxu0 0.0
        %4226 = vmatpush2.msra.mxu0 0.0
        %4227 = vmatprep.subr.mxu0 0.0
        %4228 = vmatpush2.msra.mxu0 0.0
        %4229 = vmatprep.subr.mxu0 0.0
        %4230 = vmatpush2.msra.mxu0 0.0
        %4231 = vmatprep.subr.mxu0 0.0
        %4232 = vmatpush2.msra.mxu0 0.0
        %4233 = vmatprep.subr.mxu0 0.0
        %4234 = vmatpush2.msra.mxu0 0.0
        %4235 = vmatprep.subr.mxu0 0.0
        %4236 = vmatpush2.msra.mxu0 0.0
        %4237 = vmatprep.subr.mxu0 0.0
        %4238 = vmatpush2.msra.mxu0 0.0
        %4239 = vmatprep.subr.mxu0 0.0
        %4240 = vmatpush2.msra.mxu0 0.0
        %4241 = vmatprep.subr.mxu0 0.0
        %4242 = vmatpush2.msra.mxu0 0.0
        %4243 = vmatprep.subr.mxu0 0.0
        %4244 = vmatpush2.msra.mxu0 0.0
        %4245 = vmatprep.subr.mxu0 0.0
        %4246 = vmatpush2.msra.mxu0 0.0
        %4247 = vmatprep.subr.mxu0 0.0
        %4248 = vmatpush2.msra.mxu0 0.0
        %4249 = vmatprep.subr.mxu0 0.0
        %4250 = vmatpush2.msra.mxu0 0.0
        %4251 = vmatprep.subr.mxu0 0.0
        %4252 = vmatpush2.msra.mxu0 0.0
        %4253 = vmatprep.subr.mxu0 0.0
        %4254 = vmatpush2.msra.mxu0 0.0
        %4255 = vmatprep.subr.mxu0 0.0
        %4256 = vmatpush2.msra.mxu0 0.0
        %4257 = vmatprep.mubr.f32.mxu0 0.0
        %v4258 = vand.u32 %v2321, 4294901760
        %4259 = vmatmul.mubr.f32.gmra.mxu0 %v4258
        %v4260 = vpop.f32.mrf.mxu0
        %v4261 = vadd.f32 %v4155, %v4260
        %v4262 = vpop.f32.mrf.mxu0
        %4263 = vmatprep.mubr.f32.mxu0 0.0
        %v4264 = vand.u32 %v2324, 4294901760
        %4265 = vmatmul.mubr.f32.gmra.mxu0 %v4264
        %v4266 = vpop.f32.mrf.mxu0
        %v4267 = vadd.f32 %v4165, %v4266
        %v4268 = vpop.f32.mrf.mxu0
        %4269 = vmatprep.mubr.f32.mxu0 0.0
        %v4270 = vand.u32 %v2327, 4294901760
        %4271 = vmatmul.mubr.f32.gmra.mxu0 %v4270
        %v4272 = vpop.f32.mrf.mxu0
        %v4273 = vadd.f32 %v4175, %v4272
        %v4274 = vpop.f32.mrf.mxu0
        %4275 = vmatprep.mubr.f32.mxu0 0.0
        %v4276 = vand.u32 %v2330, 4294901760
        %4277 = vmatmul.mubr.f32.gmra.mxu0 %v4276
        %v4278 = vpop.f32.mrf.mxu0
        %v4279 = vadd.f32 %v4185, %v4278
        %v4280 = vpop.f32.mrf.mxu0
        %4281 = vdwg.mxu0
        %4282 = vmatprep.subr.mxu0 0.0
        %4283 = vmatpush1.msra.mxu0 0.0
        %4284 = vmatprep.subr.mxu0 0.0
        %4285 = vmatpush1.msra.mxu0 0.0
        %4286 = vmatprep.subr.mxu0 0.0
        %4287 = vmatpush1.msra.mxu0 0.0
        %4288 = vmatprep.subr.mxu0 0.0
        %4289 = vmatpush1.msra.mxu0 0.0
        %4290 = vmatprep.subr.mxu0 0.0
        %4291 = vmatpush1.msra.mxu0 0.0
        %4292 = vmatprep.subr.mxu0 0.0
        %4293 = vmatpush1.msra.mxu0 0.0
        %4294 = vmatprep.subr.mxu0 0.0
        %4295 = vmatpush1.msra.mxu0 0.0
        %4296 = vmatprep.subr.mxu0 0.0
        %4297 = vmatpush1.msra.mxu0 0.0
        %4298 = vmatprep.subr.mxu0 0.0
        %4299 = vmatpush1.msra.mxu0 0.0
        %4300 = vmatprep.subr.mxu0 0.0
        %4301 = vmatpush1.msra.mxu0 0.0
        %4302 = vmatprep.subr.mxu0 0.0
        %4303 = vmatpush1.msra.mxu0 0.0
        %4304 = vmatprep.subr.mxu0 0.0
        %4305 = vmatpush1.msra.mxu0 0.0
        %4306 = vmatprep.subr.mxu0 0.0
        %4307 = vmatpush1.msra.mxu0 0.0
        %4308 = vmatprep.subr.mxu0 0.0
        %4309 = vmatpush1.msra.mxu0 0.0
        %4310 = vmatprep.subr.mxu0 0.0
        %4311 = vmatpush1.msra.mxu0 0.0
        %4312 = vmatprep.subr.mxu0 0.0
        %v4313 = vand.u32 %v792, 4294901760
        %v4314 = vsub.f32 %v792, %v4313
        %4315 = vmatpush1.msra.mxu0 %v4314
        %4316 = vmatprep.subr.mxu0 0.0
        %4317 = vmatpush2.msra.mxu0 0.0
        %4318 = vmatprep.subr.mxu0 0.0
        %4319 = vmatpush2.msra.mxu0 0.0
        %4320 = vmatprep.subr.mxu0 0.0
        %4321 = vmatpush2.msra.mxu0 0.0
        %4322 = vmatprep.subr.mxu0 0.0
        %4323 = vmatpush2.msra.mxu0 0.0
        %4324 = vmatprep.subr.mxu0 0.0
        %4325 = vmatpush2.msra.mxu0 0.0
        %4326 = vmatprep.subr.mxu0 0.0
        %4327 = vmatpush2.msra.mxu0 0.0
        %4328 = vmatprep.subr.mxu0 0.0
        %4329 = vmatpush2.msra.mxu0 0.0
        %4330 = vmatprep.subr.mxu0 0.0
        %4331 = vmatpush2.msra.mxu0 0.0
        %4332 = vmatprep.subr.mxu0 0.0
        %4333 = vmatpush2.msra.mxu0 0.0
        %4334 = vmatprep.subr.mxu0 0.0
        %4335 = vmatpush2.msra.mxu0 0.0
        %4336 = vmatprep.subr.mxu0 0.0
        %4337 = vmatpush2.msra.mxu0 0.0
        %4338 = vmatprep.subr.mxu0 0.0
        %4339 = vmatpush2.msra.mxu0 0.0
        %4340 = vmatprep.subr.mxu0 0.0
        %4341 = vmatpush2.msra.mxu0 0.0
        %4342 = vmatprep.subr.mxu0 0.0
        %4343 = vmatpush2.msra.mxu0 0.0
        %4344 = vmatprep.subr.mxu0 0.0
        %4345 = vmatpush2.msra.mxu0 0.0
        %4346 = vmatprep.subr.mxu0 0.0
        %4347 = vmatpush2.msra.mxu0 0.0
        %4348 = vmatprep.mubr.f32.mxu0 0.0
        %v4349 = vand.u32 %v2321, 4294901760
        %v4350 = vsub.f32 %v2321, %v4349
        %4351 = vmatmul.mubr.f32.gmra.mxu0 %v4350
        %v4352 = vpop.f32.mrf.mxu0
        %v4353 = vadd.f32 %v4261, %v4352
        %v4354 = vpop.f32.mrf.mxu0
        %4355 = vmatprep.mubr.f32.mxu0 0.0
        %v4356 = vand.u32 %v2324, 4294901760
        %v4357 = vsub.f32 %v2324, %v4356
        %4358 = vmatmul.mubr.f32.gmra.mxu0 %v4357
        %v4359 = vpop.f32.mrf.mxu0
        %v4360 = vadd.f32 %v4267, %v4359
        %v4361 = vpop.f32.mrf.mxu0
        %4362 = vmatprep.mubr.f32.mxu0 0.0
        %v4363 = vand.u32 %v2327, 4294901760
        %v4364 = vsub.f32 %v2327, %v4363
        %4365 = vmatmul.mubr.f32.gmra.mxu0 %v4364
        %v4366 = vpop.f32.mrf.mxu0
        %v4367 = vadd.f32 %v4273, %v4366
        %v4368 = vpop.f32.mrf.mxu0
        %4369 = vmatprep.mubr.f32.mxu0 0.0
        %v4370 = vand.u32 %v2330, 4294901760
        %v4371 = vsub.f32 %v2330, %v4370
        %4372 = vmatmul.mubr.f32.gmra.mxu0 %v4371
        %v4373 = vpop.f32.mrf.mxu0
        %v4374 = vadd.f32 %v4279, %v4373
        %v4375 = vpop.f32.mrf.mxu0
        %4376 = vdwg.mxu0
        %4377 = vmatprep.subr.mxu0 0.0
        %4378 = vmatpush1.msra.mxu0 0.0
        %4379 = vmatprep.subr.mxu0 0.0
        %4380 = vmatpush1.msra.mxu0 0.0
        %4381 = vmatprep.subr.mxu0 0.0
        %4382 = vmatpush1.msra.mxu0 0.0
        %4383 = vmatprep.subr.mxu0 0.0
        %4384 = vmatpush1.msra.mxu0 0.0
        %4385 = vmatprep.subr.mxu0 0.0
        %4386 = vmatpush1.msra.mxu0 0.0
        %4387 = vmatprep.subr.mxu0 0.0
        %4388 = vmatpush1.msra.mxu0 0.0
        %4389 = vmatprep.subr.mxu0 0.0
        %4390 = vmatpush1.msra.mxu0 0.0
        %4391 = vmatprep.subr.mxu0 0.0
        %4392 = vmatpush1.msra.mxu0 0.0
        %4393 = vmatprep.subr.mxu0 0.0
        %4394 = vmatpush1.msra.mxu0 0.0
        %4395 = vmatprep.subr.mxu0 0.0
        %4396 = vmatpush1.msra.mxu0 0.0
        %4397 = vmatprep.subr.mxu0 0.0
        %4398 = vmatpush1.msra.mxu0 0.0
        %4399 = vmatprep.subr.mxu0 0.0
        %4400 = vmatpush1.msra.mxu0 0.0
        %4401 = vmatprep.subr.mxu0 0.0
        %4402 = vmatpush1.msra.mxu0 0.0
        %4403 = vmatprep.subr.mxu0 0.0
        %4404 = vmatpush1.msra.mxu0 0.0
        %4405 = vmatprep.subr.mxu0 0.0
        %4406 = vmatpush1.msra.mxu0 0.0
        %4407 = vmatprep.subr.mxu0 0.0
        %v4408 = vand.u32 %v792, 4294901760
        %4409 = vmatpush1.msra.mxu0 %v4408
        %4410 = vmatprep.subr.mxu0 0.0
        %4411 = vmatpush2.msra.mxu0 0.0
        %4412 = vmatprep.subr.mxu0 0.0
        %4413 = vmatpush2.msra.mxu0 0.0
        %4414 = vmatprep.subr.mxu0 0.0
        %4415 = vmatpush2.msra.mxu0 0.0
        %4416 = vmatprep.subr.mxu0 0.0
        %4417 = vmatpush2.msra.mxu0 0.0
        %4418 = vmatprep.subr.mxu0 0.0
        %4419 = vmatpush2.msra.mxu0 0.0
        %4420 = vmatprep.subr.mxu0 0.0
        %4421 = vmatpush2.msra.mxu0 0.0
        %4422 = vmatprep.subr.mxu0 0.0
        %4423 = vmatpush2.msra.mxu0 0.0
        %4424 = vmatprep.subr.mxu0 0.0
        %4425 = vmatpush2.msra.mxu0 0.0
        %4426 = vmatprep.subr.mxu0 0.0
        %4427 = vmatpush2.msra.mxu0 0.0
        %4428 = vmatprep.subr.mxu0 0.0
        %4429 = vmatpush2.msra.mxu0 0.0
        %4430 = vmatprep.subr.mxu0 0.0
        %4431 = vmatpush2.msra.mxu0 0.0
        %4432 = vmatprep.subr.mxu0 0.0
        %4433 = vmatpush2.msra.mxu0 0.0
        %4434 = vmatprep.subr.mxu0 0.0
        %4435 = vmatpush2.msra.mxu0 0.0
        %4436 = vmatprep.subr.mxu0 0.0
        %4437 = vmatpush2.msra.mxu0 0.0
        %4438 = vmatprep.subr.mxu0 0.0
        %4439 = vmatpush2.msra.mxu0 0.0
        %4440 = vmatprep.subr.mxu0 0.0
        %4441 = vmatpush2.msra.mxu0 0.0
        %4442 = vmatprep.mubr.f32.mxu0 0.0
        %v4443 = vand.u32 %v2321, 4294901760
        %v4444 = vsub.f32 %v2321, %v4443
        %v4445 = vand.u32 %v4444, 4294901760
        %4446 = vmatmul.mubr.f32.gmra.mxu0 %v4445
        %v4447 = vpop.f32.mrf.mxu0
        %v4448 = vadd.f32 %v4353, %v4447
        %v4449 = vpop.f32.mrf.mxu0
        %4450 = vmatprep.mubr.f32.mxu0 0.0
        %v4451 = vand.u32 %v2324, 4294901760
        %v4452 = vsub.f32 %v2324, %v4451
        %v4453 = vand.u32 %v4452, 4294901760
        %4454 = vmatmul.mubr.f32.gmra.mxu0 %v4453
        %v4455 = vpop.f32.mrf.mxu0
        %v4456 = vadd.f32 %v4360, %v4455
        %v4457 = vpop.f32.mrf.mxu0
        %4458 = vmatprep.mubr.f32.mxu0 0.0
        %v4459 = vand.u32 %v2327, 4294901760
        %v4460 = vsub.f32 %v2327, %v4459
        %v4461 = vand.u32 %v4460, 4294901760
        %4462 = vmatmul.mubr.f32.gmra.mxu0 %v4461
        %v4463 = vpop.f32.mrf.mxu0
        %v4464 = vadd.f32 %v4367, %v4463
        %v4465 = vpop.f32.mrf.mxu0
        %4466 = vmatprep.mubr.f32.mxu0 0.0
        %v4467 = vand.u32 %v2330, 4294901760
        %v4468 = vsub.f32 %v2330, %v4467
        %v4469 = vand.u32 %v4468, 4294901760
        %4470 = vmatmul.mubr.f32.gmra.mxu0 %v4469
        %v4471 = vpop.f32.mrf.mxu0
        %v4472 = vadd.f32 %v4374, %v4471
        %v4473 = vpop.f32.mrf.mxu0
        %4474 = vdwg.mxu0
        %4475 = vmatprep.subr.mxu0 0.0
        %4476 = vmatpush1.msra.mxu0 0.0
        %4477 = vmatprep.subr.mxu0 0.0
        %4478 = vmatpush1.msra.mxu0 0.0
        %4479 = vmatprep.subr.mxu0 0.0
        %4480 = vmatpush1.msra.mxu0 0.0
        %4481 = vmatprep.subr.mxu0 0.0
        %4482 = vmatpush1.msra.mxu0 0.0
        %4483 = vmatprep.subr.mxu0 0.0
        %4484 = vmatpush1.msra.mxu0 0.0
        %4485 = vmatprep.subr.mxu0 0.0
        %4486 = vmatpush1.msra.mxu0 0.0
        %4487 = vmatprep.subr.mxu0 0.0
        %4488 = vmatpush1.msra.mxu0 0.0
        %4489 = vmatprep.subr.mxu0 0.0
        %4490 = vmatpush1.msra.mxu0 0.0
        %4491 = vmatprep.subr.mxu0 0.0
        %4492 = vmatpush1.msra.mxu0 0.0
        %4493 = vmatprep.subr.mxu0 0.0
        %4494 = vmatpush1.msra.mxu0 0.0
        %4495 = vmatprep.subr.mxu0 0.0
        %4496 = vmatpush1.msra.mxu0 0.0
        %4497 = vmatprep.subr.mxu0 0.0
        %4498 = vmatpush1.msra.mxu0 0.0
        %4499 = vmatprep.subr.mxu0 0.0
        %4500 = vmatpush1.msra.mxu0 0.0
        %4501 = vmatprep.subr.mxu0 0.0
        %4502 = vmatpush1.msra.mxu0 0.0
        %4503 = vmatprep.subr.mxu0 0.0
        %4504 = vmatpush1.msra.mxu0 0.0
        %4505 = vmatprep.subr.mxu0 0.0
        %v4506 = vand.u32 %v792, 4294901760
        %v4507 = vsub.f32 %v792, %v4506
        %v4508 = vand.u32 %v4507, 4294901760
        %4509 = vmatpush1.msra.mxu0 %v4508
        %4510 = vmatprep.subr.mxu0 0.0
        %4511 = vmatpush2.msra.mxu0 0.0
        %4512 = vmatprep.subr.mxu0 0.0
        %4513 = vmatpush2.msra.mxu0 0.0
        %4514 = vmatprep.subr.mxu0 0.0
        %4515 = vmatpush2.msra.mxu0 0.0
        %4516 = vmatprep.subr.mxu0 0.0
        %4517 = vmatpush2.msra.mxu0 0.0
        %4518 = vmatprep.subr.mxu0 0.0
        %4519 = vmatpush2.msra.mxu0 0.0
        %4520 = vmatprep.subr.mxu0 0.0
        %4521 = vmatpush2.msra.mxu0 0.0
        %4522 = vmatprep.subr.mxu0 0.0
        %4523 = vmatpush2.msra.mxu0 0.0
        %4524 = vmatprep.subr.mxu0 0.0
        %4525 = vmatpush2.msra.mxu0 0.0
        %4526 = vmatprep.subr.mxu0 0.0
        %4527 = vmatpush2.msra.mxu0 0.0
        %4528 = vmatprep.subr.mxu0 0.0
        %4529 = vmatpush2.msra.mxu0 0.0
        %4530 = vmatprep.subr.mxu0 0.0
        %4531 = vmatpush2.msra.mxu0 0.0
        %4532 = vmatprep.subr.mxu0 0.0
        %4533 = vmatpush2.msra.mxu0 0.0
        %4534 = vmatprep.subr.mxu0 0.0
        %4535 = vmatpush2.msra.mxu0 0.0
        %4536 = vmatprep.subr.mxu0 0.0
        %4537 = vmatpush2.msra.mxu0 0.0
        %4538 = vmatprep.subr.mxu0 0.0
        %4539 = vmatpush2.msra.mxu0 0.0
        %4540 = vmatprep.subr.mxu0 0.0
        %4541 = vmatpush2.msra.mxu0 0.0
        %4542 = vmatprep.mubr.f32.mxu0 0.0
        %v4543 = vand.u32 %v2321, 4294901760
        %4544 = vmatmul.mubr.f32.gmra.mxu0 %v4543
        %v4545 = vpop.f32.mrf.mxu0
        %v4546 = vadd.f32 %v4448, %v4545
        %v4547 = vpop.f32.mrf.mxu0
        %4548 = vmatprep.mubr.f32.mxu0 0.0
        %v4549 = vand.u32 %v2324, 4294901760
        %4550 = vmatmul.mubr.f32.gmra.mxu0 %v4549
        %v4551 = vpop.f32.mrf.mxu0
        %v4552 = vadd.f32 %v4456, %v4551
        %v4553 = vpop.f32.mrf.mxu0
        %4554 = vmatprep.mubr.f32.mxu0 0.0
        %v4555 = vand.u32 %v2327, 4294901760
        %4556 = vmatmul.mubr.f32.gmra.mxu0 %v4555
        %v4557 = vpop.f32.mrf.mxu0
        %v4558 = vadd.f32 %v4464, %v4557
        %v4559 = vpop.f32.mrf.mxu0
        %4560 = vmatprep.mubr.f32.mxu0 0.0
        %v4561 = vand.u32 %v2330, 4294901760
        %4562 = vmatmul.mubr.f32.gmra.mxu0 %v4561
        %v4563 = vpop.f32.mrf.mxu0
        %v4564 = vadd.f32 %v4472, %v4563
        %v4565 = vpop.f32.mrf.mxu0
        %4566 = vdwg.mxu0
        %4567 = vmatprep.subr.mxu0 0.0
        %4568 = vmatpush1.msra.mxu0 0.0
        %4569 = vmatprep.subr.mxu0 0.0
        %4570 = vmatpush1.msra.mxu0 0.0
        %4571 = vmatprep.subr.mxu0 0.0
        %4572 = vmatpush1.msra.mxu0 0.0
        %4573 = vmatprep.subr.mxu0 0.0
        %4574 = vmatpush1.msra.mxu0 0.0
        %4575 = vmatprep.subr.mxu0 0.0
        %4576 = vmatpush1.msra.mxu0 0.0
        %4577 = vmatprep.subr.mxu0 0.0
        %4578 = vmatpush1.msra.mxu0 0.0
        %4579 = vmatprep.subr.mxu0 0.0
        %4580 = vmatpush1.msra.mxu0 0.0
        %4581 = vmatprep.subr.mxu0 0.0
        %4582 = vmatpush1.msra.mxu0 0.0
        %4583 = vmatprep.subr.mxu0 0.0
        %4584 = vmatpush1.msra.mxu0 0.0
        %4585 = vmatprep.subr.mxu0 0.0
        %4586 = vmatpush1.msra.mxu0 0.0
        %4587 = vmatprep.subr.mxu0 0.0
        %4588 = vmatpush1.msra.mxu0 0.0
        %4589 = vmatprep.subr.mxu0 0.0
        %4590 = vmatpush1.msra.mxu0 0.0
        %4591 = vmatprep.subr.mxu0 0.0
        %4592 = vmatpush1.msra.mxu0 0.0
        %4593 = vmatprep.subr.mxu0 0.0
        %4594 = vmatpush1.msra.mxu0 0.0
        %4595 = vmatprep.subr.mxu0 0.0
        %4596 = vmatpush1.msra.mxu0 0.0
        %4597 = vmatprep.subr.mxu0 0.0
        %v4598 = vand.u32 %v792, 4294901760
        %4599 = vmatpush1.msra.mxu0 %v4598
        %4600 = vmatprep.subr.mxu0 0.0
        %4601 = vmatpush2.msra.mxu0 0.0
        %4602 = vmatprep.subr.mxu0 0.0
        %4603 = vmatpush2.msra.mxu0 0.0
        %4604 = vmatprep.subr.mxu0 0.0
        %4605 = vmatpush2.msra.mxu0 0.0
        %4606 = vmatprep.subr.mxu0 0.0
        %4607 = vmatpush2.msra.mxu0 0.0
        %4608 = vmatprep.subr.mxu0 0.0
        %4609 = vmatpush2.msra.mxu0 0.0
        %4610 = vmatprep.subr.mxu0 0.0
        %4611 = vmatpush2.msra.mxu0 0.0
        %4612 = vmatprep.subr.mxu0 0.0
        %4613 = vmatpush2.msra.mxu0 0.0
        %4614 = vmatprep.subr.mxu0 0.0
        %4615 = vmatpush2.msra.mxu0 0.0
        %4616 = vmatprep.subr.mxu0 0.0
        %4617 = vmatpush2.msra.mxu0 0.0
        %4618 = vmatprep.subr.mxu0 0.0
        %4619 = vmatpush2.msra.mxu0 0.0
        %4620 = vmatprep.subr.mxu0 0.0
        %4621 = vmatpush2.msra.mxu0 0.0
        %4622 = vmatprep.subr.mxu0 0.0
        %4623 = vmatpush2.msra.mxu0 0.0
        %4624 = vmatprep.subr.mxu0 0.0
        %4625 = vmatpush2.msra.mxu0 0.0
        %4626 = vmatprep.subr.mxu0 0.0
        %4627 = vmatpush2.msra.mxu0 0.0
        %4628 = vmatprep.subr.mxu0 0.0
        %4629 = vmatpush2.msra.mxu0 0.0
        %4630 = vmatprep.subr.mxu0 0.0
        %4631 = vmatpush2.msra.mxu0 0.0
        %4632 = vmatprep.mubr.f32.mxu0 0.0
        %v4633 = vand.u32 %v2321, 4294901760
        %4634 = vmatmul.mubr.f32.gmra.mxu0 %v4633
        %v4635 = vpop.f32.mrf.mxu0
        %v4636 = vadd.f32 %v4546, %v4635
        %v4637 = vpop.f32.mrf.mxu0
        %4638 = vmatprep.mubr.f32.mxu0 0.0
        %v4639 = vand.u32 %v2324, 4294901760
        %4640 = vmatmul.mubr.f32.gmra.mxu0 %v4639
        %v4641 = vpop.f32.mrf.mxu0
        %v4642 = vadd.f32 %v4552, %v4641
        %v4643 = vpop.f32.mrf.mxu0
        %4644 = vmatprep.mubr.f32.mxu0 0.0
        %v4645 = vand.u32 %v2327, 4294901760
        %4646 = vmatmul.mubr.f32.gmra.mxu0 %v4645
        %v4647 = vpop.f32.mrf.mxu0
        %v4648 = vadd.f32 %v4558, %v4647
        %v4649 = vpop.f32.mrf.mxu0
        %4650 = vmatprep.mubr.f32.mxu0 0.0
        %v4651 = vand.u32 %v2330, 4294901760
        %4652 = vmatmul.mubr.f32.gmra.mxu0 %v4651
        %v4653 = vpop.f32.mrf.mxu0
        %v4654 = vadd.f32 %v4564, %v4653
        %v4655 = vpop.f32.mrf.mxu0
        %4656 = vdwg.mxu0
        %4657 = vmatprep.subr.mxu0 0.0
        %4658 = vmatpush1.msra.mxu0 0.0
        %4659 = vmatprep.subr.mxu0 0.0
        %4660 = vmatpush1.msra.mxu0 0.0
        %4661 = vmatprep.subr.mxu0 0.0
        %4662 = vmatpush1.msra.mxu0 0.0
        %4663 = vmatprep.subr.mxu0 0.0
        %4664 = vmatpush1.msra.mxu0 0.0
        %4665 = vmatprep.subr.mxu0 0.0
        %4666 = vmatpush1.msra.mxu0 0.0
        %4667 = vmatprep.subr.mxu0 0.0
        %4668 = vmatpush1.msra.mxu0 0.0
        %4669 = vmatprep.subr.mxu0 0.0
        %4670 = vmatpush1.msra.mxu0 0.0
        %4671 = vmatprep.subr.mxu0 0.0
        %4672 = vmatpush1.msra.mxu0 0.0
        %4673 = vmatprep.subr.mxu0 0.0
        %4674 = vmatpush1.msra.mxu0 0.0
        %4675 = vmatprep.subr.mxu0 0.0
        %4676 = vmatpush1.msra.mxu0 0.0
        %4677 = vmatprep.subr.mxu0 0.0
        %4678 = vmatpush1.msra.mxu0 0.0
        %4679 = vmatprep.subr.mxu0 0.0
        %4680 = vmatpush1.msra.mxu0 0.0
        %4681 = vmatprep.subr.mxu0 0.0
        %4682 = vmatpush1.msra.mxu0 0.0
        %4683 = vmatprep.subr.mxu0 0.0
        %4684 = vmatpush1.msra.mxu0 0.0
        %4685 = vmatprep.subr.mxu0 0.0
        %4686 = vmatpush1.msra.mxu0 0.0
        %4687 = vmatprep.subr.mxu0 0.0
        %v4688 = vand.u32 %v2316, 4294901760
        %4689 = vmatpush1.msra.mxu0 %v4688
        %4690 = vmatprep.subr.mxu0 0.0
        %4691 = vmatpush2.msra.mxu0 0.0
        %4692 = vmatprep.subr.mxu0 0.0
        %4693 = vmatpush2.msra.mxu0 0.0
        %4694 = vmatprep.subr.mxu0 0.0
        %4695 = vmatpush2.msra.mxu0 0.0
        %4696 = vmatprep.subr.mxu0 0.0
        %4697 = vmatpush2.msra.mxu0 0.0
        %4698 = vmatprep.subr.mxu0 0.0
        %4699 = vmatpush2.msra.mxu0 0.0
        %4700 = vmatprep.subr.mxu0 0.0
        %4701 = vmatpush2.msra.mxu0 0.0
        %4702 = vmatprep.subr.mxu0 0.0
        %4703 = vmatpush2.msra.mxu0 0.0
        %4704 = vmatprep.subr.mxu0 0.0
        %4705 = vmatpush2.msra.mxu0 0.0
        %4706 = vmatprep.subr.mxu0 0.0
        %4707 = vmatpush2.msra.mxu0 0.0
        %4708 = vmatprep.subr.mxu0 0.0
        %4709 = vmatpush2.msra.mxu0 0.0
        %4710 = vmatprep.subr.mxu0 0.0
        %4711 = vmatpush2.msra.mxu0 0.0
        %4712 = vmatprep.subr.mxu0 0.0
        %4713 = vmatpush2.msra.mxu0 0.0
        %4714 = vmatprep.subr.mxu0 0.0
        %4715 = vmatpush2.msra.mxu0 0.0
        %4716 = vmatprep.subr.mxu0 0.0
        %4717 = vmatpush2.msra.mxu0 0.0
        %4718 = vmatprep.subr.mxu0 0.0
        %4719 = vmatpush2.msra.mxu0 0.0
        %4720 = vmatprep.subr.mxu0 0.0
        %4721 = vmatpush2.msra.mxu0 0.0
        %4722 = vmatprep.mubr.f32.mxu0 0.0
        %v4723 = vand.u32 %v2908, 4294901760
        %v4724 = vsub.f32 %v2908, %v4723
        %v4725 = vand.u32 %v4724, 4294901760
        %v4726 = vsub.f32 %v4724, %v4725
        %v4727 = vand.u32 %v4726, 4294901760
        %4728 = vmatmul.mubr.f32.gmra.mxu0 %v4727
        %v4729 = vpop.f32.mrf.mxu0
        %v4730 = vadd.f32 %v4636, %v4729
        %v4731 = vpop.f32.mrf.mxu0
        %4732 = vmatprep.mubr.f32.mxu0 0.0
        %v4733 = vand.u32 %v2911, 4294901760
        %v4734 = vsub.f32 %v2911, %v4733
        %v4735 = vand.u32 %v4734, 4294901760
        %v4736 = vsub.f32 %v4734, %v4735
        %v4737 = vand.u32 %v4736, 4294901760
        %4738 = vmatmul.mubr.f32.gmra.mxu0 %v4737
        %v4739 = vpop.f32.mrf.mxu0
        %v4740 = vadd.f32 %v4642, %v4739
        %v4741 = vpop.f32.mrf.mxu0
        %4742 = vmatprep.mubr.f32.mxu0 0.0
        %v4743 = vand.u32 %v2914, 4294901760
        %v4744 = vsub.f32 %v2914, %v4743
        %v4745 = vand.u32 %v4744, 4294901760
        %v4746 = vsub.f32 %v4744, %v4745
        %v4747 = vand.u32 %v4746, 4294901760
        %4748 = vmatmul.mubr.f32.gmra.mxu0 %v4747
        %v4749 = vpop.f32.mrf.mxu0
        %v4750 = vadd.f32 %v4648, %v4749
        %v4751 = vpop.f32.mrf.mxu0
        %4752 = vmatprep.mubr.f32.mxu0 0.0
        %v4753 = vand.u32 %v2917, 4294901760
        %v4754 = vsub.f32 %v2917, %v4753
        %v4755 = vand.u32 %v4754, 4294901760
        %v4756 = vsub.f32 %v4754, %v4755
        %v4757 = vand.u32 %v4756, 4294901760
        %4758 = vmatmul.mubr.f32.gmra.mxu0 %v4757
        %v4759 = vpop.f32.mrf.mxu0
        %v4760 = vadd.f32 %v4654, %v4759
        %v4761 = vpop.f32.mrf.mxu0
        %4762 = vdwg.mxu0
        %4763 = vmatprep.subr.mxu0 0.0
        %4764 = vmatpush1.msra.mxu0 0.0
        %4765 = vmatprep.subr.mxu0 0.0
        %4766 = vmatpush1.msra.mxu0 0.0
        %4767 = vmatprep.subr.mxu0 0.0
        %4768 = vmatpush1.msra.mxu0 0.0
        %4769 = vmatprep.subr.mxu0 0.0
        %4770 = vmatpush1.msra.mxu0 0.0
        %4771 = vmatprep.subr.mxu0 0.0
        %4772 = vmatpush1.msra.mxu0 0.0
        %4773 = vmatprep.subr.mxu0 0.0
        %4774 = vmatpush1.msra.mxu0 0.0
        %4775 = vmatprep.subr.mxu0 0.0
        %4776 = vmatpush1.msra.mxu0 0.0
        %4777 = vmatprep.subr.mxu0 0.0
        %4778 = vmatpush1.msra.mxu0 0.0
        %4779 = vmatprep.subr.mxu0 0.0
        %4780 = vmatpush1.msra.mxu0 0.0
        %4781 = vmatprep.subr.mxu0 0.0
        %4782 = vmatpush1.msra.mxu0 0.0
        %4783 = vmatprep.subr.mxu0 0.0
        %4784 = vmatpush1.msra.mxu0 0.0
        %4785 = vmatprep.subr.mxu0 0.0
        %4786 = vmatpush1.msra.mxu0 0.0
        %4787 = vmatprep.subr.mxu0 0.0
        %4788 = vmatpush1.msra.mxu0 0.0
        %4789 = vmatprep.subr.mxu0 0.0
        %4790 = vmatpush1.msra.mxu0 0.0
        %4791 = vmatprep.subr.mxu0 0.0
        %4792 = vmatpush1.msra.mxu0 0.0
        %4793 = vmatprep.subr.mxu0 0.0
        %v4794 = vand.u32 %v2316, 4294901760
        %v4795 = vsub.f32 %v2316, %v4794
        %v4796 = vand.u32 %v4795, 4294901760
        %v4797 = vsub.f32 %v4795, %v4796
        %v4798 = vand.u32 %v4797, 4294901760
        %4799 = vmatpush1.msra.mxu0 %v4798
        %4800 = vmatprep.subr.mxu0 0.0
        %4801 = vmatpush2.msra.mxu0 0.0
        %4802 = vmatprep.subr.mxu0 0.0
        %4803 = vmatpush2.msra.mxu0 0.0
        %4804 = vmatprep.subr.mxu0 0.0
        %4805 = vmatpush2.msra.mxu0 0.0
        %4806 = vmatprep.subr.mxu0 0.0
        %4807 = vmatpush2.msra.mxu0 0.0
        %4808 = vmatprep.subr.mxu0 0.0
        %4809 = vmatpush2.msra.mxu0 0.0
        %4810 = vmatprep.subr.mxu0 0.0
        %4811 = vmatpush2.msra.mxu0 0.0
        %4812 = vmatprep.subr.mxu0 0.0
        %4813 = vmatpush2.msra.mxu0 0.0
        %4814 = vmatprep.subr.mxu0 0.0
        %4815 = vmatpush2.msra.mxu0 0.0
        %4816 = vmatprep.subr.mxu0 0.0
        %4817 = vmatpush2.msra.mxu0 0.0
        %4818 = vmatprep.subr.mxu0 0.0
        %4819 = vmatpush2.msra.mxu0 0.0
        %4820 = vmatprep.subr.mxu0 0.0
        %4821 = vmatpush2.msra.mxu0 0.0
        %4822 = vmatprep.subr.mxu0 0.0
        %4823 = vmatpush2.msra.mxu0 0.0
        %4824 = vmatprep.subr.mxu0 0.0
        %4825 = vmatpush2.msra.mxu0 0.0
        %4826 = vmatprep.subr.mxu0 0.0
        %4827 = vmatpush2.msra.mxu0 0.0
        %4828 = vmatprep.subr.mxu0 0.0
        %4829 = vmatpush2.msra.mxu0 0.0
        %4830 = vmatprep.subr.mxu0 0.0
        %4831 = vmatpush2.msra.mxu0 0.0
        %4832 = vmatprep.mubr.f32.mxu0 0.0
        %v4833 = vand.u32 %v2908, 4294901760
        %4834 = vmatmul.mubr.f32.gmra.mxu0 %v4833
        %v4835 = vpop.f32.mrf.mxu0
        %v4836 = vadd.f32 %v4730, %v4835
        %v4837 = vpop.f32.mrf.mxu0
        %4838 = vmatprep.mubr.f32.mxu0 0.0
        %v4839 = vand.u32 %v2911, 4294901760
        %4840 = vmatmul.mubr.f32.gmra.mxu0 %v4839
        %v4841 = vpop.f32.mrf.mxu0
        %v4842 = vadd.f32 %v4740, %v4841
        %v4843 = vpop.f32.mrf.mxu0
        %4844 = vmatprep.mubr.f32.mxu0 0.0
        %v4845 = vand.u32 %v2914, 4294901760
        %4846 = vmatmul.mubr.f32.gmra.mxu0 %v4845
        %v4847 = vpop.f32.mrf.mxu0
        %v4848 = vadd.f32 %v4750, %v4847
        %v4849 = vpop.f32.mrf.mxu0
        %4850 = vmatprep.mubr.f32.mxu0 0.0
        %v4851 = vand.u32 %v2917, 4294901760
        %4852 = vmatmul.mubr.f32.gmra.mxu0 %v4851
        %v4853 = vpop.f32.mrf.mxu0
        %v4854 = vadd.f32 %v4760, %v4853
        %v4855 = vpop.f32.mrf.mxu0
        %4856 = vdwg.mxu0
        %4857 = vmatprep.subr.mxu0 0.0
        %4858 = vmatpush1.msra.mxu0 0.0
        %4859 = vmatprep.subr.mxu0 0.0
        %4860 = vmatpush1.msra.mxu0 0.0
        %4861 = vmatprep.subr.mxu0 0.0
        %4862 = vmatpush1.msra.mxu0 0.0
        %4863 = vmatprep.subr.mxu0 0.0
        %4864 = vmatpush1.msra.mxu0 0.0
        %4865 = vmatprep.subr.mxu0 0.0
        %4866 = vmatpush1.msra.mxu0 0.0
        %4867 = vmatprep.subr.mxu0 0.0
        %4868 = vmatpush1.msra.mxu0 0.0
        %4869 = vmatprep.subr.mxu0 0.0
        %4870 = vmatpush1.msra.mxu0 0.0
        %4871 = vmatprep.subr.mxu0 0.0
        %4872 = vmatpush1.msra.mxu0 0.0
        %4873 = vmatprep.subr.mxu0 0.0
        %4874 = vmatpush1.msra.mxu0 0.0
        %4875 = vmatprep.subr.mxu0 0.0
        %4876 = vmatpush1.msra.mxu0 0.0
        %4877 = vmatprep.subr.mxu0 0.0
        %4878 = vmatpush1.msra.mxu0 0.0
        %4879 = vmatprep.subr.mxu0 0.0
        %4880 = vmatpush1.msra.mxu0 0.0
        %4881 = vmatprep.subr.mxu0 0.0
        %4882 = vmatpush1.msra.mxu0 0.0
        %4883 = vmatprep.subr.mxu0 0.0
        %4884 = vmatpush1.msra.mxu0 0.0
        %4885 = vmatprep.subr.mxu0 0.0
        %4886 = vmatpush1.msra.mxu0 0.0
        %4887 = vmatprep.subr.mxu0 0.0
        %v4888 = vand.u32 %v2316, 4294901760
        %v4889 = vsub.f32 %v2316, %v4888
        %4890 = vmatpush1.msra.mxu0 %v4889
        %4891 = vmatprep.subr.mxu0 0.0
        %4892 = vmatpush2.msra.mxu0 0.0
        %4893 = vmatprep.subr.mxu0 0.0
        %4894 = vmatpush2.msra.mxu0 0.0
        %4895 = vmatprep.subr.mxu0 0.0
        %4896 = vmatpush2.msra.mxu0 0.0
        %4897 = vmatprep.subr.mxu0 0.0
        %4898 = vmatpush2.msra.mxu0 0.0
        %4899 = vmatprep.subr.mxu0 0.0
        %4900 = vmatpush2.msra.mxu0 0.0
        %4901 = vmatprep.subr.mxu0 0.0
        %4902 = vmatpush2.msra.mxu0 0.0
        %4903 = vmatprep.subr.mxu0 0.0
        %4904 = vmatpush2.msra.mxu0 0.0
        %4905 = vmatprep.subr.mxu0 0.0
        %4906 = vmatpush2.msra.mxu0 0.0
        %4907 = vmatprep.subr.mxu0 0.0
        %4908 = vmatpush2.msra.mxu0 0.0
        %4909 = vmatprep.subr.mxu0 0.0
        %4910 = vmatpush2.msra.mxu0 0.0
        %4911 = vmatprep.subr.mxu0 0.0
        %4912 = vmatpush2.msra.mxu0 0.0
        %4913 = vmatprep.subr.mxu0 0.0
        %4914 = vmatpush2.msra.mxu0 0.0
        %4915 = vmatprep.subr.mxu0 0.0
        %4916 = vmatpush2.msra.mxu0 0.0
        %4917 = vmatprep.subr.mxu0 0.0
        %4918 = vmatpush2.msra.mxu0 0.0
        %4919 = vmatprep.subr.mxu0 0.0
        %4920 = vmatpush2.msra.mxu0 0.0
        %4921 = vmatprep.subr.mxu0 0.0
        %4922 = vmatpush2.msra.mxu0 0.0
        %4923 = vmatprep.mubr.f32.mxu0 0.0
        %v4924 = vand.u32 %v2908, 4294901760
        %v4925 = vsub.f32 %v2908, %v4924
        %4926 = vmatmul.mubr.f32.gmra.mxu0 %v4925
        %v4927 = vpop.f32.mrf.mxu0
        %v4928 = vadd.f32 %v4836, %v4927
        %v4929 = vpop.f32.mrf.mxu0
        %4930 = vmatprep.mubr.f32.mxu0 0.0
        %v4931 = vand.u32 %v2911, 4294901760
        %v4932 = vsub.f32 %v2911, %v4931
        %4933 = vmatmul.mubr.f32.gmra.mxu0 %v4932
        %v4934 = vpop.f32.mrf.mxu0
        %v4935 = vadd.f32 %v4842, %v4934
        %v4936 = vpop.f32.mrf.mxu0
        %4937 = vmatprep.mubr.f32.mxu0 0.0
        %v4938 = vand.u32 %v2914, 4294901760
        %v4939 = vsub.f32 %v2914, %v4938
        %4940 = vmatmul.mubr.f32.gmra.mxu0 %v4939
        %v4941 = vpop.f32.mrf.mxu0
        %v4942 = vadd.f32 %v4848, %v4941
        %v4943 = vpop.f32.mrf.mxu0
        %4944 = vmatprep.mubr.f32.mxu0 0.0
        %v4945 = vand.u32 %v2917, 4294901760
        %v4946 = vsub.f32 %v2917, %v4945
        %4947 = vmatmul.mubr.f32.gmra.mxu0 %v4946
        %v4948 = vpop.f32.mrf.mxu0
        %v4949 = vadd.f32 %v4854, %v4948
        %v4950 = vpop.f32.mrf.mxu0
        %4951 = vdwg.mxu0
        %4952 = vmatprep.subr.mxu0 0.0
        %4953 = vmatpush1.msra.mxu0 0.0
        %4954 = vmatprep.subr.mxu0 0.0
        %4955 = vmatpush1.msra.mxu0 0.0
        %4956 = vmatprep.subr.mxu0 0.0
        %4957 = vmatpush1.msra.mxu0 0.0
        %4958 = vmatprep.subr.mxu0 0.0
        %4959 = vmatpush1.msra.mxu0 0.0
        %4960 = vmatprep.subr.mxu0 0.0
        %4961 = vmatpush1.msra.mxu0 0.0
        %4962 = vmatprep.subr.mxu0 0.0
        %4963 = vmatpush1.msra.mxu0 0.0
        %4964 = vmatprep.subr.mxu0 0.0
        %4965 = vmatpush1.msra.mxu0 0.0
        %4966 = vmatprep.subr.mxu0 0.0
        %4967 = vmatpush1.msra.mxu0 0.0
        %4968 = vmatprep.subr.mxu0 0.0
        %4969 = vmatpush1.msra.mxu0 0.0
        %4970 = vmatprep.subr.mxu0 0.0
        %4971 = vmatpush1.msra.mxu0 0.0
        %4972 = vmatprep.subr.mxu0 0.0
        %4973 = vmatpush1.msra.mxu0 0.0
        %4974 = vmatprep.subr.mxu0 0.0
        %4975 = vmatpush1.msra.mxu0 0.0
        %4976 = vmatprep.subr.mxu0 0.0
        %4977 = vmatpush1.msra.mxu0 0.0
        %4978 = vmatprep.subr.mxu0 0.0
        %4979 = vmatpush1.msra.mxu0 0.0
        %4980 = vmatprep.subr.mxu0 0.0
        %4981 = vmatpush1.msra.mxu0 0.0
        %4982 = vmatprep.subr.mxu0 0.0
        %v4983 = vand.u32 %v2316, 4294901760
        %4984 = vmatpush1.msra.mxu0 %v4983
        %4985 = vmatprep.subr.mxu0 0.0
        %4986 = vmatpush2.msra.mxu0 0.0
        %4987 = vmatprep.subr.mxu0 0.0
        %4988 = vmatpush2.msra.mxu0 0.0
        %4989 = vmatprep.subr.mxu0 0.0
        %4990 = vmatpush2.msra.mxu0 0.0
        %4991 = vmatprep.subr.mxu0 0.0
        %4992 = vmatpush2.msra.mxu0 0.0
        %4993 = vmatprep.subr.mxu0 0.0
        %4994 = vmatpush2.msra.mxu0 0.0
        %4995 = vmatprep.subr.mxu0 0.0
        %4996 = vmatpush2.msra.mxu0 0.0
        %4997 = vmatprep.subr.mxu0 0.0
        %4998 = vmatpush2.msra.mxu0 0.0
        %4999 = vmatprep.subr.mxu0 0.0
        %5000 = vmatpush2.msra.mxu0 0.0
        %5001 = vmatprep.subr.mxu0 0.0
        %5002 = vmatpush2.msra.mxu0 0.0
        %5003 = vmatprep.subr.mxu0 0.0
        %5004 = vmatpush2.msra.mxu0 0.0
        %5005 = vmatprep.subr.mxu0 0.0
        %5006 = vmatpush2.msra.mxu0 0.0
        %5007 = vmatprep.subr.mxu0 0.0
        %5008 = vmatpush2.msra.mxu0 0.0
        %5009 = vmatprep.subr.mxu0 0.0
        %5010 = vmatpush2.msra.mxu0 0.0
        %5011 = vmatprep.subr.mxu0 0.0
        %5012 = vmatpush2.msra.mxu0 0.0
        %5013 = vmatprep.subr.mxu0 0.0
        %5014 = vmatpush2.msra.mxu0 0.0
        %5015 = vmatprep.subr.mxu0 0.0
        %5016 = vmatpush2.msra.mxu0 0.0
        %5017 = vmatprep.mubr.f32.mxu0 0.0
        %v5018 = vand.u32 %v2908, 4294901760
        %v5019 = vsub.f32 %v2908, %v5018
        %v5020 = vand.u32 %v5019, 4294901760
        %5021 = vmatmul.mubr.f32.gmra.mxu0 %v5020
        %v5022 = vpop.f32.mrf.mxu0
        %v5023 = vadd.f32 %v4928, %v5022
        %v5024 = vpop.f32.mrf.mxu0
        %5025 = vmatprep.mubr.f32.mxu0 0.0
        %v5026 = vand.u32 %v2911, 4294901760
        %v5027 = vsub.f32 %v2911, %v5026
        %v5028 = vand.u32 %v5027, 4294901760
        %5029 = vmatmul.mubr.f32.gmra.mxu0 %v5028
        %v5030 = vpop.f32.mrf.mxu0
        %v5031 = vadd.f32 %v4935, %v5030
        %v5032 = vpop.f32.mrf.mxu0
        %5033 = vmatprep.mubr.f32.mxu0 0.0
        %v5034 = vand.u32 %v2914, 4294901760
        %v5035 = vsub.f32 %v2914, %v5034
        %v5036 = vand.u32 %v5035, 4294901760
        %5037 = vmatmul.mubr.f32.gmra.mxu0 %v5036
        %v5038 = vpop.f32.mrf.mxu0
        %v5039 = vadd.f32 %v4942, %v5038
        %v5040 = vpop.f32.mrf.mxu0
        %5041 = vmatprep.mubr.f32.mxu0 0.0
        %v5042 = vand.u32 %v2917, 4294901760
        %v5043 = vsub.f32 %v2917, %v5042
        %v5044 = vand.u32 %v5043, 4294901760
        %5045 = vmatmul.mubr.f32.gmra.mxu0 %v5044
        %v5046 = vpop.f32.mrf.mxu0
        %v5047 = vadd.f32 %v4949, %v5046
        %v5048 = vpop.f32.mrf.mxu0
        %5049 = vdwg.mxu0
        %5050 = vmatprep.subr.mxu0 0.0
        %5051 = vmatpush1.msra.mxu0 0.0
        %5052 = vmatprep.subr.mxu0 0.0
        %5053 = vmatpush1.msra.mxu0 0.0
        %5054 = vmatprep.subr.mxu0 0.0
        %5055 = vmatpush1.msra.mxu0 0.0
        %5056 = vmatprep.subr.mxu0 0.0
        %5057 = vmatpush1.msra.mxu0 0.0
        %5058 = vmatprep.subr.mxu0 0.0
        %5059 = vmatpush1.msra.mxu0 0.0
        %5060 = vmatprep.subr.mxu0 0.0
        %5061 = vmatpush1.msra.mxu0 0.0
        %5062 = vmatprep.subr.mxu0 0.0
        %5063 = vmatpush1.msra.mxu0 0.0
        %5064 = vmatprep.subr.mxu0 0.0
        %5065 = vmatpush1.msra.mxu0 0.0
        %5066 = vmatprep.subr.mxu0 0.0
        %5067 = vmatpush1.msra.mxu0 0.0
        %5068 = vmatprep.subr.mxu0 0.0
        %5069 = vmatpush1.msra.mxu0 0.0
        %5070 = vmatprep.subr.mxu0 0.0
        %5071 = vmatpush1.msra.mxu0 0.0
        %5072 = vmatprep.subr.mxu0 0.0
        %5073 = vmatpush1.msra.mxu0 0.0
        %5074 = vmatprep.subr.mxu0 0.0
        %5075 = vmatpush1.msra.mxu0 0.0
        %5076 = vmatprep.subr.mxu0 0.0
        %5077 = vmatpush1.msra.mxu0 0.0
        %5078 = vmatprep.subr.mxu0 0.0
        %5079 = vmatpush1.msra.mxu0 0.0
        %5080 = vmatprep.subr.mxu0 0.0
        %v5081 = vand.u32 %v2316, 4294901760
        %v5082 = vsub.f32 %v2316, %v5081
        %v5083 = vand.u32 %v5082, 4294901760
        %5084 = vmatpush1.msra.mxu0 %v5083
        %5085 = vmatprep.subr.mxu0 0.0
        %5086 = vmatpush2.msra.mxu0 0.0
        %5087 = vmatprep.subr.mxu0 0.0
        %5088 = vmatpush2.msra.mxu0 0.0
        %5089 = vmatprep.subr.mxu0 0.0
        %5090 = vmatpush2.msra.mxu0 0.0
        %5091 = vmatprep.subr.mxu0 0.0
        %5092 = vmatpush2.msra.mxu0 0.0
        %5093 = vmatprep.subr.mxu0 0.0
        %5094 = vmatpush2.msra.mxu0 0.0
        %5095 = vmatprep.subr.mxu0 0.0
        %5096 = vmatpush2.msra.mxu0 0.0
        %5097 = vmatprep.subr.mxu0 0.0
        %5098 = vmatpush2.msra.mxu0 0.0
        %5099 = vmatprep.subr.mxu0 0.0
        %5100 = vmatpush2.msra.mxu0 0.0
        %5101 = vmatprep.subr.mxu0 0.0
        %5102 = vmatpush2.msra.mxu0 0.0
        %5103 = vmatprep.subr.mxu0 0.0
        %5104 = vmatpush2.msra.mxu0 0.0
        %5105 = vmatprep.subr.mxu0 0.0
        %5106 = vmatpush2.msra.mxu0 0.0
        %5107 = vmatprep.subr.mxu0 0.0
        %5108 = vmatpush2.msra.mxu0 0.0
        %5109 = vmatprep.subr.mxu0 0.0
        %5110 = vmatpush2.msra.mxu0 0.0
        %5111 = vmatprep.subr.mxu0 0.0
        %5112 = vmatpush2.msra.mxu0 0.0
        %5113 = vmatprep.subr.mxu0 0.0
        %5114 = vmatpush2.msra.mxu0 0.0
        %5115 = vmatprep.subr.mxu0 0.0
        %5116 = vmatpush2.msra.mxu0 0.0
        %5117 = vmatprep.mubr.f32.mxu0 0.0
        %v5118 = vand.u32 %v2908, 4294901760
        %5119 = vmatmul.mubr.f32.gmra.mxu0 %v5118
        %v5120 = vpop.f32.mrf.mxu0
        %v5121 = vadd.f32 %v5023, %v5120
        %v5122 = vpop.f32.mrf.mxu0
        %5123 = vmatprep.mubr.f32.mxu0 0.0
        %v5124 = vand.u32 %v2911, 4294901760
        %5125 = vmatmul.mubr.f32.gmra.mxu0 %v5124
        %v5126 = vpop.f32.mrf.mxu0
        %v5127 = vadd.f32 %v5031, %v5126
        %v5128 = vpop.f32.mrf.mxu0
        %5129 = vmatprep.mubr.f32.mxu0 0.0
        %v5130 = vand.u32 %v2914, 4294901760
        %5131 = vmatmul.mubr.f32.gmra.mxu0 %v5130
        %v5132 = vpop.f32.mrf.mxu0
        %v5133 = vadd.f32 %v5039, %v5132
        %v5134 = vpop.f32.mrf.mxu0
        %5135 = vmatprep.mubr.f32.mxu0 0.0
        %v5136 = vand.u32 %v2917, 4294901760
        %5137 = vmatmul.mubr.f32.gmra.mxu0 %v5136
        %v5138 = vpop.f32.mrf.mxu0
        %v5139 = vadd.f32 %v5047, %v5138
        %v5140 = vpop.f32.mrf.mxu0
        %5141 = vdwg.mxu0
        %5142 = vmatprep.subr.mxu0 0.0
        %5143 = vmatpush1.msra.mxu0 0.0
        %5144 = vmatprep.subr.mxu0 0.0
        %5145 = vmatpush1.msra.mxu0 0.0
        %5146 = vmatprep.subr.mxu0 0.0
        %5147 = vmatpush1.msra.mxu0 0.0
        %5148 = vmatprep.subr.mxu0 0.0
        %5149 = vmatpush1.msra.mxu0 0.0
        %5150 = vmatprep.subr.mxu0 0.0
        %5151 = vmatpush1.msra.mxu0 0.0
        %5152 = vmatprep.subr.mxu0 0.0
        %5153 = vmatpush1.msra.mxu0 0.0
        %5154 = vmatprep.subr.mxu0 0.0
        %5155 = vmatpush1.msra.mxu0 0.0
        %5156 = vmatprep.subr.mxu0 0.0
        %5157 = vmatpush1.msra.mxu0 0.0
        %5158 = vmatprep.subr.mxu0 0.0
        %5159 = vmatpush1.msra.mxu0 0.0
        %5160 = vmatprep.subr.mxu0 0.0
        %5161 = vmatpush1.msra.mxu0 0.0
        %5162 = vmatprep.subr.mxu0 0.0
        %5163 = vmatpush1.msra.mxu0 0.0
        %5164 = vmatprep.subr.mxu0 0.0
        %5165 = vmatpush1.msra.mxu0 0.0
        %5166 = vmatprep.subr.mxu0 0.0
        %5167 = vmatpush1.msra.mxu0 0.0
        %5168 = vmatprep.subr.mxu0 0.0
        %5169 = vmatpush1.msra.mxu0 0.0
        %5170 = vmatprep.subr.mxu0 0.0
        %5171 = vmatpush1.msra.mxu0 0.0
        %5172 = vmatprep.subr.mxu0 0.0
        %v5173 = vand.u32 %v2316, 4294901760
        %5174 = vmatpush1.msra.mxu0 %v5173
        %5175 = vmatprep.subr.mxu0 0.0
        %5176 = vmatpush2.msra.mxu0 0.0
        %5177 = vmatprep.subr.mxu0 0.0
        %5178 = vmatpush2.msra.mxu0 0.0
        %5179 = vmatprep.subr.mxu0 0.0
        %5180 = vmatpush2.msra.mxu0 0.0
        %5181 = vmatprep.subr.mxu0 0.0
        %5182 = vmatpush2.msra.mxu0 0.0
        %5183 = vmatprep.subr.mxu0 0.0
        %5184 = vmatpush2.msra.mxu0 0.0
        %5185 = vmatprep.subr.mxu0 0.0
        %5186 = vmatpush2.msra.mxu0 0.0
        %5187 = vmatprep.subr.mxu0 0.0
        %5188 = vmatpush2.msra.mxu0 0.0
        %5189 = vmatprep.subr.mxu0 0.0
        %5190 = vmatpush2.msra.mxu0 0.0
        %5191 = vmatprep.subr.mxu0 0.0
        %5192 = vmatpush2.msra.mxu0 0.0
        %5193 = vmatprep.subr.mxu0 0.0
        %5194 = vmatpush2.msra.mxu0 0.0
        %5195 = vmatprep.subr.mxu0 0.0
        %5196 = vmatpush2.msra.mxu0 0.0
        %5197 = vmatprep.subr.mxu0 0.0
        %5198 = vmatpush2.msra.mxu0 0.0
        %5199 = vmatprep.subr.mxu0 0.0
        %5200 = vmatpush2.msra.mxu0 0.0
        %5201 = vmatprep.subr.mxu0 0.0
        %5202 = vmatpush2.msra.mxu0 0.0
        %5203 = vmatprep.subr.mxu0 0.0
        %5204 = vmatpush2.msra.mxu0 0.0
        %5205 = vmatprep.subr.mxu0 0.0
        %5206 = vmatpush2.msra.mxu0 0.0
        %5207 = vmatprep.mubr.f32.mxu0 0.0
        %v5208 = vand.u32 %v2908, 4294901760
        %5209 = vmatmul.mubr.f32.gmra.mxu0 %v5208
        %v5210 = vpop.f32.mrf.mxu0
        %v5211 = vadd.f32 %v5121, %v5210
        %v5212 = vpop.f32.mrf.mxu0
        %5213 = vmatprep.mubr.f32.mxu0 0.0
        %v5214 = vand.u32 %v2911, 4294901760
        %5215 = vmatmul.mubr.f32.gmra.mxu0 %v5214
        %v5216 = vpop.f32.mrf.mxu0
        %v5217 = vadd.f32 %v5127, %v5216
        %v5218 = vpop.f32.mrf.mxu0
        %5219 = vmatprep.mubr.f32.mxu0 0.0
        %v5220 = vand.u32 %v2914, 4294901760
        %5221 = vmatmul.mubr.f32.gmra.mxu0 %v5220
        %v5222 = vpop.f32.mrf.mxu0
        %v5223 = vadd.f32 %v5133, %v5222
        %v5224 = vpop.f32.mrf.mxu0
        %5225 = vmatprep.mubr.f32.mxu0 0.0
        %v5226 = vand.u32 %v2917, 4294901760
        %5227 = vmatmul.mubr.f32.gmra.mxu0 %v5226
        %v5228 = vpop.f32.mrf.mxu0
        %v5229 = vadd.f32 %v5139, %v5228
        %v5230 = vpop.f32.mrf.mxu0
        %5231 = vdwg.mxu0
        %5232 = vmatprep.subr.mxu0 0.0
        %5233 = vmatpush1.msra.mxu0 0.0
        %5234 = vmatprep.subr.mxu0 0.0
        %5235 = vmatpush1.msra.mxu0 0.0
        %5236 = vmatprep.subr.mxu0 0.0
        %5237 = vmatpush1.msra.mxu0 0.0
        %5238 = vmatprep.subr.mxu0 0.0
        %5239 = vmatpush1.msra.mxu0 0.0
        %5240 = vmatprep.subr.mxu0 0.0
        %5241 = vmatpush1.msra.mxu0 0.0
        %5242 = vmatprep.subr.mxu0 0.0
        %5243 = vmatpush1.msra.mxu0 0.0
        %5244 = vmatprep.subr.mxu0 0.0
        %5245 = vmatpush1.msra.mxu0 0.0
        %5246 = vmatprep.subr.mxu0 0.0
        %5247 = vmatpush1.msra.mxu0 0.0
        %5248 = vmatprep.subr.mxu0 0.0
        %5249 = vmatpush1.msra.mxu0 0.0
        %5250 = vmatprep.subr.mxu0 0.0
        %5251 = vmatpush1.msra.mxu0 0.0
        %5252 = vmatprep.subr.mxu0 0.0
        %5253 = vmatpush1.msra.mxu0 0.0
        %5254 = vmatprep.subr.mxu0 0.0
        %5255 = vmatpush1.msra.mxu0 0.0
        %5256 = vmatprep.subr.mxu0 0.0
        %5257 = vmatpush1.msra.mxu0 0.0
        %5258 = vmatprep.subr.mxu0 0.0
        %5259 = vmatpush1.msra.mxu0 0.0
        %5260 = vmatprep.subr.mxu0 0.0
        %5261 = vmatpush1.msra.mxu0 0.0
        %5262 = vmatprep.subr.mxu0 0.0
        %v5263 = vand.u32 %v1808, 4294901760
        %5264 = vmatpush1.msra.mxu0 %v5263
        %5265 = vmatprep.subr.mxu0 0.0
        %5266 = vmatpush2.msra.mxu0 0.0
        %5267 = vmatprep.subr.mxu0 0.0
        %5268 = vmatpush2.msra.mxu0 0.0
        %5269 = vmatprep.subr.mxu0 0.0
        %5270 = vmatpush2.msra.mxu0 0.0
        %5271 = vmatprep.subr.mxu0 0.0
        %5272 = vmatpush2.msra.mxu0 0.0
        %5273 = vmatprep.subr.mxu0 0.0
        %5274 = vmatpush2.msra.mxu0 0.0
        %5275 = vmatprep.subr.mxu0 0.0
        %5276 = vmatpush2.msra.mxu0 0.0
        %5277 = vmatprep.subr.mxu0 0.0
        %5278 = vmatpush2.msra.mxu0 0.0
        %5279 = vmatprep.subr.mxu0 0.0
        %5280 = vmatpush2.msra.mxu0 0.0
        %5281 = vmatprep.subr.mxu0 0.0
        %5282 = vmatpush2.msra.mxu0 0.0
        %5283 = vmatprep.subr.mxu0 0.0
        %5284 = vmatpush2.msra.mxu0 0.0
        %5285 = vmatprep.subr.mxu0 0.0
        %5286 = vmatpush2.msra.mxu0 0.0
        %5287 = vmatprep.subr.mxu0 0.0
        %5288 = vmatpush2.msra.mxu0 0.0
        %5289 = vmatprep.subr.mxu0 0.0
        %5290 = vmatpush2.msra.mxu0 0.0
        %5291 = vmatprep.subr.mxu0 0.0
        %5292 = vmatpush2.msra.mxu0 0.0
        %5293 = vmatprep.subr.mxu0 0.0
        %5294 = vmatpush2.msra.mxu0 0.0
        %5295 = vmatprep.subr.mxu0 0.0
        %5296 = vmatpush2.msra.mxu0 0.0
        %5297 = vmatprep.mubr.f32.mxu0 0.0
        %v5298 = vand.u32 %v2908, 4294901760
        %v5299 = vsub.f32 %v2908, %v5298
        %v5300 = vand.u32 %v5299, 4294901760
        %v5301 = vsub.f32 %v5299, %v5300
        %v5302 = vand.u32 %v5301, 4294901760
        %5303 = vmatmul.mubr.f32.gmra.mxu0 %v5302
        %v5304 = vpop.f32.mrf.mxu0
        %v5305 = vadd.f32 0.0, %v5304
        %v5306 = vpop.f32.mrf.mxu0
        %5307 = vmatprep.mubr.f32.mxu0 0.0
        %v5308 = vand.u32 %v2911, 4294901760
        %v5309 = vsub.f32 %v2911, %v5308
        %v5310 = vand.u32 %v5309, 4294901760
        %v5311 = vsub.f32 %v5309, %v5310
        %v5312 = vand.u32 %v5311, 4294901760
        %5313 = vmatmul.mubr.f32.gmra.mxu0 %v5312
        %v5314 = vpop.f32.mrf.mxu0
        %v5315 = vadd.f32 0.0, %v5314
        %v5316 = vpop.f32.mrf.mxu0
        %5317 = vmatprep.mubr.f32.mxu0 0.0
        %v5318 = vand.u32 %v2914, 4294901760
        %v5319 = vsub.f32 %v2914, %v5318
        %v5320 = vand.u32 %v5319, 4294901760
        %v5321 = vsub.f32 %v5319, %v5320
        %v5322 = vand.u32 %v5321, 4294901760
        %5323 = vmatmul.mubr.f32.gmra.mxu0 %v5322
        %v5324 = vpop.f32.mrf.mxu0
        %v5325 = vadd.f32 0.0, %v5324
        %v5326 = vpop.f32.mrf.mxu0
        %5327 = vmatprep.mubr.f32.mxu0 0.0
        %v5328 = vand.u32 %v2917, 4294901760
        %v5329 = vsub.f32 %v2917, %v5328
        %v5330 = vand.u32 %v5329, 4294901760
        %v5331 = vsub.f32 %v5329, %v5330
        %v5332 = vand.u32 %v5331, 4294901760
        %5333 = vmatmul.mubr.f32.gmra.mxu0 %v5332
        %v5334 = vpop.f32.mrf.mxu0
        %v5335 = vadd.f32 0.0, %v5334
        %v5336 = vpop.f32.mrf.mxu0
        %5337 = vdwg.mxu0
        %5338 = vmatprep.subr.mxu0 0.0
        %5339 = vmatpush1.msra.mxu0 0.0
        %5340 = vmatprep.subr.mxu0 0.0
        %5341 = vmatpush1.msra.mxu0 0.0
        %5342 = vmatprep.subr.mxu0 0.0
        %5343 = vmatpush1.msra.mxu0 0.0
        %5344 = vmatprep.subr.mxu0 0.0
        %5345 = vmatpush1.msra.mxu0 0.0
        %5346 = vmatprep.subr.mxu0 0.0
        %5347 = vmatpush1.msra.mxu0 0.0
        %5348 = vmatprep.subr.mxu0 0.0
        %5349 = vmatpush1.msra.mxu0 0.0
        %5350 = vmatprep.subr.mxu0 0.0
        %5351 = vmatpush1.msra.mxu0 0.0
        %5352 = vmatprep.subr.mxu0 0.0
        %5353 = vmatpush1.msra.mxu0 0.0
        %5354 = vmatprep.subr.mxu0 0.0
        %5355 = vmatpush1.msra.mxu0 0.0
        %5356 = vmatprep.subr.mxu0 0.0
        %5357 = vmatpush1.msra.mxu0 0.0
        %5358 = vmatprep.subr.mxu0 0.0
        %5359 = vmatpush1.msra.mxu0 0.0
        %5360 = vmatprep.subr.mxu0 0.0
        %5361 = vmatpush1.msra.mxu0 0.0
        %5362 = vmatprep.subr.mxu0 0.0
        %5363 = vmatpush1.msra.mxu0 0.0
        %5364 = vmatprep.subr.mxu0 0.0
        %5365 = vmatpush1.msra.mxu0 0.0
        %5366 = vmatprep.subr.mxu0 0.0
        %5367 = vmatpush1.msra.mxu0 0.0
        %5368 = vmatprep.subr.mxu0 0.0
        %v5369 = vand.u32 %v1808, 4294901760
        %v5370 = vsub.f32 %v1808, %v5369
        %v5371 = vand.u32 %v5370, 4294901760
        %v5372 = vsub.f32 %v5370, %v5371
        %v5373 = vand.u32 %v5372, 4294901760
        %5374 = vmatpush1.msra.mxu0 %v5373
        %5375 = vmatprep.subr.mxu0 0.0
        %5376 = vmatpush2.msra.mxu0 0.0
        %5377 = vmatprep.subr.mxu0 0.0
        %5378 = vmatpush2.msra.mxu0 0.0
        %5379 = vmatprep.subr.mxu0 0.0
        %5380 = vmatpush2.msra.mxu0 0.0
        %5381 = vmatprep.subr.mxu0 0.0
        %5382 = vmatpush2.msra.mxu0 0.0
        %5383 = vmatprep.subr.mxu0 0.0
        %5384 = vmatpush2.msra.mxu0 0.0
        %5385 = vmatprep.subr.mxu0 0.0
        %5386 = vmatpush2.msra.mxu0 0.0
        %5387 = vmatprep.subr.mxu0 0.0
        %5388 = vmatpush2.msra.mxu0 0.0
        %5389 = vmatprep.subr.mxu0 0.0
        %5390 = vmatpush2.msra.mxu0 0.0
        %5391 = vmatprep.subr.mxu0 0.0
        %5392 = vmatpush2.msra.mxu0 0.0
        %5393 = vmatprep.subr.mxu0 0.0
        %5394 = vmatpush2.msra.mxu0 0.0
        %5395 = vmatprep.subr.mxu0 0.0
        %5396 = vmatpush2.msra.mxu0 0.0
        %5397 = vmatprep.subr.mxu0 0.0
        %5398 = vmatpush2.msra.mxu0 0.0
        %5399 = vmatprep.subr.mxu0 0.0
        %5400 = vmatpush2.msra.mxu0 0.0
        %5401 = vmatprep.subr.mxu0 0.0
        %5402 = vmatpush2.msra.mxu0 0.0
        %5403 = vmatprep.subr.mxu0 0.0
        %5404 = vmatpush2.msra.mxu0 0.0
        %5405 = vmatprep.subr.mxu0 0.0
        %5406 = vmatpush2.msra.mxu0 0.0
        %5407 = vmatprep.mubr.f32.mxu0 0.0
        %v5408 = vand.u32 %v2908, 4294901760
        %5409 = vmatmul.mubr.f32.gmra.mxu0 %v5408
        %v5410 = vpop.f32.mrf.mxu0
        %v5411 = vadd.f32 %v5305, %v5410
        %v5412 = vpop.f32.mrf.mxu0
        %5413 = vmatprep.mubr.f32.mxu0 0.0
        %v5414 = vand.u32 %v2911, 4294901760
        %5415 = vmatmul.mubr.f32.gmra.mxu0 %v5414
        %v5416 = vpop.f32.mrf.mxu0
        %v5417 = vadd.f32 %v5315, %v5416
        %v5418 = vpop.f32.mrf.mxu0
        %5419 = vmatprep.mubr.f32.mxu0 0.0
        %v5420 = vand.u32 %v2914, 4294901760
        %5421 = vmatmul.mubr.f32.gmra.mxu0 %v5420
        %v5422 = vpop.f32.mrf.mxu0
        %v5423 = vadd.f32 %v5325, %v5422
        %v5424 = vpop.f32.mrf.mxu0
        %5425 = vmatprep.mubr.f32.mxu0 0.0
        %v5426 = vand.u32 %v2917, 4294901760
        %5427 = vmatmul.mubr.f32.gmra.mxu0 %v5426
        %v5428 = vpop.f32.mrf.mxu0
        %v5429 = vadd.f32 %v5335, %v5428
        %v5430 = vpop.f32.mrf.mxu0
        %5431 = vdwg.mxu0
        %5432 = vmatprep.subr.mxu0 0.0
        %5433 = vmatpush1.msra.mxu0 0.0
        %5434 = vmatprep.subr.mxu0 0.0
        %5435 = vmatpush1.msra.mxu0 0.0
        %5436 = vmatprep.subr.mxu0 0.0
        %5437 = vmatpush1.msra.mxu0 0.0
        %5438 = vmatprep.subr.mxu0 0.0
        %5439 = vmatpush1.msra.mxu0 0.0
        %5440 = vmatprep.subr.mxu0 0.0
        %5441 = vmatpush1.msra.mxu0 0.0
        %5442 = vmatprep.subr.mxu0 0.0
        %5443 = vmatpush1.msra.mxu0 0.0
        %5444 = vmatprep.subr.mxu0 0.0
        %5445 = vmatpush1.msra.mxu0 0.0
        %5446 = vmatprep.subr.mxu0 0.0
        %5447 = vmatpush1.msra.mxu0 0.0
        %5448 = vmatprep.subr.mxu0 0.0
        %5449 = vmatpush1.msra.mxu0 0.0
        %5450 = vmatprep.subr.mxu0 0.0
        %5451 = vmatpush1.msra.mxu0 0.0
        %5452 = vmatprep.subr.mxu0 0.0
        %5453 = vmatpush1.msra.mxu0 0.0
        %5454 = vmatprep.subr.mxu0 0.0
        %5455 = vmatpush1.msra.mxu0 0.0
        %5456 = vmatprep.subr.mxu0 0.0
        %5457 = vmatpush1.msra.mxu0 0.0
        %5458 = vmatprep.subr.mxu0 0.0
        %5459 = vmatpush1.msra.mxu0 0.0
        %5460 = vmatprep.subr.mxu0 0.0
        %5461 = vmatpush1.msra.mxu0 0.0
        %5462 = vmatprep.subr.mxu0 0.0
        %v5463 = vand.u32 %v1808, 4294901760
        %v5464 = vsub.f32 %v1808, %v5463
        %5465 = vmatpush1.msra.mxu0 %v5464
        %5466 = vmatprep.subr.mxu0 0.0
        %5467 = vmatpush2.msra.mxu0 0.0
        %5468 = vmatprep.subr.mxu0 0.0
        %5469 = vmatpush2.msra.mxu0 0.0
        %5470 = vmatprep.subr.mxu0 0.0
        %5471 = vmatpush2.msra.mxu0 0.0
        %5472 = vmatprep.subr.mxu0 0.0
        %5473 = vmatpush2.msra.mxu0 0.0
        %5474 = vmatprep.subr.mxu0 0.0
        %5475 = vmatpush2.msra.mxu0 0.0
        %5476 = vmatprep.subr.mxu0 0.0
        %5477 = vmatpush2.msra.mxu0 0.0
        %5478 = vmatprep.subr.mxu0 0.0
        %5479 = vmatpush2.msra.mxu0 0.0
        %5480 = vmatprep.subr.mxu0 0.0
        %5481 = vmatpush2.msra.mxu0 0.0
        %5482 = vmatprep.subr.mxu0 0.0
        %5483 = vmatpush2.msra.mxu0 0.0
        %5484 = vmatprep.subr.mxu0 0.0
        %5485 = vmatpush2.msra.mxu0 0.0
        %5486 = vmatprep.subr.mxu0 0.0
        %5487 = vmatpush2.msra.mxu0 0.0
        %5488 = vmatprep.subr.mxu0 0.0
        %5489 = vmatpush2.msra.mxu0 0.0
        %5490 = vmatprep.subr.mxu0 0.0
        %5491 = vmatpush2.msra.mxu0 0.0
        %5492 = vmatprep.subr.mxu0 0.0
        %5493 = vmatpush2.msra.mxu0 0.0
        %5494 = vmatprep.subr.mxu0 0.0
        %5495 = vmatpush2.msra.mxu0 0.0
        %5496 = vmatprep.subr.mxu0 0.0
        %5497 = vmatpush2.msra.mxu0 0.0
        %5498 = vmatprep.mubr.f32.mxu0 0.0
        %v5499 = vand.u32 %v2908, 4294901760
        %v5500 = vsub.f32 %v2908, %v5499
        %5501 = vmatmul.mubr.f32.gmra.mxu0 %v5500
        %v5502 = vpop.f32.mrf.mxu0
        %v5503 = vadd.f32 %v5411, %v5502
        %v5504 = vpop.f32.mrf.mxu0
        %5505 = vmatprep.mubr.f32.mxu0 0.0
        %v5506 = vand.u32 %v2911, 4294901760
        %v5507 = vsub.f32 %v2911, %v5506
        %5508 = vmatmul.mubr.f32.gmra.mxu0 %v5507
        %v5509 = vpop.f32.mrf.mxu0
        %v5510 = vadd.f32 %v5417, %v5509
        %v5511 = vpop.f32.mrf.mxu0
        %5512 = vmatprep.mubr.f32.mxu0 0.0
        %v5513 = vand.u32 %v2914, 4294901760
        %v5514 = vsub.f32 %v2914, %v5513
        %5515 = vmatmul.mubr.f32.gmra.mxu0 %v5514
        %v5516 = vpop.f32.mrf.mxu0
        %v5517 = vadd.f32 %v5423, %v5516
        %v5518 = vpop.f32.mrf.mxu0
        %5519 = vmatprep.mubr.f32.mxu0 0.0
        %v5520 = vand.u32 %v2917, 4294901760
        %v5521 = vsub.f32 %v2917, %v5520
        %5522 = vmatmul.mubr.f32.gmra.mxu0 %v5521
        %v5523 = vpop.f32.mrf.mxu0
        %v5524 = vadd.f32 %v5429, %v5523
        %v5525 = vpop.f32.mrf.mxu0
        %5526 = vdwg.mxu0
        %5527 = vmatprep.subr.mxu0 0.0
        %5528 = vmatpush1.msra.mxu0 0.0
        %5529 = vmatprep.subr.mxu0 0.0
        %5530 = vmatpush1.msra.mxu0 0.0
        %5531 = vmatprep.subr.mxu0 0.0
        %5532 = vmatpush1.msra.mxu0 0.0
        %5533 = vmatprep.subr.mxu0 0.0
        %5534 = vmatpush1.msra.mxu0 0.0
        %5535 = vmatprep.subr.mxu0 0.0
        %5536 = vmatpush1.msra.mxu0 0.0
        %5537 = vmatprep.subr.mxu0 0.0
        %5538 = vmatpush1.msra.mxu0 0.0
        %5539 = vmatprep.subr.mxu0 0.0
        %5540 = vmatpush1.msra.mxu0 0.0
        %5541 = vmatprep.subr.mxu0 0.0
        %5542 = vmatpush1.msra.mxu0 0.0
        %5543 = vmatprep.subr.mxu0 0.0
        %5544 = vmatpush1.msra.mxu0 0.0
        %5545 = vmatprep.subr.mxu0 0.0
        %5546 = vmatpush1.msra.mxu0 0.0
        %5547 = vmatprep.subr.mxu0 0.0
        %5548 = vmatpush1.msra.mxu0 0.0
        %5549 = vmatprep.subr.mxu0 0.0
        %5550 = vmatpush1.msra.mxu0 0.0
        %5551 = vmatprep.subr.mxu0 0.0
        %5552 = vmatpush1.msra.mxu0 0.0
        %5553 = vmatprep.subr.mxu0 0.0
        %5554 = vmatpush1.msra.mxu0 0.0
        %5555 = vmatprep.subr.mxu0 0.0
        %5556 = vmatpush1.msra.mxu0 0.0
        %5557 = vmatprep.subr.mxu0 0.0
        %v5558 = vand.u32 %v1808, 4294901760
        %5559 = vmatpush1.msra.mxu0 %v5558
        %5560 = vmatprep.subr.mxu0 0.0
        %5561 = vmatpush2.msra.mxu0 0.0
        %5562 = vmatprep.subr.mxu0 0.0
        %5563 = vmatpush2.msra.mxu0 0.0
        %5564 = vmatprep.subr.mxu0 0.0
        %5565 = vmatpush2.msra.mxu0 0.0
        %5566 = vmatprep.subr.mxu0 0.0
        %5567 = vmatpush2.msra.mxu0 0.0
        %5568 = vmatprep.subr.mxu0 0.0
        %5569 = vmatpush2.msra.mxu0 0.0
        %5570 = vmatprep.subr.mxu0 0.0
        %5571 = vmatpush2.msra.mxu0 0.0
        %5572 = vmatprep.subr.mxu0 0.0
        %5573 = vmatpush2.msra.mxu0 0.0
        %5574 = vmatprep.subr.mxu0 0.0
        %5575 = vmatpush2.msra.mxu0 0.0
        %5576 = vmatprep.subr.mxu0 0.0
        %5577 = vmatpush2.msra.mxu0 0.0
        %5578 = vmatprep.subr.mxu0 0.0
        %5579 = vmatpush2.msra.mxu0 0.0
        %5580 = vmatprep.subr.mxu0 0.0
        %5581 = vmatpush2.msra.mxu0 0.0
        %5582 = vmatprep.subr.mxu0 0.0
        %5583 = vmatpush2.msra.mxu0 0.0
        %5584 = vmatprep.subr.mxu0 0.0
        %5585 = vmatpush2.msra.mxu0 0.0
        %5586 = vmatprep.subr.mxu0 0.0
        %5587 = vmatpush2.msra.mxu0 0.0
        %5588 = vmatprep.subr.mxu0 0.0
        %5589 = vmatpush2.msra.mxu0 0.0
        %5590 = vmatprep.subr.mxu0 0.0
        %5591 = vmatpush2.msra.mxu0 0.0
        %5592 = vmatprep.mubr.f32.mxu0 0.0
        %v5593 = vand.u32 %v2908, 4294901760
        %v5594 = vsub.f32 %v2908, %v5593
        %v5595 = vand.u32 %v5594, 4294901760
        %5596 = vmatmul.mubr.f32.gmra.mxu0 %v5595
        %v5597 = vpop.f32.mrf.mxu0
        %v5598 = vadd.f32 %v5503, %v5597
        %v5599 = vpop.f32.mrf.mxu0
        %5600 = vmatprep.mubr.f32.mxu0 0.0
        %v5601 = vand.u32 %v2911, 4294901760
        %v5602 = vsub.f32 %v2911, %v5601
        %v5603 = vand.u32 %v5602, 4294901760
        %5604 = vmatmul.mubr.f32.gmra.mxu0 %v5603
        %v5605 = vpop.f32.mrf.mxu0
        %v5606 = vadd.f32 %v5510, %v5605
        %v5607 = vpop.f32.mrf.mxu0
        %5608 = vmatprep.mubr.f32.mxu0 0.0
        %v5609 = vand.u32 %v2914, 4294901760
        %v5610 = vsub.f32 %v2914, %v5609
        %v5611 = vand.u32 %v5610, 4294901760
        %5612 = vmatmul.mubr.f32.gmra.mxu0 %v5611
        %v5613 = vpop.f32.mrf.mxu0
        %v5614 = vadd.f32 %v5517, %v5613
        %v5615 = vpop.f32.mrf.mxu0
        %5616 = vmatprep.mubr.f32.mxu0 0.0
        %v5617 = vand.u32 %v2917, 4294901760
        %v5618 = vsub.f32 %v2917, %v5617
        %v5619 = vand.u32 %v5618, 4294901760
        %5620 = vmatmul.mubr.f32.gmra.mxu0 %v5619
        %v5621 = vpop.f32.mrf.mxu0
        %v5622 = vadd.f32 %v5524, %v5621
        %v5623 = vpop.f32.mrf.mxu0
        %5624 = vdwg.mxu0
        %5625 = vmatprep.subr.mxu0 0.0
        %5626 = vmatpush1.msra.mxu0 0.0
        %5627 = vmatprep.subr.mxu0 0.0
        %5628 = vmatpush1.msra.mxu0 0.0
        %5629 = vmatprep.subr.mxu0 0.0
        %5630 = vmatpush1.msra.mxu0 0.0
        %5631 = vmatprep.subr.mxu0 0.0
        %5632 = vmatpush1.msra.mxu0 0.0
        %5633 = vmatprep.subr.mxu0 0.0
        %5634 = vmatpush1.msra.mxu0 0.0
        %5635 = vmatprep.subr.mxu0 0.0
        %5636 = vmatpush1.msra.mxu0 0.0
        %5637 = vmatprep.subr.mxu0 0.0
        %5638 = vmatpush1.msra.mxu0 0.0
        %5639 = vmatprep.subr.mxu0 0.0
        %5640 = vmatpush1.msra.mxu0 0.0
        %5641 = vmatprep.subr.mxu0 0.0
        %5642 = vmatpush1.msra.mxu0 0.0
        %5643 = vmatprep.subr.mxu0 0.0
        %5644 = vmatpush1.msra.mxu0 0.0
        %5645 = vmatprep.subr.mxu0 0.0
        %5646 = vmatpush1.msra.mxu0 0.0
        %5647 = vmatprep.subr.mxu0 0.0
        %5648 = vmatpush1.msra.mxu0 0.0
        %5649 = vmatprep.subr.mxu0 0.0
        %5650 = vmatpush1.msra.mxu0 0.0
        %5651 = vmatprep.subr.mxu0 0.0
        %5652 = vmatpush1.msra.mxu0 0.0
        %5653 = vmatprep.subr.mxu0 0.0
        %5654 = vmatpush1.msra.mxu0 0.0
        %5655 = vmatprep.subr.mxu0 0.0
        %v5656 = vand.u32 %v1808, 4294901760
        %v5657 = vsub.f32 %v1808, %v5656
        %v5658 = vand.u32 %v5657, 4294901760
        %5659 = vmatpush1.msra.mxu0 %v5658
        %5660 = vmatprep.subr.mxu0 0.0
        %5661 = vmatpush2.msra.mxu0 0.0
        %5662 = vmatprep.subr.mxu0 0.0
        %5663 = vmatpush2.msra.mxu0 0.0
        %5664 = vmatprep.subr.mxu0 0.0
        %5665 = vmatpush2.msra.mxu0 0.0
        %5666 = vmatprep.subr.mxu0 0.0
        %5667 = vmatpush2.msra.mxu0 0.0
        %5668 = vmatprep.subr.mxu0 0.0
        %5669 = vmatpush2.msra.mxu0 0.0
        %5670 = vmatprep.subr.mxu0 0.0
        %5671 = vmatpush2.msra.mxu0 0.0
        %5672 = vmatprep.subr.mxu0 0.0
        %5673 = vmatpush2.msra.mxu0 0.0
        %5674 = vmatprep.subr.mxu0 0.0
        %5675 = vmatpush2.msra.mxu0 0.0
        %5676 = vmatprep.subr.mxu0 0.0
        %5677 = vmatpush2.msra.mxu0 0.0
        %5678 = vmatprep.subr.mxu0 0.0
        %5679 = vmatpush2.msra.mxu0 0.0
        %5680 = vmatprep.subr.mxu0 0.0
        %5681 = vmatpush2.msra.mxu0 0.0
        %5682 = vmatprep.subr.mxu0 0.0
        %5683 = vmatpush2.msra.mxu0 0.0
        %5684 = vmatprep.subr.mxu0 0.0
        %5685 = vmatpush2.msra.mxu0 0.0
        %5686 = vmatprep.subr.mxu0 0.0
        %5687 = vmatpush2.msra.mxu0 0.0
        %5688 = vmatprep.subr.mxu0 0.0
        %5689 = vmatpush2.msra.mxu0 0.0
        %5690 = vmatprep.subr.mxu0 0.0
        %5691 = vmatpush2.msra.mxu0 0.0
        %5692 = vmatprep.mubr.f32.mxu0 0.0
        %v5693 = vand.u32 %v2908, 4294901760
        %5694 = vmatmul.mubr.f32.gmra.mxu0 %v5693
        %v5695 = vpop.f32.mrf.mxu0
        %v5696 = vadd.f32 %v5598, %v5695
        %v5697 = vpop.f32.mrf.mxu0
        %5698 = vmatprep.mubr.f32.mxu0 0.0
        %v5699 = vand.u32 %v2911, 4294901760
        %5700 = vmatmul.mubr.f32.gmra.mxu0 %v5699
        %v5701 = vpop.f32.mrf.mxu0
        %v5702 = vadd.f32 %v5606, %v5701
        %v5703 = vpop.f32.mrf.mxu0
        %5704 = vmatprep.mubr.f32.mxu0 0.0
        %v5705 = vand.u32 %v2914, 4294901760
        %5706 = vmatmul.mubr.f32.gmra.mxu0 %v5705
        %v5707 = vpop.f32.mrf.mxu0
        %v5708 = vadd.f32 %v5614, %v5707
        %v5709 = vpop.f32.mrf.mxu0
        %5710 = vmatprep.mubr.f32.mxu0 0.0
        %v5711 = vand.u32 %v2917, 4294901760
        %5712 = vmatmul.mubr.f32.gmra.mxu0 %v5711
        %v5713 = vpop.f32.mrf.mxu0
        %v5714 = vadd.f32 %v5622, %v5713
        %v5715 = vpop.f32.mrf.mxu0
        %5716 = vdwg.mxu0
        %5717 = vmatprep.subr.mxu0 0.0
        %5718 = vmatpush1.msra.mxu0 0.0
        %5719 = vmatprep.subr.mxu0 0.0
        %5720 = vmatpush1.msra.mxu0 0.0
        %5721 = vmatprep.subr.mxu0 0.0
        %5722 = vmatpush1.msra.mxu0 0.0
        %5723 = vmatprep.subr.mxu0 0.0
        %5724 = vmatpush1.msra.mxu0 0.0
        %5725 = vmatprep.subr.mxu0 0.0
        %5726 = vmatpush1.msra.mxu0 0.0
        %5727 = vmatprep.subr.mxu0 0.0
        %5728 = vmatpush1.msra.mxu0 0.0
        %5729 = vmatprep.subr.mxu0 0.0
        %5730 = vmatpush1.msra.mxu0 0.0
        %5731 = vmatprep.subr.mxu0 0.0
        %5732 = vmatpush1.msra.mxu0 0.0
        %5733 = vmatprep.subr.mxu0 0.0
        %5734 = vmatpush1.msra.mxu0 0.0
        %5735 = vmatprep.subr.mxu0 0.0
        %5736 = vmatpush1.msra.mxu0 0.0
        %5737 = vmatprep.subr.mxu0 0.0
        %5738 = vmatpush1.msra.mxu0 0.0
        %5739 = vmatprep.subr.mxu0 0.0
        %5740 = vmatpush1.msra.mxu0 0.0
        %5741 = vmatprep.subr.mxu0 0.0
        %5742 = vmatpush1.msra.mxu0 0.0
        %5743 = vmatprep.subr.mxu0 0.0
        %5744 = vmatpush1.msra.mxu0 0.0
        %5745 = vmatprep.subr.mxu0 0.0
        %5746 = vmatpush1.msra.mxu0 0.0
        %5747 = vmatprep.subr.mxu0 0.0
        %v5748 = vand.u32 %v1808, 4294901760
        %5749 = vmatpush1.msra.mxu0 %v5748
        %5750 = vmatprep.subr.mxu0 0.0
        %5751 = vmatpush2.msra.mxu0 0.0
        %5752 = vmatprep.subr.mxu0 0.0
        %5753 = vmatpush2.msra.mxu0 0.0
        %5754 = vmatprep.subr.mxu0 0.0
        %5755 = vmatpush2.msra.mxu0 0.0
        %5756 = vmatprep.subr.mxu0 0.0
        %5757 = vmatpush2.msra.mxu0 0.0
        %5758 = vmatprep.subr.mxu0 0.0
        %5759 = vmatpush2.msra.mxu0 0.0
        %5760 = vmatprep.subr.mxu0 0.0
        %5761 = vmatpush2.msra.mxu0 0.0
        %5762 = vmatprep.subr.mxu0 0.0
        %5763 = vmatpush2.msra.mxu0 0.0
        %5764 = vmatprep.subr.mxu0 0.0
        %5765 = vmatpush2.msra.mxu0 0.0
        %5766 = vmatprep.subr.mxu0 0.0
        %5767 = vmatpush2.msra.mxu0 0.0
        %5768 = vmatprep.subr.mxu0 0.0
        %5769 = vmatpush2.msra.mxu0 0.0
        %5770 = vmatprep.subr.mxu0 0.0
        %5771 = vmatpush2.msra.mxu0 0.0
        %5772 = vmatprep.subr.mxu0 0.0
        %5773 = vmatpush2.msra.mxu0 0.0
        %5774 = vmatprep.subr.mxu0 0.0
        %5775 = vmatpush2.msra.mxu0 0.0
        %5776 = vmatprep.subr.mxu0 0.0
        %5777 = vmatpush2.msra.mxu0 0.0
        %5778 = vmatprep.subr.mxu0 0.0
        %5779 = vmatpush2.msra.mxu0 0.0
        %5780 = vmatprep.subr.mxu0 0.0
        %5781 = vmatpush2.msra.mxu0 0.0
        %5782 = vmatprep.mubr.f32.mxu0 0.0
        %v5783 = vand.u32 %v2908, 4294901760
        %5784 = vmatmul.mubr.f32.gmra.mxu0 %v5783
        %v5785 = vpop.f32.mrf.mxu0
        %v5786 = vadd.f32 %v5696, %v5785
        %v5787 = vpop.f32.mrf.mxu0
        %5788 = vmatprep.mubr.f32.mxu0 0.0
        %v5789 = vand.u32 %v2911, 4294901760
        %5790 = vmatmul.mubr.f32.gmra.mxu0 %v5789
        %v5791 = vpop.f32.mrf.mxu0
        %v5792 = vadd.f32 %v5702, %v5791
        %v5793 = vpop.f32.mrf.mxu0
        %5794 = vmatprep.mubr.f32.mxu0 0.0
        %v5795 = vand.u32 %v2914, 4294901760
        %5796 = vmatmul.mubr.f32.gmra.mxu0 %v5795
        %v5797 = vpop.f32.mrf.mxu0
        %v5798 = vadd.f32 %v5708, %v5797
        %v5799 = vpop.f32.mrf.mxu0
        %5800 = vmatprep.mubr.f32.mxu0 0.0
        %v5801 = vand.u32 %v2917, 4294901760
        %5802 = vmatmul.mubr.f32.gmra.mxu0 %v5801
        %v5803 = vpop.f32.mrf.mxu0
        %v5804 = vadd.f32 %v5714, %v5803
        %v5805 = vpop.f32.mrf.mxu0
        %5806 = vdwg.mxu0
        %v5807 = vrcp.pop %v5211
        %v5808 = vrcp.pop %v5217
        %v5809 = vrcp.pop %v5223
        %v5810 = vrcp.pop %v5229
        %v5811 = vmul.f32 %v5786, %v5807
        %v5812 = vmul.f32 %v5792, %v5808
        %v5813 = vmul.f32 %v5798, %v5809
        %v5814 = vmul.f32 %v5804, %v5810
        %5815 = vst.msk [vmem:[%s260 + $0x20] sm:$0xff] %vm4077, %v5811
        %5816 = vst.msk [vmem:[%s260 + $0x28] sm:$0xff] %vm4077, %v5812
        %5817 = vst.msk [vmem:[%s260 + $0x30] sm:$0xff] %vm4077, %v5813
        %5818 = vst.msk [vmem:[%s260 + $0x38] sm:$0xff] %vm4077, %v5814
        %s5819 = sand.u32 %s156, 1
        %s5820 = scalar_lea.sflag [#allocation4], %s5819
        %s5821 = sand.u32 %s156, 1
        %s5822 = smul.addr %s5821, 64
        %s5823 = scalar_lea.vmem [#allocation5], %s5822
        // Predicated region
        $region45: #{tpu_custom_call.1} parent=39 // pred_check
          %p5824 = pneg %p166
        $region46: #{tpu_custom_call.1} parent=39 // pred_check_branch
          %5826 = sbr.rel (%p5824) target = $region48
        $region47: #{tpu_custom_call.1} parent=39 // pred_region
          %s5827 = smul.u32 8, %s27
          %s5829 = ssub.s32 1024, 1024
          %5830 = vsyncadd %s5820, %s5829
          %s5831 = smul.addr %s26, 8
          %s5832 = sadd.s32 %s5827, %s5831
          %s5833 = smul.addr %s5832, 128
          %s5834 = scalar_lea.hbm %s5, %s5833
          %s5835 = sshll.u32 %s5823, 4
          %s5836 = int_to_ptr.vmem [resolvable:$true] %s5835
          %5841 = dma.vmem_to_hbm [thread:$0]  %s5836, 1024, %s5834, %s5820, 128, 128, 8
        $region48: #{tpu_custom_call.1} parent=39 // pred_fallthru
          _
      $region40: #{tpu_custom_call.1} parent=5 // pred_fallthru
        _
      %p5842 = scmp.le.s32.totalorder 2, %s17
      // Predicated region
      $region49: #{tpu_custom_call.1} parent=5 // pred_check
        %p5843 = pneg %p5842
      $region50: #{tpu_custom_call.1} parent=5 // pred_check_branch
        %5845 = sbr.rel (%p5843) target = $region52
      $region51: #{tpu_custom_call.1} parent=5 // pred_region
        %s5846 = ssub.s32 %s17, 2
        // Predicated region
        $region53: #{tpu_custom_call.1} parent=51 // pred_check
          %p5847 = pneg %p172
        $region54: #{tpu_custom_call.1} parent=51 // pred_check_branch
          %5849 = sbr.rel (%p5847) target = $region56
        $region55: #{tpu_custom_call.1} parent=51 // pred_region
          %s5850 = sand.u32 %s157, 1
          %s5851 = scalar_lea.sflag [#allocation4], %s5850
          %s5852 = sand.u32 %s157, 1
          %s5853 = smul.addr %s5852, 64
          %s5854 = scalar_lea.vmem [#allocation5], %s5853
          %5855 = dma.done %s5851, 1024
        $region56: #{tpu_custom_call.1} parent=51 // pred_fallthru
          _
      $region52: #{tpu_custom_call.1} parent=5 // pred_fallthru
        _
    $region6: #{tpu_custom_call.1} parent=1 // loop_footer
      %s21 = sadd.s32 1, %s17
    $region7: #{tpu_custom_call.1} parent=1 // loop_footer_branch
      %16 = sbr.rel target = $region3
    $region8: #{tpu_custom_call.1} parent=1 // loop_exit
      _
    %5856 = vsyncpa [#allocation3], 1
    %s5857 = scalar_lea.sflag [#allocation3], 1
    %5858 = vsyncpa %s5857, 1
    %5859 = vsyncpa [#allocation4], 1
    %s5860 = scalar_lea.sflag [#allocation4], 1
    %5861 = vsyncpa %s5860, 1

</llo_original>
